<compile_context>
chip_gen: v5e
topology: v5e:2x2
jax: 0.10.0
libtpu: 0.0.40
codegen_flags: <defaults>
</compile_context>

<pallas_src>
import math

import jax
import jax.numpy as jnp
from jax import lax
from jax.experimental import pallas as pl
from jax.experimental.pallas import tpu as pltpu

F32 = jnp.float32
BN_EPS = 1e-5
C = 128            # out-channels of every conv layer
NEG_BIG = -1e30    # bias of padded logit lanes -> exp underflows to exactly 0

# Within each (n, i) row group of the block-1 activation, the 7 spatial columns are kept
# in "odd columns first, then even" order.  This makes the in-kernel zero-pad scatter for
# conv2 two contiguous slice copies per row, and makes every conv2 im2col copy contiguous.
_J_PERM = (1, 3, 5, 0, 2, 4, 6)
_BASE_FOR_KW = (0, 5, 1)   # parity-permuted start position for kw = 0, 1, 2


# ------------------------------------------------------------------ fused Pallas kernel
def fused_net_kernel(a1_ref, w1_ref, w2_ref, w3_ref, w4_ref, w5_ref, wl_ref, vec_ref,
                     o_ref,
                     y1_ref, p1_ref, xp2_ref, a2_ref, y2_ref, p2_ref):
    """Whole AudioClassifier forward on VMEM-resident data.

    a1  (4*N*49, 32) : conv1 im2col slab, 4 maxpool-phase row blocks, K padded 25->32
    w1  (32, 128)    : conv1 weight, rows = (kh, kw) taps (zero-padded to 32)
    w2  (1152, 128)  : conv2 weight, rows = (kh, kw, cin)
    w3  (512, 128)   : conv3 weight, only the 4 taps that touch real data, rows=(h, w, cin)
    w4/w5 (128, 128) : conv4/conv5 centre tap (the other 8 taps only see zero padding)
    wl  (128, 128)   : Linear(128->2) weight padded to 128 output lanes
    vec (16, 128)    : [b1,s1,t1, b2,s2,t2, b3,s3,t3, b4,s4,t4, b5,s5,t5, lin_bias_pad]
    o   (N, 128)     : lane-dense output; columns 0:2 hold the softmax probabilities
    """
    N = o_ref.shape[0]

    b1, s1, t1 = vec_ref[0:1, :], vec_ref[1:2, :], vec_ref[2:3, :]
    b2, s2, t2 = vec_ref[3:4, :], vec_ref[4:5, :], vec_ref[5:6, :]
    b3, s3, t3 = vec_ref[6:7, :], vec_ref[7:8, :], vec_ref[8:9, :]
    b4, s4, t4 = vec_ref[9:10, :], vec_ref[10:11, :], vec_ref[11:12, :]
    b5, s5, t5 = vec_ref[12:13, :], vec_ref[13:14, :], vec_ref[14:15, :]
    bl = vec_ref[15:16, :]

    # ---- block 1: conv1 (im2col matmul) -> ReLU -> MaxPool2d(2) -> BN affine
    y1_ref[...] = jnp.maximum(
        jnp.dot(a1_ref[...], w1_ref[...], preferred_element_type=jnp.float32) + b1, 0.0)
    P1 = N * 49   # rows per pool phase; rows ordered (n, i, j) over N x 7 x 7 (j permuted)
    p1_ref[...] = jnp.maximum(
        jnp.maximum(y1_ref[0 * P1:1 * P1, :], y1_ref[1 * P1:2 * P1, :]),
        jnp.maximum(y1_ref[2 * P1:3 * P1, :], y1_ref[3 * P1:4 * P1, :])) * s1 + t1

    # ---- block 2 prep: scatter p1 into a zero-padded, column-parity-permuted 9x9 layout.
    # xp2 row = n*81 + r*9 + pos, padded row r in 0..8; pos 0..4 <-> padded cols 0,2,4,6,8
    # and pos 5..8 <-> padded cols 1,3,5,7 (evens first).
    xp2_ref[...] = jnp.zeros(xp2_ref.shape, xp2_ref.dtype)
    for n in range(N):
        for i in range(7):
            src = n * 49 + i * 7
            dst = n * 81 + (1 + i) * 9
            # p1 rows carry j in _J_PERM order = [1,3,5 | 0,2,4,6]:
            xp2_ref[dst + 1:dst + 4, :] = p1_ref[src:src + 3, :]       # cols 2,4,6 -> pos 1..3
            xp2_ref[dst + 5:dst + 9, :] = p1_ref[src + 3:src + 7, :]   # cols 1,3,5,7 -> pos 5..8

    # ---- conv2 im2col: nine contiguous (4,128) loads lane-concatenated into one
    # (4, 1152) store per (n, oh) -> 8 stores total instead of 72.
    for n in range(N):
        for oh in range(4):
            dst = n * 16 + oh * 4                       # A2 rows for ow = 0..3
            pieces = []
            for kh in range(3):
                row0 = n * 81 + (2 * oh + kh) * 9
                for kw in range(3):
                    s0 = row0 + _BASE_FOR_KW[kw]
                    pieces.append(xp2_ref[s0:s0 + 4, :])
            a2_ref[dst:dst + 4, :] = jnp.concatenate(pieces, axis=1)

    # ---- conv2 -> ReLU (single MXU pass over the whole im2col slab)
    y2_ref[...] = jnp.maximum(
        jnp.dot(a2_ref[...], w2_ref[...], preferred_element_type=jnp.float32) + b2, 0.0)

    # ---- MaxPool2d(2) on the 4x4 conv2 output fused with BN2.
    # Result goes into a (N, 512) slab with spatial position (i*2+j) on the lane axis,
    # so conv3 becomes one (N,512)x(512,128) matmul.
    for n in range(N):
        for i in range(2):
            for j in range(2):
                src = n * 16 + 8 * i + 2 * j
                win = jnp.maximum(
                    jnp.maximum(y2_ref[src:src + 1, :], y2_ref[src + 1:src + 2, :]),
                    jnp.maximum(y2_ref[src + 4:src + 5, :], y2_ref[src + 5:src + 6, :]))
                s = i * 2 + j
                p2_ref[n:n + 1, s * C:(s + 1) * C] = win * s2 + t2

    # ---- block 3: conv3 on the 2x2 input -> only 4 of 9 taps touch real data
    y3 = jnp.maximum(
        jnp.dot(p2_ref[...], w3_ref[...], preferred_element_type=jnp.float32) + b3,
        0.0) * s3 + t3

    # ---- blocks 4-5: 1x1 spatial input -> centre tap only -> plain 128x128 matmuls
    y4 = jnp.maximum(
        jnp.dot(y3, w4_ref[...], preferred_element_type=jnp.float32) + b4, 0.0) * s4 + t4
    y5 = jnp.maximum(
        jnp.dot(y4, w5_ref[...], preferred_element_type=jnp.float32) + b5, 0.0) * s5 + t5

    # ---- head: AdaptiveAvgPool2d(1) is identity at 1x1; lane-padded Linear + softmax
    logits = jnp.dot(y5, wl_ref[...], preferred_element_type=jnp.float32) + bl   # (N,128)
    m = jnp.max(logits, axis=1, keepdims=True)
    e = jnp.exp(logits - m)                     # padded lanes: exp(-1e30 - m) == 0 exactly
    o_ref[...] = e / jnp.sum(e, axis=1, keepdims=True)


# ------------------------------------------------------------------ JAX glue
def _build_conv1_im2col(x):
    """x: (N, 1, 32, 32) -> (4*N*49, 32) slab.

    Rows are grouped by maxpool phase (a, b); within a block rows are (n, i, j) over the
    pooled 7x7 grid with j in _J_PERM order.  Conv1 outputs at row/col 14 (discarded by
    the floor pool) are never materialised.  Columns = 25 (kh, kw) taps, padded to 32.
    """
    n = x.shape[0]
    xp = jnp.pad(x[:, 0], ((0, 0), (1, 1), (1, 1)))            # (N, 34, 34), conv1 pad = 1
    jperm = jnp.array(_J_PERM, jnp.int32)
    blocks = []
    for a in range(2):
        for b in range(2):
            taps = []
            for kh in range(5):
                for kw in range(5):
                    # conv1 output (2i+a, 2j+b) reads padded pixel (4i+2a+kh, 4j+2b+kw)
                    sl = xp[:, 2 * a + kh: 2 * a + kh + 25: 4,
                            2 * b + kw: 2 * b + kw + 25: 4]     # (N, 7, 7)
                    taps.append(sl[:, :, jperm].reshape(n * 49))
            blocks.append(jnp.stack(taps, axis=-1))             # (N*49, 25)
    a1 = jnp.concatenate(blocks, axis=0)                        # (4*N*49, 25)
    return jnp.pad(a1, ((0, 0), (0, 7)))                        # K: 25 -> 32


def _prep_params(p):
    """Channel-last weight matrices with zero-padding taps stripped, plus the vector table."""
    w1 = jnp.pad(p["w1"].reshape(C, 25).T, ((0, 7), (0, 0)))              # (32, 128)
    w2 = p["w2"].transpose(2, 3, 1, 0).reshape(9 * C, C)                  # (1152, 128)
    w3 = p["w3"][:, :, 1:, 1:].transpose(2, 3, 1, 0).reshape(4 * C, C)    # (512, 128)
    w4 = p["w4"][:, :, 1, 1].T                                            # (128, 128)
    w5 = p["w5"][:, :, 1, 1].T                                            # (128, 128)
    wl = jnp.zeros((C, C), F32).at[:, :2].set(p["lin_w"].T)               # lane-padded head
    bl = jnp.full((C,), NEG_BIG, F32).at[:2].set(p["lin_b"])
    vec = jnp.stack([p["b1"], p["bn1_scale"], p["bn1_shift"],
                     p["b2"], p["bn2_scale"], p["bn2_shift"],
                     p["b3"], p["bn3_scale"], p["bn3_shift"],
                     p["b4"], p["bn4_scale"], p["bn4_shift"],
                     p["b5"], p["bn5_scale"], p["bn5_shift"],
                     bl], axis=0)                                         # (16, 128)
    return w1, w2, w3, w4, w5, wl, vec


@jax.jit
def forward(x, p):
    n = x.shape[0]
    a1 = _build_conv1_im2col(x)
    w1, w2, w3, w4, w5, wl, vec = _prep_params(p)
    inputs = (a1, w1, w2, w3, w4, w5, wl, vec)
    out_pad = pl.pallas_call(
        fused_net_kernel,
        out_shape=jax.ShapeDtypeStruct((n, C), F32),
        grid=(1,),
        in_specs=[pl.BlockSpec(arr.shape, lambda i, nd=arr.ndim: (0,) * nd)
                  for arr in inputs],
        out_specs=pl.BlockSpec((n, C), lambda i: (0, 0)),
        scratch_shapes=[
            pltpu.VMEM((4 * n * 49, C), F32),   # y1: conv1+ReLU output (4 pool phases)
            pltpu.VMEM((n * 49, C), F32),       # p1: pooled + BN'd block-1 activation
            pltpu.VMEM((n * 81, C), F32),       # xp2: zero-padded, parity-permuted 9x9 slab
            pltpu.VMEM((16 * n, 9 * C), F32),   # a2: conv2 im2col slab
            pltpu.VMEM((16 * n, C), F32),       # y2: conv2+ReLU output
            pltpu.VMEM((n, 4 * C), F32),        # p2: pooled + BN'd block-2, spatial on lanes
        ],
        compiler_params=pltpu.CompilerParams(dimension_semantics=("arbitrary",)),
    )(*inputs)
    return out_pad[:, :2]


# ------------------------------------------------------------------ parameters
def kaiming_normal(key, shape, a=0.1):
    fan_in = shape[1] * shape[2] * shape[3]
    gain = math.sqrt(2.0 / (1.0 + a * a))
    std = gain / math.sqrt(fan_in)
    return jax.random.normal(key, shape, F32) * std


def init_params(key):
    keys = jax.random.split(key, 8)
    p = {}
    conv_shapes = [(C, 1, 5, 5), (C, C, 3, 3), (C, C, 3, 3), (C, C, 3, 3), (C, C, 3, 3)]
    for i, shp in enumerate(conv_shapes, start=1):
        p[f"w{i}"] = kaiming_normal(keys[i - 1], shp, a=0.1)
        p[f"b{i}"] = jnp.zeros((shp[0],), F32)
        # BatchNorm2d init state, eval mode: gamma=1, beta=0, mean=0, var=1.
        gamma = jnp.ones((shp[0],), F32)
        beta = jnp.zeros((shp[0],), F32)
        mean = jnp.zeros((shp[0],), F32)
        var = jnp.ones((shp[0],), F32)
        sc = gamma / jnp.sqrt(var + BN_EPS)
        p[f"bn{i}_scale"] = sc
        p[f"bn{i}_shift"] = beta - mean * sc
    bound = 1.0 / math.sqrt(128.0)
    p["lin_w"] = jax.random.uniform(keys[5], (2, C), F32, -bound, bound)
    p["lin_b"] = jax.random.uniform(keys[6], (2,), F32, -bound, bound)
    return p


# ------------------------------------------------------------------ pure-JAX reference
def maxpool2(x):
    n, c, h, w = x.shape
    h2, w2 = h // 2, w // 2
    x = x[:, :, :h2 * 2, :w2 * 2].reshape(n, c, h2, 2, w2, 2)
    return x.max(axis=(3, 5))


def ref_forward(x, p):
    def conv(x, w, b, stride, pad):
        y = lax.conv_general_dilated(x, w, (stride, stride), [(pad, pad), (pad, pad)],
                                     dimension_numbers=("NCHW", "OIHW", "NCHW"))
        return y + b.reshape(1, -1, 1, 1)

    def bn(x, s, t):
        return x * s.reshape(1, -1, 1, 1) + t.reshape(1, -1, 1, 1)

    x = jnp.maximum(conv(x, p["w1"], p["b1"], 2, 1), 0.0)
    x = bn(maxpool2(x), p["bn1_scale"], p["bn1_shift"])
    x = jnp.maximum(conv(x, p["w2"], p["b2"], 2, 1), 0.0)
    x = bn(maxpool2(x), p["bn2_scale"], p["bn2_shift"])
    x = bn(jnp.maximum(conv(x, p["w3"], p["b3"], 2, 1), 0.0), p["bn3_scale"], p["bn3_shift"])
    x = bn(jnp.maximum(conv(x, p["w4"], p["b4"], 2, 1), 0.0), p["bn4_scale"], p["bn4_shift"])
    x = bn(jnp.maximum(conv(x, p["w5"], p["b5"], 2, 1), 0.0), p["bn5_scale"], p["bn5_shift"])
    feat = x.mean(axis=(2, 3))
    logits = feat @ p["lin_w"].T + p["lin_b"]
    return jax.nn.softmax(logits, axis=1)


if __name__ == "__main__":
    key = jax.random.PRNGKey(0)
    k_param, k_input = jax.random.split(key)
    params = init_params(k_param)

    # input: (N, C=1, H, W) spectrogram-like tensor
    x = jax.random.normal(k_input, (2, 1, 32, 32), F32)

    out = jax.block_until_ready(forward(x, params))
    ref = jax.block_until_ready(ref_forward(x, params))

    assert out.shape == (2, 2), f"bad output shape {out.shape}"
    assert jnp.allclose(jnp.sum(out, axis=1), 1.0, atol=1e-4), "softmax rows must sum to 1"
    assert jnp.allclose(out, ref, rtol=1e-2, atol=1e-2), f"mismatch vs reference:\n{out}\n{ref}"
    print("KERNEL_OK")
</pallas_src>

<mosaic_0001>
module attributes {stable_mosaic.version = 11 : i64} {
  func.func @fused_net_kernel(%arg0: i32, %arg1: memref<392x32xf32, #tpu.memory_space<vmem>>, %arg2: memref<32x128xf32, #tpu.memory_space<vmem>>, %arg3: memref<1152x128xf32, #tpu.memory_space<vmem>>, %arg4: memref<512x128xf32, #tpu.memory_space<vmem>>, %arg5: memref<128x128xf32, #tpu.memory_space<vmem>>, %arg6: memref<128x128xf32, #tpu.memory_space<vmem>>, %arg7: memref<128x128xf32, #tpu.memory_space<vmem>>, %arg8: memref<16x128xf32, #tpu.memory_space<vmem>>, %arg9: memref<2x128xf32, #tpu.memory_space<vmem>>, %arg10: memref<392x128xf32, #tpu.memory_space<vmem>>, %arg11: memref<98x128xf32, #tpu.memory_space<vmem>>, %arg12: memref<162x128xf32, #tpu.memory_space<vmem>>, %arg13: memref<32x1152xf32, #tpu.memory_space<vmem>>, %arg14: memref<32x128xf32, #tpu.memory_space<vmem>>, %arg15: memref<2x512xf32, #tpu.memory_space<vmem>>) attributes {dimension_semantics = [#tpu.dimension_semantics<arbitrary>], iteration_bounds = array<i64: 1>, scalar_prefetch = 0 : i64, scratch_operands = 6 : i64, tpu.core_type = #tpu.core_type<tc>, window_params = [{pipeline_mode = #tpu.pipeline_mode<synchronous>, transform_indices = @transform_0, window_bounds = array<i64: 392, 32>}, {pipeline_mode = #tpu.pipeline_mode<synchronous>, transform_indices = @transform_1, window_bounds = array<i64: 32, 128>}, {pipeline_mode = #tpu.pipeline_mode<synchronous>, transform_indices = @transform_2, window_bounds = array<i64: 1152, 128>}, {pipeline_mode = #tpu.pipeline_mode<synchronous>, transform_indices = @transform_3, window_bounds = array<i64: 512, 128>}, {pipeline_mode = #tpu.pipeline_mode<synchronous>, transform_indices = @transform_4, window_bounds = array<i64: 128, 128>}, {pipeline_mode = #tpu.pipeline_mode<synchronous>, transform_indices = @transform_5, window_bounds = array<i64: 128, 128>}, {pipeline_mode = #tpu.pipeline_mode<synchronous>, transform_indices = @transform_6, window_bounds = array<i64: 128, 128>}, {pipeline_mode = #tpu.pipeline_mode<synchronous>, transform_indices = @transform_7, window_bounds = array<i64: 16, 128>}, {pipeline_mode = #tpu.pipeline_mode<synchronous>, transform_indices = @transform_8, window_bounds = array<i64: 2, 128>}]} {
    %c0 = arith.constant 0 : index
    %c0_0 = arith.constant 0 : index
    %0 = vector.load %arg8[%c0, %c0_0] : memref<16x128xf32, #tpu.memory_space<vmem>>, vector<1x128xf32>
    %c1 = arith.constant 1 : index
    %c0_1 = arith.constant 0 : index
    %1 = vector.load %arg8[%c1, %c0_1] : memref<16x128xf32, #tpu.memory_space<vmem>>, vector<1x128xf32>
    %c2 = arith.constant 2 : index
    %c0_2 = arith.constant 0 : index
    %2 = vector.load %arg8[%c2, %c0_2] : memref<16x128xf32, #tpu.memory_space<vmem>>, vector<1x128xf32>
    %c3 = arith.constant 3 : index
    %c0_3 = arith.constant 0 : index
    %3 = vector.load %arg8[%c3, %c0_3] : memref<16x128xf32, #tpu.memory_space<vmem>>, vector<1x128xf32>
    %c4 = arith.constant 4 : index
    %c0_4 = arith.constant 0 : index
    %4 = vector.load %arg8[%c4, %c0_4] : memref<16x128xf32, #tpu.memory_space<vmem>>, vector<1x128xf32>
    %c5 = arith.constant 5 : index
    %c0_5 = arith.constant 0 : index
    %5 = vector.load %arg8[%c5, %c0_5] : memref<16x128xf32, #tpu.memory_space<vmem>>, vector<1x128xf32>
    %c6 = arith.constant 6 : index
    %c0_6 = arith.constant 0 : index
    %6 = vector.load %arg8[%c6, %c0_6] : memref<16x128xf32, #tpu.memory_space<vmem>>, vector<1x128xf32>
    %c7 = arith.constant 7 : index
    %c0_7 = arith.constant 0 : index
    %7 = vector.load %arg8[%c7, %c0_7] : memref<16x128xf32, #tpu.memory_space<vmem>>, vector<1x128xf32>
    %c8 = arith.constant 8 : index
    %c0_8 = arith.constant 0 : index
    %8 = vector.load %arg8[%c8, %c0_8] : memref<16x128xf32, #tpu.memory_space<vmem>>, vector<1x128xf32>
    %c9 = arith.constant 9 : index
    %c0_9 = arith.constant 0 : index
    %9 = vector.load %arg8[%c9, %c0_9] : memref<16x128xf32, #tpu.memory_space<vmem>>, vector<1x128xf32>
    %c10 = arith.constant 10 : index
    %c0_10 = arith.constant 0 : index
    %10 = vector.load %arg8[%c10, %c0_10] : memref<16x128xf32, #tpu.memory_space<vmem>>, vector<1x128xf32>
    %c11 = arith.constant 11 : index
    %c0_11 = arith.constant 0 : index
    %11 = vector.load %arg8[%c11, %c0_11] : memref<16x128xf32, #tpu.memory_space<vmem>>, vector<1x128xf32>
    %c12 = arith.constant 12 : index
    %c0_12 = arith.constant 0 : index
    %12 = vector.load %arg8[%c12, %c0_12] : memref<16x128xf32, #tpu.memory_space<vmem>>, vector<1x128xf32>
    %c13 = arith.constant 13 : index
    %c0_13 = arith.constant 0 : index
    %13 = vector.load %arg8[%c13, %c0_13] : memref<16x128xf32, #tpu.memory_space<vmem>>, vector<1x128xf32>
    %c14 = arith.constant 14 : index
    %c0_14 = arith.constant 0 : index
    %14 = vector.load %arg8[%c14, %c0_14] : memref<16x128xf32, #tpu.memory_space<vmem>>, vector<1x128xf32>
    %c15 = arith.constant 15 : index
    %c0_15 = arith.constant 0 : index
    %15 = vector.load %arg8[%c15, %c0_15] : memref<16x128xf32, #tpu.memory_space<vmem>>, vector<1x128xf32>
    %c0_16 = arith.constant 0 : index
    %c0_17 = arith.constant 0 : index
    %16 = vector.load %arg1[%c0_16, %c0_17] : memref<392x32xf32, #tpu.memory_space<vmem>>, vector<392x32xf32>
    %c0_18 = arith.constant 0 : index
    %c0_19 = arith.constant 0 : index
    %17 = vector.load %arg2[%c0_18, %c0_19] : memref<32x128xf32, #tpu.memory_space<vmem>>, vector<32x128xf32>
    %cst = arith.constant dense<0.000000e+00> : vector<392x128xf32>
    %18 = tpu.matmul %16, %17, %cst {dimension_numbers = #tpu.dot_dimension_numbers<[1], [0], [0], [1], [0, 0, 1, 1], [], []>} : vector<392x32xf32>, vector<32x128xf32>, vector<392x128xf32> -> vector<392x128xf32>
    %19 = vector.broadcast %0 : vector<1x128xf32> to vector<392x128xf32>
    %20 = arith.addf %18, %19 : vector<392x128xf32>
    %cst_20 = arith.constant 0.000000e+00 : f32
    %21 = vector.broadcast %cst_20 : f32 to vector<392x128xf32>
    %22 = arith.maximumf %20, %21 : vector<392x128xf32>
    %c0_21 = arith.constant 0 : index
    %c0_22 = arith.constant 0 : index
    %23 = vector.load %arg10[%c0_21, %c0_22] : memref<392x128xf32, #tpu.memory_space<vmem>>, vector<392x128xf32>
    tpu.vector_store %arg10[%c0_21, %c0_22], %22 {strides = array<i32>} : memref<392x128xf32, #tpu.memory_space<vmem>>, vector<392x128xf32>,
    %c0_23 = arith.constant 0 : index
    %c0_24 = arith.constant 0 : index
    %24 = vector.load %arg10[%c0_23, %c0_24] : memref<392x128xf32, #tpu.memory_space<vmem>>, vector<98x128xf32>
    %c98 = arith.constant 98 : index
    %c0_25 = arith.constant 0 : index
    %25 = vector.load %arg10[%c98, %c0_25] : memref<392x128xf32, #tpu.memory_space<vmem>>, vector<98x128xf32>
    %26 = arith.maximumf %24, %25 : vector<98x128xf32>
    %c196 = arith.constant 196 : index
    %c0_26 = arith.constant 0 : index
    %27 = vector.load %arg10[%c196, %c0_26] : memref<392x128xf32, #tpu.memory_space<vmem>>, vector<98x128xf32>
    %c294 = arith.constant 294 : index
    %c0_27 = arith.constant 0 : index
    %28 = vector.load %arg10[%c294, %c0_27] : memref<392x128xf32, #tpu.memory_space<vmem>>, vector<98x128xf32>
    %29 = arith.maximumf %27, %28 : vector<98x128xf32>
    %30 = arith.maximumf %26, %29 : vector<98x128xf32>
    %31 = vector.broadcast %1 : vector<1x128xf32> to vector<98x128xf32>
    %32 = arith.mulf %30, %31 : vector<98x128xf32>
    %33 = vector.broadcast %2 : vector<1x128xf32> to vector<98x128xf32>
    %34 = arith.addf %32, %33 : vector<98x128xf32>
    %c0_28 = arith.constant 0 : index
    %c0_29 = arith.constant 0 : index
    %35 = vector.load %arg11[%c0_28, %c0_29] : memref<98x128xf32, #tpu.memory_space<vmem>>, vector<98x128xf32>
    tpu.vector_store %arg11[%c0_28, %c0_29], %34 {strides = array<i32>} : memref<98x128xf32, #tpu.memory_space<vmem>>, vector<98x128xf32>,
    %cst_30 = arith.constant 0.000000e+00 : f32
    %36 = vector.broadcast %cst_30 : f32 to vector<162x128xf32>
    %c0_31 = arith.constant 0 : index
    %c0_32 = arith.constant 0 : index
    %37 = vector.load %arg12[%c0_31, %c0_32] : memref<162x128xf32, #tpu.memory_space<vmem>>, vector<162x128xf32>
    tpu.vector_store %arg12[%c0_31, %c0_32], %36 {strides = array<i32>} : memref<162x128xf32, #tpu.memory_space<vmem>>, vector<162x128xf32>,
    %c0_33 = arith.constant 0 : index
    %c0_34 = arith.constant 0 : index
    %38 = vector.load %arg11[%c0_33, %c0_34] : memref<98x128xf32, #tpu.memory_space<vmem>>, vector<3x128xf32>
    %c10_35 = arith.constant 10 : index
    %c0_36 = arith.constant 0 : index
    %39 = vector.load %arg12[%c10_35, %c0_36] : memref<162x128xf32, #tpu.memory_space<vmem>>, vector<3x128xf32>
    tpu.vector_store %arg12[%c10_35, %c0_36], %38 {strides = array<i32>} : memref<162x128xf32, #tpu.memory_space<vmem>>, vector<3x128xf32>,
    %c3_37 = arith.constant 3 : index
    %c0_38 = arith.constant 0 : index
    %40 = vector.load %arg11[%c3_37, %c0_38] : memref<98x128xf32, #tpu.memory_space<vmem>>, vector<4x128xf32>
    %c14_39 = arith.constant 14 : index
    %c0_40 = arith.constant 0 : index
    %41 = vector.load %arg12[%c14_39, %c0_40] : memref<162x128xf32, #tpu.memory_space<vmem>>, vector<4x128xf32>
    tpu.vector_store %arg12[%c14_39, %c0_40], %40 {strides = array<i32>} : memref<162x128xf32, #tpu.memory_space<vmem>>, vector<4x128xf32>,
    %c7_41 = arith.constant 7 : index
    %c0_42 = arith.constant 0 : index
    %42 = vector.load %arg11[%c7_41, %c0_42] : memref<98x128xf32, #tpu.memory_space<vmem>>, vector<3x128xf32>
    %c19 = arith.constant 19 : index
    %c0_43 = arith.constant 0 : index
    %43 = vector.load %arg12[%c19, %c0_43] : memref<162x128xf32, #tpu.memory_space<vmem>>, vector<3x128xf32>
    tpu.vector_store %arg12[%c19, %c0_43], %42 {strides = array<i32>} : memref<162x128xf32, #tpu.memory_space<vmem>>, vector<3x128xf32>,
    %c10_44 = arith.constant 10 : index
    %c0_45 = arith.constant 0 : index
    %44 = vector.load %arg11[%c10_44, %c0_45] : memref<98x128xf32, #tpu.memory_space<vmem>>, vector<4x128xf32>
    %c23 = arith.constant 23 : index
    %c0_46 = arith.constant 0 : index
    %45 = vector.load %arg12[%c23, %c0_46] : memref<162x128xf32, #tpu.memory_space<vmem>>, vector<4x128xf32>
    tpu.vector_store %arg12[%c23, %c0_46], %44 {strides = array<i32>} : memref<162x128xf32, #tpu.memory_space<vmem>>, vector<4x128xf32>,
    %c14_47 = arith.constant 14 : index
    %c0_48 = arith.constant 0 : index
    %46 = vector.load %arg11[%c14_47, %c0_48] : memref<98x128xf32, #tpu.memory_space<vmem>>, vector<3x128xf32>
    %c28 = arith.constant 28 : index
    %c0_49 = arith.constant 0 : index
    %47 = vector.load %arg12[%c28, %c0_49] : memref<162x128xf32, #tpu.memory_space<vmem>>, vector<3x128xf32>
    tpu.vector_store %arg12[%c28, %c0_49], %46 {strides = array<i32>} : memref<162x128xf32, #tpu.memory_space<vmem>>, vector<3x128xf32>,
    %c17 = arith.constant 17 : index
    %c0_50 = arith.constant 0 : index
    %48 = vector.load %arg11[%c17, %c0_50] : memref<98x128xf32, #tpu.memory_space<vmem>>, vector<4x128xf32>
    %c32 = arith.constant 32 : index
    %c0_51 = arith.constant 0 : index
    %49 = vector.load %arg12[%c32, %c0_51] : memref<162x128xf32, #tpu.memory_space<vmem>>, vector<4x128xf32>
    tpu.vector_store %arg12[%c32, %c0_51], %48 {strides = array<i32>} : memref<162x128xf32, #tpu.memory_space<vmem>>, vector<4x128xf32>,
    %c21 = arith.constant 21 : index
    %c0_52 = arith.constant 0 : index
    %50 = vector.load %arg11[%c21, %c0_52] : memref<98x128xf32, #tpu.memory_space<vmem>>, vector<3x128xf32>
    %c37 = arith.constant 37 : index
    %c0_53 = arith.constant 0 : index
    %51 = vector.load %arg12[%c37, %c0_53] : memref<162x128xf32, #tpu.memory_space<vmem>>, vector<3x128xf32>
    tpu.vector_store %arg12[%c37, %c0_53], %50 {strides = array<i32>} : memref<162x128xf32, #tpu.memory_space<vmem>>, vector<3x128xf32>,
    %c24 = arith.constant 24 : index
    %c0_54 = arith.constant 0 : index
    %52 = vector.load %arg11[%c24, %c0_54] : memref<98x128xf32, #tpu.memory_space<vmem>>, vector<4x128xf32>
    %c41 = arith.constant 41 : index
    %c0_55 = arith.constant 0 : index
    %53 = vector.load %arg12[%c41, %c0_55] : memref<162x128xf32, #tpu.memory_space<vmem>>, vector<4x128xf32>
    tpu.vector_store %arg12[%c41, %c0_55], %52 {strides = array<i32>} : memref<162x128xf32, #tpu.memory_space<vmem>>, vector<4x128xf32>,
    %c28_56 = arith.constant 28 : index
    %c0_57 = arith.constant 0 : index
    %54 = vector.load %arg11[%c28_56, %c0_57] : memref<98x128xf32, #tpu.memory_space<vmem>>, vector<3x128xf32>
    %c46 = arith.constant 46 : index
    %c0_58 = arith.constant 0 : index
    %55 = vector.load %arg12[%c46, %c0_58] : memref<162x128xf32, #tpu.memory_space<vmem>>, vector<3x128xf32>
    tpu.vector_store %arg12[%c46, %c0_58], %54 {strides = array<i32>} : memref<162x128xf32, #tpu.memory_space<vmem>>, vector<3x128xf32>,
    %c31 = arith.constant 31 : index
    %c0_59 = arith.constant 0 : index
    %56 = vector.load %arg11[%c31, %c0_59] : memref<98x128xf32, #tpu.memory_space<vmem>>, vector<4x128xf32>
    %c50 = arith.constant 50 : index
    %c0_60 = arith.constant 0 : index
    %57 = vector.load %arg12[%c50, %c0_60] : memref<162x128xf32, #tpu.memory_space<vmem>>, vector<4x128xf32>
    tpu.vector_store %arg12[%c50, %c0_60], %56 {strides = array<i32>} : memref<162x128xf32, #tpu.memory_space<vmem>>, vector<4x128xf32>,
    %c35 = arith.constant 35 : index
    %c0_61 = arith.constant 0 : index
    %58 = vector.load %arg11[%c35, %c0_61] : memref<98x128xf32, #tpu.memory_space<vmem>>, vector<3x128xf32>
    %c55 = arith.constant 55 : index
    %c0_62 = arith.constant 0 : index
    %59 = vector.load %arg12[%c55, %c0_62] : memref<162x128xf32, #tpu.memory_space<vmem>>, vector<3x128xf32>
    tpu.vector_store %arg12[%c55, %c0_62], %58 {strides = array<i32>} : memref<162x128xf32, #tpu.memory_space<vmem>>, vector<3x128xf32>,
    %c38 = arith.constant 38 : index
    %c0_63 = arith.constant 0 : index
    %60 = vector.load %arg11[%c38, %c0_63] : memref<98x128xf32, #tpu.memory_space<vmem>>, vector<4x128xf32>
    %c59 = arith.constant 59 : index
    %c0_64 = arith.constant 0 : index
    %61 = vector.load %arg12[%c59, %c0_64] : memref<162x128xf32, #tpu.memory_space<vmem>>, vector<4x128xf32>
    tpu.vector_store %arg12[%c59, %c0_64], %60 {strides = array<i32>} : memref<162x128xf32, #tpu.memory_space<vmem>>, vector<4x128xf32>,
    %c42 = arith.constant 42 : index
    %c0_65 = arith.constant 0 : index
    %62 = vector.load %arg11[%c42, %c0_65] : memref<98x128xf32, #tpu.memory_space<vmem>>, vector<3x128xf32>
    %c64 = arith.constant 64 : index
    %c0_66 = arith.constant 0 : index
    %63 = vector.load %arg12[%c64, %c0_66] : memref<162x128xf32, #tpu.memory_space<vmem>>, vector<3x128xf32>
    tpu.vector_store %arg12[%c64, %c0_66], %62 {strides = array<i32>} : memref<162x128xf32, #tpu.memory_space<vmem>>, vector<3x128xf32>,
    %c45 = arith.constant 45 : index
    %c0_67 = arith.constant 0 : index
    %64 = vector.load %arg11[%c45, %c0_67] : memref<98x128xf32, #tpu.memory_space<vmem>>, vector<4x128xf32>
    %c68 = arith.constant 68 : index
    %c0_68 = arith.constant 0 : index
    %65 = vector.load %arg12[%c68, %c0_68] : memref<162x128xf32, #tpu.memory_space<vmem>>, vector<4x128xf32>
    tpu.vector_store %arg12[%c68, %c0_68], %64 {strides = array<i32>} : memref<162x128xf32, #tpu.memory_space<vmem>>, vector<4x128xf32>,
    %c49 = arith.constant 49 : index
    %c0_69 = arith.constant 0 : index
    %66 = vector.load %arg11[%c49, %c0_69] : memref<98x128xf32, #tpu.memory_space<vmem>>, vector<3x128xf32>
    %c91 = arith.constant 91 : index
    %c0_70 = arith.constant 0 : index
    %67 = vector.load %arg12[%c91, %c0_70] : memref<162x128xf32, #tpu.memory_space<vmem>>, vector<3x128xf32>
    tpu.vector_store %arg12[%c91, %c0_70], %66 {strides = array<i32>} : memref<162x128xf32, #tpu.memory_space<vmem>>, vector<3x128xf32>,
    %c52 = arith.constant 52 : index
    %c0_71 = arith.constant 0 : index
    %68 = vector.load %arg11[%c52, %c0_71] : memref<98x128xf32, #tpu.memory_space<vmem>>, vector<4x128xf32>
    %c95 = arith.constant 95 : index
    %c0_72 = arith.constant 0 : index
    %69 = vector.load %arg12[%c95, %c0_72] : memref<162x128xf32, #tpu.memory_space<vmem>>, vector<4x128xf32>
    tpu.vector_store %arg12[%c95, %c0_72], %68 {strides = array<i32>} : memref<162x128xf32, #tpu.memory_space<vmem>>, vector<4x128xf32>,
    %c56 = arith.constant 56 : index
    %c0_73 = arith.constant 0 : index
    %70 = vector.load %arg11[%c56, %c0_73] : memref<98x128xf32, #tpu.memory_space<vmem>>, vector<3x128xf32>
    %c100 = arith.constant 100 : index
    %c0_74 = arith.constant 0 : index
    %71 = vector.load %arg12[%c100, %c0_74] : memref<162x128xf32, #tpu.memory_space<vmem>>, vector<3x128xf32>
    tpu.vector_store %arg12[%c100, %c0_74], %70 {strides = array<i32>} : memref<162x128xf32, #tpu.memory_space<vmem>>, vector<3x128xf32>,
    %c59_75 = arith.constant 59 : index
    %c0_76 = arith.constant 0 : index
    %72 = vector.load %arg11[%c59_75, %c0_76] : memref<98x128xf32, #tpu.memory_space<vmem>>, vector<4x128xf32>
    %c104 = arith.constant 104 : index
    %c0_77 = arith.constant 0 : index
    %73 = vector.load %arg12[%c104, %c0_77] : memref<162x128xf32, #tpu.memory_space<vmem>>, vector<4x128xf32>
    tpu.vector_store %arg12[%c104, %c0_77], %72 {strides = array<i32>} : memref<162x128xf32, #tpu.memory_space<vmem>>, vector<4x128xf32>,
    %c63 = arith.constant 63 : index
    %c0_78 = arith.constant 0 : index
    %74 = vector.load %arg11[%c63, %c0_78] : memref<98x128xf32, #tpu.memory_space<vmem>>, vector<3x128xf32>
    %c109 = arith.constant 109 : index
    %c0_79 = arith.constant 0 : index
    %75 = vector.load %arg12[%c109, %c0_79] : memref<162x128xf32, #tpu.memory_space<vmem>>, vector<3x128xf32>
    tpu.vector_store %arg12[%c109, %c0_79], %74 {strides = array<i32>} : memref<162x128xf32, #tpu.memory_space<vmem>>, vector<3x128xf32>,
    %c66 = arith.constant 66 : index
    %c0_80 = arith.constant 0 : index
    %76 = vector.load %arg11[%c66, %c0_80] : memref<98x128xf32, #tpu.memory_space<vmem>>, vector<4x128xf32>
    %c113 = arith.constant 113 : index
    %c0_81 = arith.constant 0 : index
    %77 = vector.load %arg12[%c113, %c0_81] : memref<162x128xf32, #tpu.memory_space<vmem>>, vector<4x128xf32>
    tpu.vector_store %arg12[%c113, %c0_81], %76 {strides = array<i32>} : memref<162x128xf32, #tpu.memory_space<vmem>>, vector<4x128xf32>,
    %c70 = arith.constant 70 : index
    %c0_82 = arith.constant 0 : index
    %78 = vector.load %arg11[%c70, %c0_82] : memref<98x128xf32, #tpu.memory_space<vmem>>, vector<3x128xf32>
    %c118 = arith.constant 118 : index
    %c0_83 = arith.constant 0 : index
    %79 = vector.load %arg12[%c118, %c0_83] : memref<162x128xf32, #tpu.memory_space<vmem>>, vector<3x128xf32>
    tpu.vector_store %arg12[%c118, %c0_83], %78 {strides = array<i32>} : memref<162x128xf32, #tpu.memory_space<vmem>>, vector<3x128xf32>,
    %c73 = arith.constant 73 : index
    %c0_84 = arith.constant 0 : index
    %80 = vector.load %arg11[%c73, %c0_84] : memref<98x128xf32, #tpu.memory_space<vmem>>, vector<4x128xf32>
    %c122 = arith.constant 122 : index
    %c0_85 = arith.constant 0 : index
    %81 = vector.load %arg12[%c122, %c0_85] : memref<162x128xf32, #tpu.memory_space<vmem>>, vector<4x128xf32>
    tpu.vector_store %arg12[%c122, %c0_85], %80 {strides = array<i32>} : memref<162x128xf32, #tpu.memory_space<vmem>>, vector<4x128xf32>,
    %c77 = arith.constant 77 : index
    %c0_86 = arith.constant 0 : index
    %82 = vector.load %arg11[%c77, %c0_86] : memref<98x128xf32, #tpu.memory_space<vmem>>, vector<3x128xf32>
    %c127 = arith.constant 127 : index
    %c0_87 = arith.constant 0 : index
    %83 = vector.load %arg12[%c127, %c0_87] : memref<162x128xf32, #tpu.memory_space<vmem>>, vector<3x128xf32>
    tpu.vector_store %arg12[%c127, %c0_87], %82 {strides = array<i32>} : memref<162x128xf32, #tpu.memory_space<vmem>>, vector<3x128xf32>,
    %c80 = arith.constant 80 : index
    %c0_88 = arith.constant 0 : index
    %84 = vector.load %arg11[%c80, %c0_88] : memref<98x128xf32, #tpu.memory_space<vmem>>, vector<4x128xf32>
    %c131 = arith.constant 131 : index
    %c0_89 = arith.constant 0 : index
    %85 = vector.load %arg12[%c131, %c0_89] : memref<162x128xf32, #tpu.memory_space<vmem>>, vector<4x128xf32>
    tpu.vector_store %arg12[%c131, %c0_89], %84 {strides = array<i32>} : memref<162x128xf32, #tpu.memory_space<vmem>>, vector<4x128xf32>,
    %c84 = arith.constant 84 : index
    %c0_90 = arith.constant 0 : index
    %86 = vector.load %arg11[%c84, %c0_90] : memref<98x128xf32, #tpu.memory_space<vmem>>, vector<3x128xf32>
    %c136 = arith.constant 136 : index
    %c0_91 = arith.constant 0 : index
    %87 = vector.load %arg12[%c136, %c0_91] : memref<162x128xf32, #tpu.memory_space<vmem>>, vector<3x128xf32>
    tpu.vector_store %arg12[%c136, %c0_91], %86 {strides = array<i32>} : memref<162x128xf32, #tpu.memory_space<vmem>>, vector<3x128xf32>,
    %c87 = arith.constant 87 : index
    %c0_92 = arith.constant 0 : index
    %88 = vector.load %arg11[%c87, %c0_92] : memref<98x128xf32, #tpu.memory_space<vmem>>, vector<4x128xf32>
    %c140 = arith.constant 140 : index
    %c0_93 = arith.constant 0 : index
    %89 = vector.load %arg12[%c140, %c0_93] : memref<162x128xf32, #tpu.memory_space<vmem>>, vector<4x128xf32>
    tpu.vector_store %arg12[%c140, %c0_93], %88 {strides = array<i32>} : memref<162x128xf32, #tpu.memory_space<vmem>>, vector<4x128xf32>,
    %c91_94 = arith.constant 91 : index
    %c0_95 = arith.constant 0 : index
    %90 = vector.load %arg11[%c91_94, %c0_95] : memref<98x128xf32, #tpu.memory_space<vmem>>, vector<3x128xf32>
    %c145 = arith.constant 145 : index
    %c0_96 = arith.constant 0 : index
    %91 = vector.load %arg12[%c145, %c0_96] : memref<162x128xf32, #tpu.memory_space<vmem>>, vector<3x128xf32>
    tpu.vector_store %arg12[%c145, %c0_96], %90 {strides = array<i32>} : memref<162x128xf32, #tpu.memory_space<vmem>>, vector<3x128xf32>,
    %c94 = arith.constant 94 : index
    %c0_97 = arith.constant 0 : index
    %92 = vector.load %arg11[%c94, %c0_97] : memref<98x128xf32, #tpu.memory_space<vmem>>, vector<4x128xf32>
    %c149 = arith.constant 149 : index
    %c0_98 = arith.constant 0 : index
    %93 = vector.load %arg12[%c149, %c0_98] : memref<162x128xf32, #tpu.memory_space<vmem>>, vector<4x128xf32>
    tpu.vector_store %arg12[%c149, %c0_98], %92 {strides = array<i32>} : memref<162x128xf32, #tpu.memory_space<vmem>>, vector<4x128xf32>,
    %c0_99 = arith.constant 0 : index
    %c0_100 = arith.constant 0 : index
    %94 = vector.load %arg12[%c0_99, %c0_100] : memref<162x128xf32, #tpu.memory_space<vmem>>, vector<4x128xf32>
    %c5_101 = arith.constant 5 : index
    %c0_102 = arith.constant 0 : index
    %95 = vector.load %arg12[%c5_101, %c0_102] : memref<162x128xf32, #tpu.memory_space<vmem>>, vector<4x128xf32>
    %c1_103 = arith.constant 1 : index
    %c0_104 = arith.constant 0 : index
    %96 = vector.load %arg12[%c1_103, %c0_104] : memref<162x128xf32, #tpu.memory_space<vmem>>, vector<4x128xf32>
    %c9_105 = arith.constant 9 : index
    %c0_106 = arith.constant 0 : index
    %97 = vector.load %arg12[%c9_105, %c0_106] : memref<162x128xf32, #tpu.memory_space<vmem>>, vector<4x128xf32>
    %c14_107 = arith.constant 14 : index
    %c0_108 = arith.constant 0 : index
    %98 = vector.load %arg12[%c14_107, %c0_108] : memref<162x128xf32, #tpu.memory_space<vmem>>, vector<4x128xf32>
    %c10_109 = arith.constant 10 : index
    %c0_110 = arith.constant 0 : index
    %99 = vector.load %arg12[%c10_109, %c0_110] : memref<162x128xf32, #tpu.memory_space<vmem>>, vector<4x128xf32>
    %c18 = arith.constant 18 : index
    %c0_111 = arith.constant 0 : index
    %100 = vector.load %arg12[%c18, %c0_111] : memref<162x128xf32, #tpu.memory_space<vmem>>, vector<4x128xf32>
    %c23_112 = arith.constant 23 : index
    %c0_113 = arith.constant 0 : index
    %101 = vector.load %arg12[%c23_112, %c0_113] : memref<162x128xf32, #tpu.memory_space<vmem>>, vector<4x128xf32>
    %c19_114 = arith.constant 19 : index
    %c0_115 = arith.constant 0 : index
    %102 = vector.load %arg12[%c19_114, %c0_115] : memref<162x128xf32, #tpu.memory_space<vmem>>, vector<4x128xf32>
    %103 = tpu.concatenate %94, %95, %96, %97, %98, %99, %100, %101, %102 in 1 : vector<4x128xf32>, vector<4x128xf32>, vector<4x128xf32>, vector<4x128xf32>, vector<4x128xf32>, vector<4x128xf32>, vector<4x128xf32>, vector<4x128xf32>, vector<4x128xf32> -> vector<4x1152xf32>
    %c0_116 = arith.constant 0 : index
    %c0_117 = arith.constant 0 : index
    %104 = vector.load %arg13[%c0_116, %c0_117] : memref<32x1152xf32, #tpu.memory_space<vmem>>, vector<4x1152xf32>
    tpu.vector_store %arg13[%c0_116, %c0_117], %103 {strides = array<i32>} : memref<32x1152xf32, #tpu.memory_space<vmem>>, vector<4x1152xf32>,
    %c18_118 = arith.constant 18 : index
    %c0_119 = arith.constant 0 : index
    %105 = vector.load %arg12[%c18_118, %c0_119] : memref<162x128xf32, #tpu.memory_space<vmem>>, vector<4x128xf32>
    %c23_120 = arith.constant 23 : index
    %c0_121 = arith.constant 0 : index
    %106 = vector.load %arg12[%c23_120, %c0_121] : memref<162x128xf32, #tpu.memory_space<vmem>>, vector<4x128xf32>
    %c19_122 = arith.constant 19 : index
    %c0_123 = arith.constant 0 : index
    %107 = vector.load %arg12[%c19_122, %c0_123] : memref<162x128xf32, #tpu.memory_space<vmem>>, vector<4x128xf32>
    %c27 = arith.constant 27 : index
    %c0_124 = arith.constant 0 : index
    %108 = vector.load %arg12[%c27, %c0_124] : memref<162x128xf32, #tpu.memory_space<vmem>>, vector<4x128xf32>
    %c32_125 = arith.constant 32 : index
    %c0_126 = arith.constant 0 : index
    %109 = vector.load %arg12[%c32_125, %c0_126] : memref<162x128xf32, #tpu.memory_space<vmem>>, vector<4x128xf32>
    %c28_127 = arith.constant 28 : index
    %c0_128 = arith.constant 0 : index
    %110 = vector.load %arg12[%c28_127, %c0_128] : memref<162x128xf32, #tpu.memory_space<vmem>>, vector<4x128xf32>
    %c36 = arith.constant 36 : index
    %c0_129 = arith.constant 0 : index
    %111 = vector.load %arg12[%c36, %c0_129] : memref<162x128xf32, #tpu.memory_space<vmem>>, vector<4x128xf32>
    %c41_130 = arith.constant 41 : index
    %c0_131 = arith.constant 0 : index
    %112 = vector.load %arg12[%c41_130, %c0_131] : memref<162x128xf32, #tpu.memory_space<vmem>>, vector<4x128xf32>
    %c37_132 = arith.constant 37 : index
    %c0_133 = arith.constant 0 : index
    %113 = vector.load %arg12[%c37_132, %c0_133] : memref<162x128xf32, #tpu.memory_space<vmem>>, vector<4x128xf32>
    %114 = tpu.concatenate %105, %106, %107, %108, %109, %110, %111, %112, %113 in 1 : vector<4x128xf32>, vector<4x128xf32>, vector<4x128xf32>, vector<4x128xf32>, vector<4x128xf32>, vector<4x128xf32>, vector<4x128xf32>, vector<4x128xf32>, vector<4x128xf32> -> vector<4x1152xf32>
    %c4_134 = arith.constant 4 : index
    %c0_135 = arith.constant 0 : index
    %115 = vector.load %arg13[%c4_134, %c0_135] : memref<32x1152xf32, #tpu.memory_space<vmem>>, vector<4x1152xf32>
    tpu.vector_store %arg13[%c4_134, %c0_135], %114 {strides = array<i32>} : memref<32x1152xf32, #tpu.memory_space<vmem>>, vector<4x1152xf32>,
    %c36_136 = arith.constant 36 : index
    %c0_137 = arith.constant 0 : index
    %116 = vector.load %arg12[%c36_136, %c0_137] : memref<162x128xf32, #tpu.memory_space<vmem>>, vector<4x128xf32>
    %c41_138 = arith.constant 41 : index
    %c0_139 = arith.constant 0 : index
    %117 = vector.load %arg12[%c41_138, %c0_139] : memref<162x128xf32, #tpu.memory_space<vmem>>, vector<4x128xf32>
    %c37_140 = arith.constant 37 : index
    %c0_141 = arith.constant 0 : index
    %118 = vector.load %arg12[%c37_140, %c0_141] : memref<162x128xf32, #tpu.memory_space<vmem>>, vector<4x128xf32>
    %c45_142 = arith.constant 45 : index
    %c0_143 = arith.constant 0 : index
    %119 = vector.load %arg12[%c45_142, %c0_143] : memref<162x128xf32, #tpu.memory_space<vmem>>, vector<4x128xf32>
    %c50_144 = arith.constant 50 : index
    %c0_145 = arith.constant 0 : index
    %120 = vector.load %arg12[%c50_144, %c0_145] : memref<162x128xf32, #tpu.memory_space<vmem>>, vector<4x128xf32>
    %c46_146 = arith.constant 46 : index
    %c0_147 = arith.constant 0 : index
    %121 = vector.load %arg12[%c46_146, %c0_147] : memref<162x128xf32, #tpu.memory_space<vmem>>, vector<4x128xf32>
    %c54 = arith.constant 54 : index
    %c0_148 = arith.constant 0 : index
    %122 = vector.load %arg12[%c54, %c0_148] : memref<162x128xf32, #tpu.memory_space<vmem>>, vector<4x128xf32>
    %c59_149 = arith.constant 59 : index
    %c0_150 = arith.constant 0 : index
    %123 = vector.load %arg12[%c59_149, %c0_150] : memref<162x128xf32, #tpu.memory_space<vmem>>, vector<4x128xf32>
    %c55_151 = arith.constant 55 : index
    %c0_152 = arith.constant 0 : index
    %124 = vector.load %arg12[%c55_151, %c0_152] : memref<162x128xf32, #tpu.memory_space<vmem>>, vector<4x128xf32>
    %125 = tpu.concatenate %116, %117, %118, %119, %120, %121, %122, %123, %124 in 1 : vector<4x128xf32>, vector<4x128xf32>, vector<4x128xf32>, vector<4x128xf32>, vector<4x128xf32>, vector<4x128xf32>, vector<4x128xf32>, vector<4x128xf32>, vector<4x128xf32> -> vector<4x1152xf32>
    %c8_153 = arith.constant 8 : index
    %c0_154 = arith.constant 0 : index
    %126 = vector.load %arg13[%c8_153, %c0_154] : memref<32x1152xf32, #tpu.memory_space<vmem>>, vector<4x1152xf32>
    tpu.vector_store %arg13[%c8_153, %c0_154], %125 {strides = array<i32>} : memref<32x1152xf32, #tpu.memory_space<vmem>>, vector<4x1152xf32>,
    %c54_155 = arith.constant 54 : index
    %c0_156 = arith.constant 0 : index
    %127 = vector.load %arg12[%c54_155, %c0_156] : memref<162x128xf32, #tpu.memory_space<vmem>>, vector<4x128xf32>
    %c59_157 = arith.constant 59 : index
    %c0_158 = arith.constant 0 : index
    %128 = vector.load %arg12[%c59_157, %c0_158] : memref<162x128xf32, #tpu.memory_space<vmem>>, vector<4x128xf32>
    %c55_159 = arith.constant 55 : index
    %c0_160 = arith.constant 0 : index
    %129 = vector.load %arg12[%c55_159, %c0_160] : memref<162x128xf32, #tpu.memory_space<vmem>>, vector<4x128xf32>
    %c63_161 = arith.constant 63 : index
    %c0_162 = arith.constant 0 : index
    %130 = vector.load %arg12[%c63_161, %c0_162] : memref<162x128xf32, #tpu.memory_space<vmem>>, vector<4x128xf32>
    %c68_163 = arith.constant 68 : index
    %c0_164 = arith.constant 0 : index
    %131 = vector.load %arg12[%c68_163, %c0_164] : memref<162x128xf32, #tpu.memory_space<vmem>>, vector<4x128xf32>
    %c64_165 = arith.constant 64 : index
    %c0_166 = arith.constant 0 : index
    %132 = vector.load %arg12[%c64_165, %c0_166] : memref<162x128xf32, #tpu.memory_space<vmem>>, vector<4x128xf32>
    %c72 = arith.constant 72 : index
    %c0_167 = arith.constant 0 : index
    %133 = vector.load %arg12[%c72, %c0_167] : memref<162x128xf32, #tpu.memory_space<vmem>>, vector<4x128xf32>
    %c77_168 = arith.constant 77 : index
    %c0_169 = arith.constant 0 : index
    %134 = vector.load %arg12[%c77_168, %c0_169] : memref<162x128xf32, #tpu.memory_space<vmem>>, vector<4x128xf32>
    %c73_170 = arith.constant 73 : index
    %c0_171 = arith.constant 0 : index
    %135 = vector.load %arg12[%c73_170, %c0_171] : memref<162x128xf32, #tpu.memory_space<vmem>>, vector<4x128xf32>
    %136 = tpu.concatenate %127, %128, %129, %130, %131, %132, %133, %134, %135 in 1 : vector<4x128xf32>, vector<4x128xf32>, vector<4x128xf32>, vector<4x128xf32>, vector<4x128xf32>, vector<4x128xf32>, vector<4x128xf32>, vector<4x128xf32>, vector<4x128xf32> -> vector<4x1152xf32>
    %c12_172 = arith.constant 12 : index
    %c0_173 = arith.constant 0 : index
    %137 = vector.load %arg13[%c12_172, %c0_173] : memref<32x1152xf32, #tpu.memory_space<vmem>>, vector<4x1152xf32>
    tpu.vector_store %arg13[%c12_172, %c0_173], %136 {strides = array<i32>} : memref<32x1152xf32, #tpu.memory_space<vmem>>, vector<4x1152xf32>,
    %c81 = arith.constant 81 : index
    %c0_174 = arith.constant 0 : index
    %138 = vector.load %arg12[%c81, %c0_174] : memref<162x128xf32, #tpu.memory_space<vmem>>, vector<4x128xf32>
    %c86 = arith.constant 86 : index
    %c0_175 = arith.constant 0 : index
    %139 = vector.load %arg12[%c86, %c0_175] : memref<162x128xf32, #tpu.memory_space<vmem>>, vector<4x128xf32>
    %c82 = arith.constant 82 : index
    %c0_176 = arith.constant 0 : index
    %140 = vector.load %arg12[%c82, %c0_176] : memref<162x128xf32, #tpu.memory_space<vmem>>, vector<4x128xf32>
    %c90 = arith.constant 90 : index
    %c0_177 = arith.constant 0 : index
    %141 = vector.load %arg12[%c90, %c0_177] : memref<162x128xf32, #tpu.memory_space<vmem>>, vector<4x128xf32>
    %c95_178 = arith.constant 95 : index
    %c0_179 = arith.constant 0 : index
    %142 = vector.load %arg12[%c95_178, %c0_179] : memref<162x128xf32, #tpu.memory_space<vmem>>, vector<4x128xf32>
    %c91_180 = arith.constant 91 : index
    %c0_181 = arith.constant 0 : index
    %143 = vector.load %arg12[%c91_180, %c0_181] : memref<162x128xf32, #tpu.memory_space<vmem>>, vector<4x128xf32>
    %c99 = arith.constant 99 : index
    %c0_182 = arith.constant 0 : index
    %144 = vector.load %arg12[%c99, %c0_182] : memref<162x128xf32, #tpu.memory_space<vmem>>, vector<4x128xf32>
    %c104_183 = arith.constant 104 : index
    %c0_184 = arith.constant 0 : index
    %145 = vector.load %arg12[%c104_183, %c0_184] : memref<162x128xf32, #tpu.memory_space<vmem>>, vector<4x128xf32>
    %c100_185 = arith.constant 100 : index
    %c0_186 = arith.constant 0 : index
    %146 = vector.load %arg12[%c100_185, %c0_186] : memref<162x128xf32, #tpu.memory_space<vmem>>, vector<4x128xf32>
    %147 = tpu.concatenate %138, %139, %140, %141, %142, %143, %144, %145, %146 in 1 : vector<4x128xf32>, vector<4x128xf32>, vector<4x128xf32>, vector<4x128xf32>, vector<4x128xf32>, vector<4x128xf32>, vector<4x128xf32>, vector<4x128xf32>, vector<4x128xf32> -> vector<4x1152xf32>
    %c16 = arith.constant 16 : index
    %c0_187 = arith.constant 0 : index
    %148 = vector.load %arg13[%c16, %c0_187] : memref<32x1152xf32, #tpu.memory_space<vmem>>, vector<4x1152xf32>
    tpu.vector_store %arg13[%c16, %c0_187], %147 {strides = array<i32>} : memref<32x1152xf32, #tpu.memory_space<vmem>>, vector<4x1152xf32>,
    %c99_188 = arith.constant 99 : index
    %c0_189 = arith.constant 0 : index
    %149 = vector.load %arg12[%c99_188, %c0_189] : memref<162x128xf32, #tpu.memory_space<vmem>>, vector<4x128xf32>
    %c104_190 = arith.constant 104 : index
    %c0_191 = arith.constant 0 : index
    %150 = vector.load %arg12[%c104_190, %c0_191] : memref<162x128xf32, #tpu.memory_space<vmem>>, vector<4x128xf32>
    %c100_192 = arith.constant 100 : index
    %c0_193 = arith.constant 0 : index
    %151 = vector.load %arg12[%c100_192, %c0_193] : memref<162x128xf32, #tpu.memory_space<vmem>>, vector<4x128xf32>
    %c108 = arith.constant 108 : index
    %c0_194 = arith.constant 0 : index
    %152 = vector.load %arg12[%c108, %c0_194] : memref<162x128xf32, #tpu.memory_space<vmem>>, vector<4x128xf32>
    %c113_195 = arith.constant 113 : index
    %c0_196 = arith.constant 0 : index
    %153 = vector.load %arg12[%c113_195, %c0_196] : memref<162x128xf32, #tpu.memory_space<vmem>>, vector<4x128xf32>
    %c109_197 = arith.constant 109 : index
    %c0_198 = arith.constant 0 : index
    %154 = vector.load %arg12[%c109_197, %c0_198] : memref<162x128xf32, #tpu.memory_space<vmem>>, vector<4x128xf32>
    %c117 = arith.constant 117 : index
    %c0_199 = arith.constant 0 : index
    %155 = vector.load %arg12[%c117, %c0_199] : memref<162x128xf32, #tpu.memory_space<vmem>>, vector<4x128xf32>
    %c122_200 = arith.constant 122 : index
    %c0_201 = arith.constant 0 : index
    %156 = vector.load %arg12[%c122_200, %c0_201] : memref<162x128xf32, #tpu.memory_space<vmem>>, vector<4x128xf32>
    %c118_202 = arith.constant 118 : index
    %c0_203 = arith.constant 0 : index
    %157 = vector.load %arg12[%c118_202, %c0_203] : memref<162x128xf32, #tpu.memory_space<vmem>>, vector<4x128xf32>
    %158 = tpu.concatenate %149, %150, %151, %152, %153, %154, %155, %156, %157 in 1 : vector<4x128xf32>, vector<4x128xf32>, vector<4x128xf32>, vector<4x128xf32>, vector<4x128xf32>, vector<4x128xf32>, vector<4x128xf32>, vector<4x128xf32>, vector<4x128xf32> -> vector<4x1152xf32>
    %c20 = arith.constant 20 : index
    %c0_204 = arith.constant 0 : index
    %159 = vector.load %arg13[%c20, %c0_204] : memref<32x1152xf32, #tpu.memory_space<vmem>>, vector<4x1152xf32>
    tpu.vector_store %arg13[%c20, %c0_204], %158 {strides = array<i32>} : memref<32x1152xf32, #tpu.memory_space<vmem>>, vector<4x1152xf32>,
    %c117_205 = arith.constant 117 : index
    %c0_206 = arith.constant 0 : index
    %160 = vector.load %arg12[%c117_205, %c0_206] : memref<162x128xf32, #tpu.memory_space<vmem>>, vector<4x128xf32>
    %c122_207 = arith.constant 122 : index
    %c0_208 = arith.constant 0 : index
    %161 = vector.load %arg12[%c122_207, %c0_208] : memref<162x128xf32, #tpu.memory_space<vmem>>, vector<4x128xf32>
    %c118_209 = arith.constant 118 : index
    %c0_210 = arith.constant 0 : index
    %162 = vector.load %arg12[%c118_209, %c0_210] : memref<162x128xf32, #tpu.memory_space<vmem>>, vector<4x128xf32>
    %c126 = arith.constant 126 : index
    %c0_211 = arith.constant 0 : index
    %163 = vector.load %arg12[%c126, %c0_211] : memref<162x128xf32, #tpu.memory_space<vmem>>, vector<4x128xf32>
    %c131_212 = arith.constant 131 : index
    %c0_213 = arith.constant 0 : index
    %164 = vector.load %arg12[%c131_212, %c0_213] : memref<162x128xf32, #tpu.memory_space<vmem>>, vector<4x128xf32>
    %c127_214 = arith.constant 127 : index
    %c0_215 = arith.constant 0 : index
    %165 = vector.load %arg12[%c127_214, %c0_215] : memref<162x128xf32, #tpu.memory_space<vmem>>, vector<4x128xf32>
    %c135 = arith.constant 135 : index
    %c0_216 = arith.constant 0 : index
    %166 = vector.load %arg12[%c135, %c0_216] : memref<162x128xf32, #tpu.memory_space<vmem>>, vector<4x128xf32>
    %c140_217 = arith.constant 140 : index
    %c0_218 = arith.constant 0 : index
    %167 = vector.load %arg12[%c140_217, %c0_218] : memref<162x128xf32, #tpu.memory_space<vmem>>, vector<4x128xf32>
    %c136_219 = arith.constant 136 : index
    %c0_220 = arith.constant 0 : index
    %168 = vector.load %arg12[%c136_219, %c0_220] : memref<162x128xf32, #tpu.memory_space<vmem>>, vector<4x128xf32>
    %169 = tpu.concatenate %160, %161, %162, %163, %164, %165, %166, %167, %168 in 1 : vector<4x128xf32>, vector<4x128xf32>, vector<4x128xf32>, vector<4x128xf32>, vector<4x128xf32>, vector<4x128xf32>, vector<4x128xf32>, vector<4x128xf32>, vector<4x128xf32> -> vector<4x1152xf32>
    %c24_221 = arith.constant 24 : index
    %c0_222 = arith.constant 0 : index
    %170 = vector.load %arg13[%c24_221, %c0_222] : memref<32x1152xf32, #tpu.memory_space<vmem>>, vector<4x1152xf32>
    tpu.vector_store %arg13[%c24_221, %c0_222], %169 {strides = array<i32>} : memref<32x1152xf32, #tpu.memory_space<vmem>>, vector<4x1152xf32>,
    %c135_223 = arith.constant 135 : index
    %c0_224 = arith.constant 0 : index
    %171 = vector.load %arg12[%c135_223, %c0_224] : memref<162x128xf32, #tpu.memory_space<vmem>>, vector<4x128xf32>
    %c140_225 = arith.constant 140 : index
    %c0_226 = arith.constant 0 : index
    %172 = vector.load %arg12[%c140_225, %c0_226] : memref<162x128xf32, #tpu.memory_space<vmem>>, vector<4x128xf32>
    %c136_227 = arith.constant 136 : index
    %c0_228 = arith.constant 0 : index
    %173 = vector.load %arg12[%c136_227, %c0_228] : memref<162x128xf32, #tpu.memory_space<vmem>>, vector<4x128xf32>
    %c144 = arith.constant 144 : index
    %c0_229 = arith.constant 0 : index
    %174 = vector.load %arg12[%c144, %c0_229] : memref<162x128xf32, #tpu.memory_space<vmem>>, vector<4x128xf32>
    %c149_230 = arith.constant 149 : index
    %c0_231 = arith.constant 0 : index
    %175 = vector.load %arg12[%c149_230, %c0_231] : memref<162x128xf32, #tpu.memory_space<vmem>>, vector<4x128xf32>
    %c145_232 = arith.constant 145 : index
    %c0_233 = arith.constant 0 : index
    %176 = vector.load %arg12[%c145_232, %c0_233] : memref<162x128xf32, #tpu.memory_space<vmem>>, vector<4x128xf32>
    %c153 = arith.constant 153 : index
    %c0_234 = arith.constant 0 : index
    %177 = vector.load %arg12[%c153, %c0_234] : memref<162x128xf32, #tpu.memory_space<vmem>>, vector<4x128xf32>
    %c158 = arith.constant 158 : index
    %c0_235 = arith.constant 0 : index
    %178 = vector.load %arg12[%c158, %c0_235] : memref<162x128xf32, #tpu.memory_space<vmem>>, vector<4x128xf32>
    %c154 = arith.constant 154 : index
    %c0_236 = arith.constant 0 : index
    %179 = vector.load %arg12[%c154, %c0_236] : memref<162x128xf32, #tpu.memory_space<vmem>>, vector<4x128xf32>
    %180 = tpu.concatenate %171, %172, %173, %174, %175, %176, %177, %178, %179 in 1 : vector<4x128xf32>, vector<4x128xf32>, vector<4x128xf32>, vector<4x128xf32>, vector<4x128xf32>, vector<4x128xf32>, vector<4x128xf32>, vector<4x128xf32>, vector<4x128xf32> -> vector<4x1152xf32>
    %c28_237 = arith.constant 28 : index
    %c0_238 = arith.constant 0 : index
    %181 = vector.load %arg13[%c28_237, %c0_238] : memref<32x1152xf32, #tpu.memory_space<vmem>>, vector<4x1152xf32>
    tpu.vector_store %arg13[%c28_237, %c0_238], %180 {strides = array<i32>} : memref<32x1152xf32, #tpu.memory_space<vmem>>, vector<4x1152xf32>,
    %c0_239 = arith.constant 0 : index
    %c0_240 = arith.constant 0 : index
    %182 = vector.load %arg13[%c0_239, %c0_240] : memref<32x1152xf32, #tpu.memory_space<vmem>>, vector<32x1152xf32>
    %c0_241 = arith.constant 0 : index
    %c0_242 = arith.constant 0 : index
    %183 = vector.load %arg3[%c0_241, %c0_242] : memref<1152x128xf32, #tpu.memory_space<vmem>>, vector<1152x128xf32>
    %cst_243 = arith.constant dense<0.000000e+00> : vector<32x128xf32>
    %184 = tpu.matmul %182, %183, %cst_243 {dimension_numbers = #tpu.dot_dimension_numbers<[1], [0], [0], [1], [0, 0, 1, 1], [], []>} : vector<32x1152xf32>, vector<1152x128xf32>, vector<32x128xf32> -> vector<32x128xf32>
    %185 = vector.broadcast %3 : vector<1x128xf32> to vector<32x128xf32>
    %186 = arith.addf %184, %185 : vector<32x128xf32>
    %cst_244 = arith.constant 0.000000e+00 : f32
    %187 = vector.broadcast %cst_244 : f32 to vector<32x128xf32>
    %188 = arith.maximumf %186, %187 : vector<32x128xf32>
    %c0_245 = arith.constant 0 : index
    %c0_246 = arith.constant 0 : index
    %189 = vector.load %arg14[%c0_245, %c0_246] : memref<32x128xf32, #tpu.memory_space<vmem>>, vector<32x128xf32>
    tpu.vector_store %arg14[%c0_245, %c0_246], %188 {strides = array<i32>} : memref<32x128xf32, #tpu.memory_space<vmem>>, vector<32x128xf32>,
    %c0_247 = arith.constant 0 : index
    %c0_248 = arith.constant 0 : index
    %190 = vector.load %arg14[%c0_247, %c0_248] : memref<32x128xf32, #tpu.memory_space<vmem>>, vector<1x128xf32>
    %c1_249 = arith.constant 1 : index
    %c0_250 = arith.constant 0 : index
    %191 = vector.load %arg14[%c1_249, %c0_250] : memref<32x128xf32, #tpu.memory_space<vmem>>, vector<1x128xf32>
    %192 = arith.maximumf %190, %191 : vector<1x128xf32>
    %c4_251 = arith.constant 4 : index
    %c0_252 = arith.constant 0 : index
    %193 = vector.load %arg14[%c4_251, %c0_252] : memref<32x128xf32, #tpu.memory_space<vmem>>, vector<1x128xf32>
    %c5_253 = arith.constant 5 : index
    %c0_254 = arith.constant 0 : index
    %194 = vector.load %arg14[%c5_253, %c0_254] : memref<32x128xf32, #tpu.memory_space<vmem>>, vector<1x128xf32>
    %195 = arith.maximumf %193, %194 : vector<1x128xf32>
    %196 = arith.maximumf %192, %195 : vector<1x128xf32>
    %197 = arith.mulf %196, %4 : vector<1x128xf32>
    %198 = arith.addf %197, %5 : vector<1x128xf32>
    %c0_255 = arith.constant 0 : index
    %c0_256 = arith.constant 0 : index
    %199 = vector.load %arg15[%c0_255, %c0_256] : memref<2x512xf32, #tpu.memory_space<vmem>>, vector<1x128xf32>
    tpu.vector_store %arg15[%c0_255, %c0_256], %198 {strides = array<i32>} : memref<2x512xf32, #tpu.memory_space<vmem>>, vector<1x128xf32>,
    %c2_257 = arith.constant 2 : index
    %c0_258 = arith.constant 0 : index
    %200 = vector.load %arg14[%c2_257, %c0_258] : memref<32x128xf32, #tpu.memory_space<vmem>>, vector<1x128xf32>
    %c3_259 = arith.constant 3 : index
    %c0_260 = arith.constant 0 : index
    %201 = vector.load %arg14[%c3_259, %c0_260] : memref<32x128xf32, #tpu.memory_space<vmem>>, vector<1x128xf32>
    %202 = arith.maximumf %200, %201 : vector<1x128xf32>
    %c6_261 = arith.constant 6 : index
    %c0_262 = arith.constant 0 : index
    %203 = vector.load %arg14[%c6_261, %c0_262] : memref<32x128xf32, #tpu.memory_space<vmem>>, vector<1x128xf32>
    %c7_263 = arith.constant 7 : index
    %c0_264 = arith.constant 0 : index
    %204 = vector.load %arg14[%c7_263, %c0_264] : memref<32x128xf32, #tpu.memory_space<vmem>>, vector<1x128xf32>
    %205 = arith.maximumf %203, %204 : vector<1x128xf32>
    %206 = arith.maximumf %202, %205 : vector<1x128xf32>
    %207 = arith.mulf %206, %4 : vector<1x128xf32>
    %208 = arith.addf %207, %5 : vector<1x128xf32>
    %c0_265 = arith.constant 0 : index
    %c128 = arith.constant 128 : index
    %209 = vector.load %arg15[%c0_265, %c128] : memref<2x512xf32, #tpu.memory_space<vmem>>, vector<1x128xf32>
    tpu.vector_store %arg15[%c0_265, %c128], %208 {strides = array<i32>} : memref<2x512xf32, #tpu.memory_space<vmem>>, vector<1x128xf32>,
    %c8_266 = arith.constant 8 : index
    %c0_267 = arith.constant 0 : index
    %210 = vector.load %arg14[%c8_266, %c0_267] : memref<32x128xf32, #tpu.memory_space<vmem>>, vector<1x128xf32>
    %c9_268 = arith.constant 9 : index
    %c0_269 = arith.constant 0 : index
    %211 = vector.load %arg14[%c9_268, %c0_269] : memref<32x128xf32, #tpu.memory_space<vmem>>, vector<1x128xf32>
    %212 = arith.maximumf %210, %211 : vector<1x128xf32>
    %c12_270 = arith.constant 12 : index
    %c0_271 = arith.constant 0 : index
    %213 = vector.load %arg14[%c12_270, %c0_271] : memref<32x128xf32, #tpu.memory_space<vmem>>, vector<1x128xf32>
    %c13_272 = arith.constant 13 : index
    %c0_273 = arith.constant 0 : index
    %214 = vector.load %arg14[%c13_272, %c0_273] : memref<32x128xf32, #tpu.memory_space<vmem>>, vector<1x128xf32>
    %215 = arith.maximumf %213, %214 : vector<1x128xf32>
    %216 = arith.maximumf %212, %215 : vector<1x128xf32>
    %217 = arith.mulf %216, %4 : vector<1x128xf32>
    %218 = arith.addf %217, %5 : vector<1x128xf32>
    %c0_274 = arith.constant 0 : index
    %c256 = arith.constant 256 : index
    %219 = vector.load %arg15[%c0_274, %c256] : memref<2x512xf32, #tpu.memory_space<vmem>>, vector<1x128xf32>
    tpu.vector_store %arg15[%c0_274, %c256], %218 {strides = array<i32>} : memref<2x512xf32, #tpu.memory_space<vmem>>, vector<1x128xf32>,
    %c10_275 = arith.constant 10 : index
    %c0_276 = arith.constant 0 : index
    %220 = vector.load %arg14[%c10_275, %c0_276] : memref<32x128xf32, #tpu.memory_space<vmem>>, vector<1x128xf32>
    %c11_277 = arith.constant 11 : index
    %c0_278 = arith.constant 0 : index
    %221 = vector.load %arg14[%c11_277, %c0_278] : memref<32x128xf32, #tpu.memory_space<vmem>>, vector<1x128xf32>
    %222 = arith.maximumf %220, %221 : vector<1x128xf32>
    %c14_279 = arith.constant 14 : index
    %c0_280 = arith.constant 0 : index
    %223 = vector.load %arg14[%c14_279, %c0_280] : memref<32x128xf32, #tpu.memory_space<vmem>>, vector<1x128xf32>
    %c15_281 = arith.constant 15 : index
    %c0_282 = arith.constant 0 : index
    %224 = vector.load %arg14[%c15_281, %c0_282] : memref<32x128xf32, #tpu.memory_space<vmem>>, vector<1x128xf32>
    %225 = arith.maximumf %223, %224 : vector<1x128xf32>
    %226 = arith.maximumf %222, %225 : vector<1x128xf32>
    %227 = arith.mulf %226, %4 : vector<1x128xf32>
    %228 = arith.addf %227, %5 : vector<1x128xf32>
    %c0_283 = arith.constant 0 : index
    %c384 = arith.constant 384 : index
    %229 = vector.load %arg15[%c0_283, %c384] : memref<2x512xf32, #tpu.memory_space<vmem>>, vector<1x128xf32>
    tpu.vector_store %arg15[%c0_283, %c384], %228 {strides = array<i32>} : memref<2x512xf32, #tpu.memory_space<vmem>>, vector<1x128xf32>,
    %c16_284 = arith.constant 16 : index
    %c0_285 = arith.constant 0 : index
    %230 = vector.load %arg14[%c16_284, %c0_285] : memref<32x128xf32, #tpu.memory_space<vmem>>, vector<1x128xf32>
    %c17_286 = arith.constant 17 : index
    %c0_287 = arith.constant 0 : index
    %231 = vector.load %arg14[%c17_286, %c0_287] : memref<32x128xf32, #tpu.memory_space<vmem>>, vector<1x128xf32>
    %232 = arith.maximumf %230, %231 : vector<1x128xf32>
    %c20_288 = arith.constant 20 : index
    %c0_289 = arith.constant 0 : index
    %233 = vector.load %arg14[%c20_288, %c0_289] : memref<32x128xf32, #tpu.memory_space<vmem>>, vector<1x128xf32>
    %c21_290 = arith.constant 21 : index
    %c0_291 = arith.constant 0 : index
    %234 = vector.load %arg14[%c21_290, %c0_291] : memref<32x128xf32, #tpu.memory_space<vmem>>, vector<1x128xf32>
    %235 = arith.maximumf %233, %234 : vector<1x128xf32>
    %236 = arith.maximumf %232, %235 : vector<1x128xf32>
    %237 = arith.mulf %236, %4 : vector<1x128xf32>
    %238 = arith.addf %237, %5 : vector<1x128xf32>
    %c1_292 = arith.constant 1 : index
    %c0_293 = arith.constant 0 : index
    %239 = vector.load %arg15[%c1_292, %c0_293] : memref<2x512xf32, #tpu.memory_space<vmem>>, vector<1x128xf32>
    tpu.vector_store %arg15[%c1_292, %c0_293], %238 {strides = array<i32>} : memref<2x512xf32, #tpu.memory_space<vmem>>, vector<1x128xf32>,
    %c18_294 = arith.constant 18 : index
    %c0_295 = arith.constant 0 : index
    %240 = vector.load %arg14[%c18_294, %c0_295] : memref<32x128xf32, #tpu.memory_space<vmem>>, vector<1x128xf32>
    %c19_296 = arith.constant 19 : index
    %c0_297 = arith.constant 0 : index
    %241 = vector.load %arg14[%c19_296, %c0_297] : memref<32x128xf32, #tpu.memory_space<vmem>>, vector<1x128xf32>
    %242 = arith.maximumf %240, %241 : vector<1x128xf32>
    %c22 = arith.constant 22 : index
    %c0_298 = arith.constant 0 : index
    %243 = vector.load %arg14[%c22, %c0_298] : memref<32x128xf32, #tpu.memory_space<vmem>>, vector<1x128xf32>
    %c23_299 = arith.constant 23 : index
    %c0_300 = arith.constant 0 : index
    %244 = vector.load %arg14[%c23_299, %c0_300] : memref<32x128xf32, #tpu.memory_space<vmem>>, vector<1x128xf32>
    %245 = arith.maximumf %243, %244 : vector<1x128xf32>
    %246 = arith.maximumf %242, %245 : vector<1x128xf32>
    %247 = arith.mulf %246, %4 : vector<1x128xf32>
    %248 = arith.addf %247, %5 : vector<1x128xf32>
    %c1_301 = arith.constant 1 : index
    %c128_302 = arith.constant 128 : index
    %249 = vector.load %arg15[%c1_301, %c128_302] : memref<2x512xf32, #tpu.memory_space<vmem>>, vector<1x128xf32>
    tpu.vector_store %arg15[%c1_301, %c128_302], %248 {strides = array<i32>} : memref<2x512xf32, #tpu.memory_space<vmem>>, vector<1x128xf32>,
    %c24_303 = arith.constant 24 : index
    %c0_304 = arith.constant 0 : index
    %250 = vector.load %arg14[%c24_303, %c0_304] : memref<32x128xf32, #tpu.memory_space<vmem>>, vector<1x128xf32>
    %c25 = arith.constant 25 : index
    %c0_305 = arith.constant 0 : index
    %251 = vector.load %arg14[%c25, %c0_305] : memref<32x128xf32, #tpu.memory_space<vmem>>, vector<1x128xf32>
    %252 = arith.maximumf %250, %251 : vector<1x128xf32>
    %c28_306 = arith.constant 28 : index
    %c0_307 = arith.constant 0 : index
    %253 = vector.load %arg14[%c28_306, %c0_307] : memref<32x128xf32, #tpu.memory_space<vmem>>, vector<1x128xf32>
    %c29 = arith.constant 29 : index
    %c0_308 = arith.constant 0 : index
    %254 = vector.load %arg14[%c29, %c0_308] : memref<32x128xf32, #tpu.memory_space<vmem>>, vector<1x128xf32>
    %255 = arith.maximumf %253, %254 : vector<1x128xf32>
    %256 = arith.maximumf %252, %255 : vector<1x128xf32>
    %257 = arith.mulf %256, %4 : vector<1x128xf32>
    %258 = arith.addf %257, %5 : vector<1x128xf32>
    %c1_309 = arith.constant 1 : index
    %c256_310 = arith.constant 256 : index
    %259 = vector.load %arg15[%c1_309, %c256_310] : memref<2x512xf32, #tpu.memory_space<vmem>>, vector<1x128xf32>
    tpu.vector_store %arg15[%c1_309, %c256_310], %258 {strides = array<i32>} : memref<2x512xf32, #tpu.memory_space<vmem>>, vector<1x128xf32>,
    %c26 = arith.constant 26 : index
    %c0_311 = arith.constant 0 : index
    %260 = vector.load %arg14[%c26, %c0_311] : memref<32x128xf32, #tpu.memory_space<vmem>>, vector<1x128xf32>
    %c27_312 = arith.constant 27 : index
    %c0_313 = arith.constant 0 : index
    %261 = vector.load %arg14[%c27_312, %c0_313] : memref<32x128xf32, #tpu.memory_space<vmem>>, vector<1x128xf32>
    %262 = arith.maximumf %260, %261 : vector<1x128xf32>
    %c30 = arith.constant 30 : index
    %c0_314 = arith.constant 0 : index
    %263 = vector.load %arg14[%c30, %c0_314] : memref<32x128xf32, #tpu.memory_space<vmem>>, vector<1x128xf32>
    %c31_315 = arith.constant 31 : index
    %c0_316 = arith.constant 0 : index
    %264 = vector.load %arg14[%c31_315, %c0_316] : memref<32x128xf32, #tpu.memory_space<vmem>>, vector<1x128xf32>
    %265 = arith.maximumf %263, %264 : vector<1x128xf32>
    %266 = arith.maximumf %262, %265 : vector<1x128xf32>
    %267 = arith.mulf %266, %4 : vector<1x128xf32>
    %268 = arith.addf %267, %5 : vector<1x128xf32>
    %c1_317 = arith.constant 1 : index
    %c384_318 = arith.constant 384 : index
    %269 = vector.load %arg15[%c1_317, %c384_318] : memref<2x512xf32, #tpu.memory_space<vmem>>, vector<1x128xf32>
    tpu.vector_store %arg15[%c1_317, %c384_318], %268 {strides = array<i32>} : memref<2x512xf32, #tpu.memory_space<vmem>>, vector<1x128xf32>,
    %c0_319 = arith.constant 0 : index
    %c0_320 = arith.constant 0 : index
    %270 = vector.load %arg15[%c0_319, %c0_320] : memref<2x512xf32, #tpu.memory_space<vmem>>, vector<2x512xf32>
    %c0_321 = arith.constant 0 : index
    %c0_322 = arith.constant 0 : index
    %271 = vector.load %arg4[%c0_321, %c0_322] : memref<512x128xf32, #tpu.memory_space<vmem>>, vector<512x128xf32>
    %cst_323 = arith.constant dense<0.000000e+00> : vector<2x128xf32>
    %272 = tpu.matmul %270, %271, %cst_323 {dimension_numbers = #tpu.dot_dimension_numbers<[1], [0], [0], [1], [0, 0, 1, 1], [], []>} : vector<2x512xf32>, vector<512x128xf32>, vector<2x128xf32> -> vector<2x128xf32>
    %273 = vector.broadcast %6 : vector<1x128xf32> to vector<2x128xf32>
    %274 = arith.addf %272, %273 : vector<2x128xf32>
    %cst_324 = arith.constant 0.000000e+00 : f32
    %275 = vector.broadcast %cst_324 : f32 to vector<2x128xf32>
    %276 = arith.maximumf %274, %275 : vector<2x128xf32>
    %277 = vector.broadcast %7 : vector<1x128xf32> to vector<2x128xf32>
    %278 = arith.mulf %276, %277 : vector<2x128xf32>
    %279 = vector.broadcast %8 : vector<1x128xf32> to vector<2x128xf32>
    %280 = arith.addf %278, %279 : vector<2x128xf32>
    %c0_325 = arith.constant 0 : index
    %c0_326 = arith.constant 0 : index
    %281 = vector.load %arg5[%c0_325, %c0_326] : memref<128x128xf32, #tpu.memory_space<vmem>>, vector<128x128xf32>
    %cst_327 = arith.constant dense<0.000000e+00> : vector<2x128xf32>
    %282 = tpu.matmul %280, %281, %cst_327 {dimension_numbers = #tpu.dot_dimension_numbers<[1], [0], [0], [1], [0, 0, 1, 1], [], []>} : vector<2x128xf32>, vector<128x128xf32>, vector<2x128xf32> -> vector<2x128xf32>
    %283 = vector.broadcast %9 : vector<1x128xf32> to vector<2x128xf32>
    %284 = arith.addf %282, %283 : vector<2x128xf32>
    %cst_328 = arith.constant 0.000000e+00 : f32
    %285 = vector.broadcast %cst_328 : f32 to vector<2x128xf32>
    %286 = arith.maximumf %284, %285 : vector<2x128xf32>
    %287 = vector.broadcast %10 : vector<1x128xf32> to vector<2x128xf32>
    %288 = arith.mulf %286, %287 : vector<2x128xf32>
    %289 = vector.broadcast %11 : vector<1x128xf32> to vector<2x128xf32>
    %290 = arith.addf %288, %289 : vector<2x128xf32>
    %c0_329 = arith.constant 0 : index
    %c0_330 = arith.constant 0 : index
    %291 = vector.load %arg6[%c0_329, %c0_330] : memref<128x128xf32, #tpu.memory_space<vmem>>, vector<128x128xf32>
    %cst_331 = arith.constant dense<0.000000e+00> : vector<2x128xf32>
    %292 = tpu.matmul %290, %291, %cst_331 {dimension_numbers = #tpu.dot_dimension_numbers<[1], [0], [0], [1], [0, 0, 1, 1], [], []>} : vector<2x128xf32>, vector<128x128xf32>, vector<2x128xf32> -> vector<2x128xf32>
    %293 = vector.broadcast %12 : vector<1x128xf32> to vector<2x128xf32>
    %294 = arith.addf %292, %293 : vector<2x128xf32>
    %cst_332 = arith.constant 0.000000e+00 : f32
    %295 = vector.broadcast %cst_332 : f32 to vector<2x128xf32>
    %296 = arith.maximumf %294, %295 : vector<2x128xf32>
    %297 = vector.broadcast %13 : vector<1x128xf32> to vector<2x128xf32>
    %298 = arith.mulf %296, %297 : vector<2x128xf32>
    %299 = vector.broadcast %14 : vector<1x128xf32> to vector<2x128xf32>
    %300 = arith.addf %298, %299 : vector<2x128xf32>
    %c0_333 = arith.constant 0 : index
    %c0_334 = arith.constant 0 : index
    %301 = vector.load %arg7[%c0_333, %c0_334] : memref<128x128xf32, #tpu.memory_space<vmem>>, vector<128x128xf32>
    %cst_335 = arith.constant dense<0.000000e+00> : vector<2x128xf32>
    %302 = tpu.matmul %300, %301, %cst_335 {dimension_numbers = #tpu.dot_dimension_numbers<[1], [0], [0], [1], [0, 0, 1, 1], [], []>} : vector<2x128xf32>, vector<128x128xf32>, vector<2x128xf32> -> vector<2x128xf32>
    %303 = vector.broadcast %15 : vector<1x128xf32> to vector<2x128xf32>
    %304 = arith.addf %302, %303 : vector<2x128xf32>
    %cst_336 = arith.constant dense<0xFF800000> : vector<2xf32>
    %305 = vector.multi_reduction <maximumf>, %304, %cst_336 [1] : vector<2x128xf32> to vector<2xf32>
    %306 = vector.shape_cast %305 : vector<2xf32> to vector<2x1xf32>
    %307 = vector.broadcast %306 : vector<2x1xf32> to vector<2x128xf32>
    %308 = arith.subf %304, %307 : vector<2x128xf32>
    %309 = math.exp %308 : vector<2x128xf32>
    %cst_337 = arith.constant dense<0.000000e+00> : vector<2xf32>
    %310 = vector.multi_reduction <add>, %309, %cst_337 [1] : vector<2x128xf32> to vector<2xf32>
    %311 = vector.shape_cast %310 : vector<2xf32> to vector<2x1xf32>
    %312 = vector.broadcast %311 : vector<2x1xf32> to vector<2x128xf32>
    %313 = arith.divf %309, %312 : vector<2x128xf32>
    %c0_338 = arith.constant 0 : index
    %c0_339 = arith.constant 0 : index
    %314 = vector.load %arg9[%c0_338, %c0_339] : memref<2x128xf32, #tpu.memory_space<vmem>>, vector<2x128xf32>
    tpu.vector_store %arg9[%c0_338, %c0_339], %313 {strides = array<i32>} : memref<2x128xf32, #tpu.memory_space<vmem>>, vector<2x128xf32>,
    return
  }
  func.func @transform_0(%arg0: i32) -> (i32, i32) {
    %c0_i32 = arith.constant 0 : i32
    %c0_i32_0 = arith.constant 0 : i32
    %c0_i32_1 = arith.constant 0 : i32
    return %c0_i32, %c0_i32_0 : i32, i32
  }
  func.func @transform_1(%arg0: i32) -> (i32, i32) {
    %c0_i32 = arith.constant 0 : i32
    %c0_i32_0 = arith.constant 0 : i32
    %c0_i32_1 = arith.constant 0 : i32
    return %c0_i32, %c0_i32_0 : i32, i32
  }
  func.func @transform_2(%arg0: i32) -> (i32, i32) {
    %c0_i32 = arith.constant 0 : i32
    %c0_i32_0 = arith.constant 0 : i32
    %c0_i32_1 = arith.constant 0 : i32
    return %c0_i32, %c0_i32_0 : i32, i32
  }
  func.func @transform_3(%arg0: i32) -> (i32, i32) {
    %c0_i32 = arith.constant 0 : i32
    %c0_i32_0 = arith.constant 0 : i32
    %c0_i32_1 = arith.constant 0 : i32
    return %c0_i32, %c0_i32_0 : i32, i32
  }
  func.func @transform_4(%arg0: i32) -> (i32, i32) {
    %c0_i32 = arith.constant 0 : i32
    %c0_i32_0 = arith.constant 0 : i32
    %c0_i32_1 = arith.constant 0 : i32
    return %c0_i32, %c0_i32_0 : i32, i32
  }
  func.func @transform_5(%arg0: i32) -> (i32, i32) {
    %c0_i32 = arith.constant 0 : i32
    %c0_i32_0 = arith.constant 0 : i32
    %c0_i32_1 = arith.constant 0 : i32
    return %c0_i32, %c0_i32_0 : i32, i32
  }
  func.func @transform_6(%arg0: i32) -> (i32, i32) {
    %c0_i32 = arith.constant 0 : i32
    %c0_i32_0 = arith.constant 0 : i32
    %c0_i32_1 = arith.constant 0 : i32
    return %c0_i32, %c0_i32_0 : i32, i32
  }
  func.func @transform_7(%arg0: i32) -> (i32, i32) {
    %c0_i32 = arith.constant 0 : i32
    %c0_i32_0 = arith.constant 0 : i32
    %c0_i32_1 = arith.constant 0 : i32
    return %c0_i32, %c0_i32_0 : i32, i32
  }
  func.func @transform_8(%arg0: i32) -> (i32, i32) {
    %c0_i32 = arith.constant 0 : i32
    %c0_i32_0 = arith.constant 0 : i32
    %c0_i32_1 = arith.constant 0 : i32
    return %c0_i32, %c0_i32_0 : i32, i32
  }
}

</mosaic_0001>

<llo_original>
// kernel: forward.1
$region0: #{forward.1}
  #allocation0 [shape = 'u32[]', space=smem, size = 0x4, offset = 0x4, fixed_abs, tag = 'smem constant byte address 0x4 - core index']
  #allocation1 [shape = 'u32[72,128]{1,0:T(1,128)}', space=vmem, size = 0x9000, scoped, tag = 'internal scratch']
  #allocation2 [shape = 'f32[392,128]{1,0:T(8,128)}', space=vmem, size = 0x31000, scoped, tag = 'scratch operand']
  #allocation3 [shape = 'f32[98,128]{1,0:T(8,128)}', space=vmem, size = 0xd000, scoped, tag = 'scratch operand']
  #allocation4 [shape = 'f32[162,128]{1,0:T(8,128)}', space=vmem, size = 0x15000, scoped, tag = 'scratch operand']
  #allocation5 [shape = 'f32[32,1152]{1,0:T(8,128)}', space=vmem, size = 0x24000, scoped, tag = 'scratch operand']
  #allocation6 [shape = 'f32[32,128]{1,0:T(8,128)}', space=vmem, size = 0x4000, scoped, tag = 'scratch operand']
  #allocation7 [shape = 'f32[2,512]{1,0:T(2,128)}', space=vmem, size = 0x1000, scoped, tag = 'scratch operand']
  %s0 = inlined_call_operand.vmem [shape: f32[392,32], index: 0, kind: input, shape index: {}]
  %s1 = inlined_call_operand.vmem [shape: f32[32,128], index: 1, kind: input, shape index: {}]
  %s2 = inlined_call_operand.vmem [shape: f32[1152,128], index: 2, kind: input, shape index: {}]
  %s3 = inlined_call_operand.vmem [shape: f32[512,128], index: 3, kind: input, shape index: {}]
  %s4 = inlined_call_operand.vmem [shape: f32[128,128], index: 4, kind: input, shape index: {}]
  %s5 = inlined_call_operand.vmem [shape: f32[128,128], index: 5, kind: input, shape index: {}]
  %s6 = inlined_call_operand.vmem [shape: f32[128,128], index: 6, kind: input, shape index: {}]
  %s7 = inlined_call_operand.vmem [shape: f32[16,128], index: 7, kind: input, shape index: {}]
  %s8 = inlined_call_operand.hbm [shape: f32[2,128], index: 8, kind: output, shape index: {}]
  %s9 = sld [smem:[#allocation0]]
  $region42: #{forward.1} parent=0
    _
  %s11 = ssub.s32 1, %s9
  %s12 = scalar_select 0, %s11, %s9
  $region1: #{forward.1} parent=0
    #allocation8 [shape = 'u8[1024]{0}', space=vmem, size = 0x400, scoped, tag = 'output window, operand 0, single buffered']
    #allocation9 [shape = 's32[1]{0}', space=sflag, size = 0x4, scoped, tag = 'scoped memory for forward.1']
    %13 = vsyncpa [#allocation9], 0
    // Predicated region
    $region2: #{forward.1} parent=1 // pred_check
      _
    $region3: #{forward.1} parent=1 // pred_check_branch
      %15 = sbr.rel (0) target = $region5
    $region4: #{forward.1} parent=1 // pred_region
      _
    $region5: #{forward.1} parent=1 // pred_fallthru
      _
    // Predicated region
    $region6: #{forward.1} parent=1 // pred_check
      _
    $region7: #{forward.1} parent=1 // pred_check_branch
      %17 = sbr.rel (0) target = $region9
    $region8: #{forward.1} parent=1 // pred_region
      _
    $region9: #{forward.1} parent=1 // pred_fallthru
      _
    // Predicated region
    $region10: #{forward.1} parent=1 // pred_check
      _
    $region11: #{forward.1} parent=1 // pred_check_branch
      %19 = sbr.rel (0) target = $region13
    $region12: #{forward.1} parent=1 // pred_region
      _
    $region13: #{forward.1} parent=1 // pred_fallthru
      _
    // Predicated region
    $region14: #{forward.1} parent=1 // pred_check
      _
    $region15: #{forward.1} parent=1 // pred_check_branch
      %21 = sbr.rel (0) target = $region17
    $region16: #{forward.1} parent=1 // pred_region
      _
    $region17: #{forward.1} parent=1 // pred_fallthru
      _
    // Predicated region
    $region18: #{forward.1} parent=1 // pred_check
      _
    $region19: #{forward.1} parent=1 // pred_check_branch
      %23 = sbr.rel (0) target = $region21
    $region20: #{forward.1} parent=1 // pred_region
      _
    $region21: #{forward.1} parent=1 // pred_fallthru
      _
    // Predicated region
    $region22: #{forward.1} parent=1 // pred_check
      _
    $region23: #{forward.1} parent=1 // pred_check_branch
      %25 = sbr.rel (0) target = $region25
    $region24: #{forward.1} parent=1 // pred_region
      _
    $region25: #{forward.1} parent=1 // pred_fallthru
      _
    // Predicated region
    $region26: #{forward.1} parent=1 // pred_check
      _
    $region27: #{forward.1} parent=1 // pred_check_branch
      %27 = sbr.rel (0) target = $region29
    $region28: #{forward.1} parent=1 // pred_region
      _
    $region29: #{forward.1} parent=1 // pred_fallthru
      _
    // Predicated region
    $region30: #{forward.1} parent=1 // pred_check
      _
    $region31: #{forward.1} parent=1 // pred_check_branch
      %29 = sbr.rel (0) target = $region33
    $region32: #{forward.1} parent=1 // pred_region
      _
    $region33: #{forward.1} parent=1 // pred_fallthru
      _
    %v30 = vld [vmem:[%s7] sm:$0x1]
    %v31 = vld [vmem:[%s7 + $0x1] sm:$0x1]
    %v32 = vld [vmem:[%s7 + $0x2] sm:$0x1]
    %v33 = vld [vmem:[%s7 + $0x3] sm:$0x1]
    %v34 = vld [vmem:[%s7 + $0x4] sm:$0x1]
    %v35 = vld [vmem:[%s7 + $0x5] sm:$0x1]
    %v36 = vld [vmem:[%s7 + $0x6] sm:$0x1]
    %v37 = vld [vmem:[%s7 + $0x7] sm:$0x1]
    %v38 = vld [vmem:[%s7 + $0x8] sm:$0x1]
    %v39 = vld [vmem:[%s7 + $0x9] sm:$0x1]
    %v40 = vld [vmem:[%s7 + $0xa] sm:$0x1]
    %v41 = vld [vmem:[%s7 + $0xb] sm:$0x1]
    %v42 = vld [vmem:[%s7 + $0xc] sm:$0x1]
    %v43 = vld [vmem:[%s7 + $0xd] sm:$0x1]
    %v44 = vld [vmem:[%s7 + $0xe] sm:$0x1]
    %v45 = vld [vmem:[%s7 + $0xf] sm:$0x1]
    %v46 = vld [vmem:[%s0] sm:$0xff]
    %v47 = vld [vmem:[%s0 + $0x8] sm:$0xff]
    %v48 = vld [vmem:[%s0 + $0x10] sm:$0xff]
    %v49 = vld [vmem:[%s0 + $0x18] sm:$0xff]
    %v50 = vld [vmem:[%s0 + $0x20] sm:$0xff]
    %v51 = vld [vmem:[%s0 + $0x28] sm:$0xff]
    %v52 = vld [vmem:[%s0 + $0x30] sm:$0xff]
    %v53 = vld [vmem:[%s0 + $0x38] sm:$0xff]
    %v54 = vld [vmem:[%s0 + $0x40] sm:$0xff]
    %v55 = vld [vmem:[%s0 + $0x48] sm:$0xff]
    %v56 = vld [vmem:[%s0 + $0x50] sm:$0xff]
    %v57 = vld [vmem:[%s0 + $0x58] sm:$0xff]
    %v58 = vld [vmem:[%s0 + $0x60] sm:$0xff]
    %v59 = vld [vmem:[%s0 + $0x68] sm:$0xff]
    %v60 = vld [vmem:[%s0 + $0x70] sm:$0xff]
    %v61 = vld [vmem:[%s0 + $0x78] sm:$0xff]
    %v62 = vld [vmem:[%s0 + $0x80] sm:$0xff]
    %v63 = vld [vmem:[%s0 + $0x88] sm:$0xff]
    %v64 = vld [vmem:[%s0 + $0x90] sm:$0xff]
    %v65 = vld [vmem:[%s0 + $0x98] sm:$0xff]
    %v66 = vld [vmem:[%s0 + $0xa0] sm:$0xff]
    %v67 = vld [vmem:[%s0 + $0xa8] sm:$0xff]
    %v68 = vld [vmem:[%s0 + $0xb0] sm:$0xff]
    %v69 = vld [vmem:[%s0 + $0xb8] sm:$0xff]
    %v70 = vld [vmem:[%s0 + $0xc0] sm:$0xff]
    %v71 = vld [vmem:[%s0 + $0xc8] sm:$0xff]
    %v72 = vld [vmem:[%s0 + $0xd0] sm:$0xff]
    %v73 = vld [vmem:[%s0 + $0xd8] sm:$0xff]
    %v74 = vld [vmem:[%s0 + $0xe0] sm:$0xff]
    %v75 = vld [vmem:[%s0 + $0xe8] sm:$0xff]
    %v76 = vld [vmem:[%s0 + $0xf0] sm:$0xff]
    %v77 = vld [vmem:[%s0 + $0xf8] sm:$0xff]
    %v78 = vld [vmem:[%s0 + $0x100] sm:$0xff]
    %v79 = vld [vmem:[%s0 + $0x108] sm:$0xff]
    %v80 = vld [vmem:[%s0 + $0x110] sm:$0xff]
    %v81 = vld [vmem:[%s0 + $0x118] sm:$0xff]
    %v82 = vld [vmem:[%s0 + $0x120] sm:$0xff]
    %v83 = vld [vmem:[%s0 + $0x128] sm:$0xff]
    %v84 = vld [vmem:[%s0 + $0x130] sm:$0xff]
    %v85 = vld [vmem:[%s0 + $0x138] sm:$0xff]
    %v86 = vld [vmem:[%s0 + $0x140] sm:$0xff]
    %v87 = vld [vmem:[%s0 + $0x148] sm:$0xff]
    %v88 = vld [vmem:[%s0 + $0x150] sm:$0xff]
    %v89 = vld [vmem:[%s0 + $0x158] sm:$0xff]
    %v90 = vld [vmem:[%s0 + $0x160] sm:$0xff]
    %v91 = vld [vmem:[%s0 + $0x168] sm:$0xff]
    %v92 = vld [vmem:[%s0 + $0x170] sm:$0xff]
    %v93 = vld [vmem:[%s0 + $0x178] sm:$0xff]
    %v94 = vld [vmem:[%s0 + $0x180] sm:$0xff]
    %v95 = vld [vmem:[%s1] sm:$0xff]
    %v96 = vld [vmem:[%s1 + $0x8] sm:$0xff]
    %v97 = vld [vmem:[%s1 + $0x10] sm:$0xff]
    %v98 = vld [vmem:[%s1 + $0x18] sm:$0xff]
    %v99 = vperm.slane %v30, 0
    %vm100 = vcmask 261120
    %v102 = vsel %vm100, %v46, 0
    %v105 = vsel %vm100, %v47, 0
    %v108 = vsel %vm100, %v48, 0
    %v111 = vsel %vm100, %v49, 0
    %v114 = vsel %vm100, %v50, 0
    %v117 = vsel %vm100, %v51, 0
    %v120 = vsel %vm100, %v52, 0
    %v123 = vsel %vm100, %v53, 0
    %v126 = vsel %vm100, %v54, 0
    %v129 = vsel %vm100, %v55, 0
    %v132 = vsel %vm100, %v56, 0
    %v135 = vsel %vm100, %v57, 0
    %v138 = vsel %vm100, %v58, 0
    %v141 = vsel %vm100, %v59, 0
    %v144 = vsel %vm100, %v60, 0
    %v147 = vsel %vm100, %v61, 0
    %v150 = vsel %vm100, %v62, 0
    %v153 = vsel %vm100, %v63, 0
    %v156 = vsel %vm100, %v64, 0
    %v159 = vsel %vm100, %v65, 0
    %v162 = vsel %vm100, %v66, 0
    %v165 = vsel %vm100, %v67, 0
    %v168 = vsel %vm100, %v68, 0
    %v171 = vsel %vm100, %v69, 0
    %v174 = vsel %vm100, %v70, 0
    %v177 = vsel %vm100, %v71, 0
    %v180 = vsel %vm100, %v72, 0
    %v183 = vsel %vm100, %v73, 0
    %v186 = vsel %vm100, %v74, 0
    %v189 = vsel %vm100, %v75, 0
    %v192 = vsel %vm100, %v76, 0
    %v195 = vsel %vm100, %v77, 0
    %v198 = vsel %vm100, %v78, 0
    %v201 = vsel %vm100, %v79, 0
    %v204 = vsel %vm100, %v80, 0
    %v207 = vsel %vm100, %v81, 0
    %v210 = vsel %vm100, %v82, 0
    %v213 = vsel %vm100, %v83, 0
    %v216 = vsel %vm100, %v84, 0
    %v219 = vsel %vm100, %v85, 0
    %v222 = vsel %vm100, %v86, 0
    %v225 = vsel %vm100, %v87, 0
    %v228 = vsel %vm100, %v88, 0
    %v231 = vsel %vm100, %v89, 0
    %v234 = vsel %vm100, %v90, 0
    %v237 = vsel %vm100, %v91, 0
    %v240 = vsel %vm100, %v92, 0
    %v243 = vsel %vm100, %v93, 0
    %v246 = vsel %vm100, %v94, 0
    %248 = vmatpush.msra.mxu0 0.0
    %249 = vmatpush.msra.mxu0 0.0
    %250 = vmatpush.msra.mxu0 0.0
    %251 = vmatpush.msra.mxu0 0.0
    %252 = vmatpush.msra.mxu0 0.0
    %253 = vmatpush.msra.mxu0 0.0
    %254 = vmatpush.msra.mxu0 0.0
    %255 = vmatpush.msra.mxu0 0.0
    %256 = vmatpush.msra.mxu0 0.0
    %257 = vmatpush.msra.mxu0 0.0
    %258 = vmatpush.msra.mxu0 0.0
    %259 = vmatpush.msra.mxu0 0.0
    %260 = vmatpush.msra.mxu0 %v98
    %261 = vmatpush.msra.mxu0 %v97
    %262 = vmatpush.msra.mxu0 %v96
    %263 = vmatpush.msra.mxu0 %v95
    %264 = vmatmul.f32.gmra.mxu0 %v102
    %v265 = vpop.f32.mrf.mxu0
    %v266 = vadd.f32 %v99, %v265
    %267 = vmatmul.f32.gmra.mxu0 %v105
    %v268 = vpop.f32.mrf.mxu0
    %v269 = vadd.f32 %v99, %v268
    %270 = vmatmul.f32.gmra.mxu0 %v108
    %v271 = vpop.f32.mrf.mxu0
    %v272 = vadd.f32 %v99, %v271
    %273 = vmatmul.f32.gmra.mxu0 %v111
    %v274 = vpop.f32.mrf.mxu0
    %v275 = vadd.f32 %v99, %v274
    %276 = vmatmul.f32.gmra.mxu0 %v114
    %v277 = vpop.f32.mrf.mxu0
    %v278 = vadd.f32 %v99, %v277
    %279 = vmatmul.f32.gmra.mxu0 %v117
    %v280 = vpop.f32.mrf.mxu0
    %v281 = vadd.f32 %v99, %v280
    %282 = vmatmul.f32.gmra.mxu0 %v120
    %v283 = vpop.f32.mrf.mxu0
    %v284 = vadd.f32 %v99, %v283
    %285 = vmatmul.f32.gmra.mxu0 %v123
    %v286 = vpop.f32.mrf.mxu0
    %v287 = vadd.f32 %v99, %v286
    %288 = vmatmul.f32.gmra.mxu0 %v126
    %v289 = vpop.f32.mrf.mxu0
    %v290 = vadd.f32 %v99, %v289
    %291 = vmatmul.f32.gmra.mxu0 %v129
    %v292 = vpop.f32.mrf.mxu0
    %v293 = vadd.f32 %v99, %v292
    %294 = vmatmul.f32.gmra.mxu0 %v132
    %v295 = vpop.f32.mrf.mxu0
    %v296 = vadd.f32 %v99, %v295
    %297 = vmatmul.f32.gmra.mxu0 %v135
    %v298 = vpop.f32.mrf.mxu0
    %v299 = vadd.f32 %v99, %v298
    %300 = vmatmul.f32.gmra.mxu0 %v138
    %v301 = vpop.f32.mrf.mxu0
    %v302 = vadd.f32 %v99, %v301
    %303 = vmatmul.f32.gmra.mxu0 %v141
    %v304 = vpop.f32.mrf.mxu0
    %v305 = vadd.f32 %v99, %v304
    %306 = vmatmul.f32.gmra.mxu0 %v144
    %v307 = vpop.f32.mrf.mxu0
    %v308 = vadd.f32 %v99, %v307
    %309 = vmatmul.f32.gmra.mxu0 %v147
    %v310 = vpop.f32.mrf.mxu0
    %v311 = vadd.f32 %v99, %v310
    %312 = vmatmul.f32.gmra.mxu0 %v150
    %v313 = vpop.f32.mrf.mxu0
    %v314 = vadd.f32 %v99, %v313
    %315 = vmatmul.f32.gmra.mxu0 %v153
    %v316 = vpop.f32.mrf.mxu0
    %v317 = vadd.f32 %v99, %v316
    %318 = vmatmul.f32.gmra.mxu0 %v156
    %v319 = vpop.f32.mrf.mxu0
    %v320 = vadd.f32 %v99, %v319
    %321 = vmatmul.f32.gmra.mxu0 %v159
    %v322 = vpop.f32.mrf.mxu0
    %v323 = vadd.f32 %v99, %v322
    %324 = vmatmul.f32.gmra.mxu0 %v162
    %v325 = vpop.f32.mrf.mxu0
    %v326 = vadd.f32 %v99, %v325
    %327 = vmatmul.f32.gmra.mxu0 %v165
    %v328 = vpop.f32.mrf.mxu0
    %v329 = vadd.f32 %v99, %v328
    %330 = vmatmul.f32.gmra.mxu0 %v168
    %v331 = vpop.f32.mrf.mxu0
    %v332 = vadd.f32 %v99, %v331
    %333 = vmatmul.f32.gmra.mxu0 %v171
    %v334 = vpop.f32.mrf.mxu0
    %v335 = vadd.f32 %v99, %v334
    %336 = vmatmul.f32.gmra.mxu0 %v174
    %v337 = vpop.f32.mrf.mxu0
    %v338 = vadd.f32 %v99, %v337
    %339 = vmatmul.f32.gmra.mxu0 %v177
    %v340 = vpop.f32.mrf.mxu0
    %v341 = vadd.f32 %v99, %v340
    %342 = vmatmul.f32.gmra.mxu0 %v180
    %v343 = vpop.f32.mrf.mxu0
    %v344 = vadd.f32 %v99, %v343
    %345 = vmatmul.f32.gmra.mxu0 %v183
    %v346 = vpop.f32.mrf.mxu0
    %v347 = vadd.f32 %v99, %v346
    %348 = vmatmul.f32.gmra.mxu0 %v186
    %v349 = vpop.f32.mrf.mxu0
    %v350 = vadd.f32 %v99, %v349
    %351 = vmatmul.f32.gmra.mxu0 %v189
    %v352 = vpop.f32.mrf.mxu0
    %v353 = vadd.f32 %v99, %v352
    %354 = vmatmul.f32.gmra.mxu0 %v192
    %v355 = vpop.f32.mrf.mxu0
    %v356 = vadd.f32 %v99, %v355
    %357 = vmatmul.f32.gmra.mxu0 %v195
    %v358 = vpop.f32.mrf.mxu0
    %v359 = vadd.f32 %v99, %v358
    %360 = vmatmul.f32.gmra.mxu0 %v198
    %v361 = vpop.f32.mrf.mxu0
    %v362 = vadd.f32 %v99, %v361
    %363 = vmatmul.f32.gmra.mxu0 %v201
    %v364 = vpop.f32.mrf.mxu0
    %v365 = vadd.f32 %v99, %v364
    %366 = vmatmul.f32.gmra.mxu0 %v204
    %v367 = vpop.f32.mrf.mxu0
    %v368 = vadd.f32 %v99, %v367
    %369 = vmatmul.f32.gmra.mxu0 %v207
    %v370 = vpop.f32.mrf.mxu0
    %v371 = vadd.f32 %v99, %v370
    %372 = vmatmul.f32.gmra.mxu0 %v210
    %v373 = vpop.f32.mrf.mxu0
    %v374 = vadd.f32 %v99, %v373
    %375 = vmatmul.f32.gmra.mxu0 %v213
    %v376 = vpop.f32.mrf.mxu0
    %v377 = vadd.f32 %v99, %v376
    %378 = vmatmul.f32.gmra.mxu0 %v216
    %v379 = vpop.f32.mrf.mxu0
    %v380 = vadd.f32 %v99, %v379
    %381 = vmatmul.f32.gmra.mxu0 %v219
    %v382 = vpop.f32.mrf.mxu0
    %v383 = vadd.f32 %v99, %v382
    %384 = vmatmul.f32.gmra.mxu0 %v222
    %v385 = vpop.f32.mrf.mxu0
    %v386 = vadd.f32 %v99, %v385
    %387 = vmatmul.f32.gmra.mxu0 %v225
    %v388 = vpop.f32.mrf.mxu0
    %v389 = vadd.f32 %v99, %v388
    %390 = vmatmul.f32.gmra.mxu0 %v228
    %v391 = vpop.f32.mrf.mxu0
    %v392 = vadd.f32 %v99, %v391
    %393 = vmatmul.f32.gmra.mxu0 %v231
    %v394 = vpop.f32.mrf.mxu0
    %v395 = vadd.f32 %v99, %v394
    %396 = vmatmul.f32.gmra.mxu0 %v234
    %v397 = vpop.f32.mrf.mxu0
    %v398 = vadd.f32 %v99, %v397
    %399 = vmatmul.f32.gmra.mxu0 %v237
    %v400 = vpop.f32.mrf.mxu0
    %v401 = vadd.f32 %v99, %v400
    %402 = vmatmul.f32.gmra.mxu0 %v240
    %v403 = vpop.f32.mrf.mxu0
    %v404 = vadd.f32 %v99, %v403
    %405 = vmatmul.f32.gmra.mxu0 %v243
    %v406 = vpop.f32.mrf.mxu0
    %v407 = vadd.f32 %v99, %v406
    %408 = vmatmul.f32.gmra.mxu0 %v246
    %v409 = vpop.f32.mrf.mxu0
    %v410 = vadd.f32 %v99, %v409
    %411 = vdwg.mxu0
    %v412 = vmax.f32 %v266, 0.0
    %v413 = vmax.f32 %v269, 0.0
    %v414 = vmax.f32 %v272, 0.0
    %v415 = vmax.f32 %v275, 0.0
    %v416 = vmax.f32 %v278, 0.0
    %v417 = vmax.f32 %v281, 0.0
    %v418 = vmax.f32 %v284, 0.0
    %v419 = vmax.f32 %v287, 0.0
    %v420 = vmax.f32 %v290, 0.0
    %v421 = vmax.f32 %v293, 0.0
    %v422 = vmax.f32 %v296, 0.0
    %v423 = vmax.f32 %v299, 0.0
    %v424 = vmax.f32 %v302, 0.0
    %v425 = vmax.f32 %v305, 0.0
    %v426 = vmax.f32 %v308, 0.0
    %v427 = vmax.f32 %v311, 0.0
    %v428 = vmax.f32 %v314, 0.0
    %v429 = vmax.f32 %v317, 0.0
    %v430 = vmax.f32 %v320, 0.0
    %v431 = vmax.f32 %v323, 0.0
    %v432 = vmax.f32 %v326, 0.0
    %v433 = vmax.f32 %v329, 0.0
    %v434 = vmax.f32 %v332, 0.0
    %v435 = vmax.f32 %v335, 0.0
    %v436 = vmax.f32 %v338, 0.0
    %v437 = vmax.f32 %v341, 0.0
    %v438 = vmax.f32 %v344, 0.0
    %v439 = vmax.f32 %v347, 0.0
    %v440 = vmax.f32 %v350, 0.0
    %v441 = vmax.f32 %v353, 0.0
    %v442 = vmax.f32 %v356, 0.0
    %v443 = vmax.f32 %v359, 0.0
    %v444 = vmax.f32 %v362, 0.0
    %v445 = vmax.f32 %v365, 0.0
    %v446 = vmax.f32 %v368, 0.0
    %v447 = vmax.f32 %v371, 0.0
    %v448 = vmax.f32 %v374, 0.0
    %v449 = vmax.f32 %v377, 0.0
    %v450 = vmax.f32 %v380, 0.0
    %v451 = vmax.f32 %v383, 0.0
    %v452 = vmax.f32 %v386, 0.0
    %v453 = vmax.f32 %v389, 0.0
    %v454 = vmax.f32 %v392, 0.0
    %v455 = vmax.f32 %v395, 0.0
    %v456 = vmax.f32 %v398, 0.0
    %v457 = vmax.f32 %v401, 0.0
    %v458 = vmax.f32 %v404, 0.0
    %v459 = vmax.f32 %v407, 0.0
    %v460 = vmax.f32 %v410, 0.0
    %461 = vst [vmem:[#allocation2] sm:$0xff] %v412
    %462 = vst [vmem:[#allocation2 + $0x8] sm:$0xff] %v413
    %463 = vst [vmem:[#allocation2 + $0x10] sm:$0xff] %v414
    %464 = vst [vmem:[#allocation2 + $0x18] sm:$0xff] %v415
    %465 = vst [vmem:[#allocation2 + $0x20] sm:$0xff] %v416
    %466 = vst [vmem:[#allocation2 + $0x28] sm:$0xff] %v417
    %467 = vst [vmem:[#allocation2 + $0x30] sm:$0xff] %v418
    %468 = vst [vmem:[#allocation2 + $0x38] sm:$0xff] %v419
    %469 = vst [vmem:[#allocation2 + $0x40] sm:$0xff] %v420
    %470 = vst [vmem:[#allocation2 + $0x48] sm:$0xff] %v421
    %471 = vst [vmem:[#allocation2 + $0x50] sm:$0xff] %v422
    %472 = vst [vmem:[#allocation2 + $0x58] sm:$0xff] %v423
    %473 = vst [vmem:[#allocation2 + $0x60] sm:$0xff] %v424
    %474 = vst [vmem:[#allocation2 + $0x68] sm:$0xff] %v425
    %475 = vst [vmem:[#allocation2 + $0x70] sm:$0xff] %v426
    %476 = vst [vmem:[#allocation2 + $0x78] sm:$0xff] %v427
    %477 = vst [vmem:[#allocation2 + $0x80] sm:$0xff] %v428
    %478 = vst [vmem:[#allocation2 + $0x88] sm:$0xff] %v429
    %479 = vst [vmem:[#allocation2 + $0x90] sm:$0xff] %v430
    %480 = vst [vmem:[#allocation2 + $0x98] sm:$0xff] %v431
    %481 = vst [vmem:[#allocation2 + $0xa0] sm:$0xff] %v432
    %482 = vst [vmem:[#allocation2 + $0xa8] sm:$0xff] %v433
    %483 = vst [vmem:[#allocation2 + $0xb0] sm:$0xff] %v434
    %484 = vst [vmem:[#allocation2 + $0xb8] sm:$0xff] %v435
    %485 = vst [vmem:[#allocation2 + $0xc0] sm:$0xff] %v436
    %486 = vst [vmem:[#allocation2 + $0xc8] sm:$0xff] %v437
    %487 = vst [vmem:[#allocation2 + $0xd0] sm:$0xff] %v438
    %488 = vst [vmem:[#allocation2 + $0xd8] sm:$0xff] %v439
    %489 = vst [vmem:[#allocation2 + $0xe0] sm:$0xff] %v440
    %490 = vst [vmem:[#allocation2 + $0xe8] sm:$0xff] %v441
    %491 = vst [vmem:[#allocation2 + $0xf0] sm:$0xff] %v442
    %492 = vst [vmem:[#allocation2 + $0xf8] sm:$0xff] %v443
    %493 = vst [vmem:[#allocation2 + $0x100] sm:$0xff] %v444
    %494 = vst [vmem:[#allocation2 + $0x108] sm:$0xff] %v445
    %495 = vst [vmem:[#allocation2 + $0x110] sm:$0xff] %v446
    %496 = vst [vmem:[#allocation2 + $0x118] sm:$0xff] %v447
    %497 = vst [vmem:[#allocation2 + $0x120] sm:$0xff] %v448
    %498 = vst [vmem:[#allocation2 + $0x128] sm:$0xff] %v449
    %499 = vst [vmem:[#allocation2 + $0x130] sm:$0xff] %v450
    %500 = vst [vmem:[#allocation2 + $0x138] sm:$0xff] %v451
    %501 = vst [vmem:[#allocation2 + $0x140] sm:$0xff] %v452
    %502 = vst [vmem:[#allocation2 + $0x148] sm:$0xff] %v453
    %503 = vst [vmem:[#allocation2 + $0x150] sm:$0xff] %v454
    %504 = vst [vmem:[#allocation2 + $0x158] sm:$0xff] %v455
    %505 = vst [vmem:[#allocation2 + $0x160] sm:$0xff] %v456
    %506 = vst [vmem:[#allocation2 + $0x168] sm:$0xff] %v457
    %507 = vst [vmem:[#allocation2 + $0x170] sm:$0xff] %v458
    %508 = vst [vmem:[#allocation2 + $0x178] sm:$0xff] %v459
    %509 = vst [vmem:[#allocation2 + $0x180] sm:$0xff] %v460
    %v510 = vld [vmem:[#allocation2] sm:$0xff]
    %v511 = vld [vmem:[#allocation2 + $0x8] sm:$0xff]
    %v512 = vld [vmem:[#allocation2 + $0x10] sm:$0xff]
    %v513 = vld [vmem:[#allocation2 + $0x18] sm:$0xff]
    %v514 = vld [vmem:[#allocation2 + $0x20] sm:$0xff]
    %v515 = vld [vmem:[#allocation2 + $0x28] sm:$0xff]
    %v516 = vld [vmem:[#allocation2 + $0x30] sm:$0xff]
    %v517 = vld [vmem:[#allocation2 + $0x38] sm:$0xff]
    %v518 = vld [vmem:[#allocation2 + $0x40] sm:$0xff]
    %v519 = vld [vmem:[#allocation2 + $0x48] sm:$0xff]
    %v520 = vld [vmem:[#allocation2 + $0x50] sm:$0xff]
    %v521 = vld [vmem:[#allocation2 + $0x58] sm:$0xff]
    %v522 = vld [vmem:[#allocation2 + $0x60] sm:$0x3]
    %v523 = vld [vmem:[#allocation2 + $0x62] sm:$0xff]
    %v524 = vld [vmem:[#allocation2 + $0x6a] sm:$0xff]
    %v525 = vld [vmem:[#allocation2 + $0x72] sm:$0xff]
    %v526 = vld [vmem:[#allocation2 + $0x7a] sm:$0xff]
    %v527 = vld [vmem:[#allocation2 + $0x82] sm:$0xff]
    %v528 = vld [vmem:[#allocation2 + $0x8a] sm:$0xff]
    %v529 = vld [vmem:[#allocation2 + $0x92] sm:$0xff]
    %v530 = vld [vmem:[#allocation2 + $0x9a] sm:$0xff]
    %v531 = vld [vmem:[#allocation2 + $0xa2] sm:$0xff]
    %v532 = vld [vmem:[#allocation2 + $0xaa] sm:$0xff]
    %v533 = vld [vmem:[#allocation2 + $0xb2] sm:$0xff]
    %v534 = vld [vmem:[#allocation2 + $0xba] sm:$0xff]
    %v535 = vld [vmem:[#allocation2 + $0xc2] sm:$0x3]
    %v536 = vmax.f32 %v510, %v523
    %v537 = vmax.f32 %v511, %v524
    %v538 = vmax.f32 %v512, %v525
    %v539 = vmax.f32 %v513, %v526
    %v540 = vmax.f32 %v514, %v527
    %v541 = vmax.f32 %v515, %v528
    %v542 = vmax.f32 %v516, %v529
    %v543 = vmax.f32 %v517, %v530
    %v544 = vmax.f32 %v518, %v531
    %v545 = vmax.f32 %v519, %v532
    %v546 = vmax.f32 %v520, %v533
    %v547 = vmax.f32 %v521, %v534
    %v548 = vmax.f32 %v522, %v535
    %v549 = vld [vmem:[#allocation2 + $0xc4] sm:$0xff]
    %v550 = vld [vmem:[#allocation2 + $0xcc] sm:$0xff]
    %v551 = vld [vmem:[#allocation2 + $0xd4] sm:$0xff]
    %v552 = vld [vmem:[#allocation2 + $0xdc] sm:$0xff]
    %v553 = vld [vmem:[#allocation2 + $0xe4] sm:$0xff]
    %v554 = vld [vmem:[#allocation2 + $0xec] sm:$0xff]
    %v555 = vld [vmem:[#allocation2 + $0xf4] sm:$0xff]
    %v556 = vld [vmem:[#allocation2 + $0xfc] sm:$0xff]
    %v557 = vld [vmem:[#allocation2 + $0x104] sm:$0xff]
    %v558 = vld [vmem:[#allocation2 + $0x10c] sm:$0xff]
    %v559 = vld [vmem:[#allocation2 + $0x114] sm:$0xff]
    %v560 = vld [vmem:[#allocation2 + $0x11c] sm:$0xff]
    %v561 = vld [vmem:[#allocation2 + $0x124] sm:$0x3]
    %v562 = vld [vmem:[#allocation2 + $0x126] sm:$0xff]
    %v563 = vld [vmem:[#allocation2 + $0x12e] sm:$0xff]
    %v564 = vld [vmem:[#allocation2 + $0x136] sm:$0xff]
    %v565 = vld [vmem:[#allocation2 + $0x13e] sm:$0xff]
    %v566 = vld [vmem:[#allocation2 + $0x146] sm:$0xff]
    %v567 = vld [vmem:[#allocation2 + $0x14e] sm:$0xff]
    %v568 = vld [vmem:[#allocation2 + $0x156] sm:$0xff]
    %v569 = vld [vmem:[#allocation2 + $0x15e] sm:$0xff]
    %v570 = vld [vmem:[#allocation2 + $0x166] sm:$0xff]
    %v571 = vld [vmem:[#allocation2 + $0x16e] sm:$0xff]
    %v572 = vld [vmem:[#allocation2 + $0x176] sm:$0xff]
    %v573 = vld [vmem:[#allocation2 + $0x17e] sm:$0xff]
    %v574 = vld [vmem:[#allocation2 + $0x186] sm:$0x3]
    %v575 = vmax.f32 %v549, %v562
    %v576 = vmax.f32 %v550, %v563
    %v577 = vmax.f32 %v551, %v564
    %v578 = vmax.f32 %v552, %v565
    %v579 = vmax.f32 %v553, %v566
    %v580 = vmax.f32 %v554, %v567
    %v581 = vmax.f32 %v555, %v568
    %v582 = vmax.f32 %v556, %v569
    %v583 = vmax.f32 %v557, %v570
    %v584 = vmax.f32 %v558, %v571
    %v585 = vmax.f32 %v559, %v572
    %v586 = vmax.f32 %v560, %v573
    %v587 = vmax.f32 %v561, %v574
    %v588 = vmax.f32 %v536, %v575
    %v589 = vmax.f32 %v537, %v576
    %v590 = vmax.f32 %v538, %v577
    %v591 = vmax.f32 %v539, %v578
    %v592 = vmax.f32 %v540, %v579
    %v593 = vmax.f32 %v541, %v580
    %v594 = vmax.f32 %v542, %v581
    %v595 = vmax.f32 %v543, %v582
    %v596 = vmax.f32 %v544, %v583
    %v597 = vmax.f32 %v545, %v584
    %v598 = vmax.f32 %v546, %v585
    %v599 = vmax.f32 %v547, %v586
    %v600 = vmax.f32 %v548, %v587
    %v601 = vperm.slane %v31, 0
    %v602 = vmul.f32 %v588, %v601
    %v603 = vmul.f32 %v589, %v601
    %v604 = vmul.f32 %v590, %v601
    %v605 = vmul.f32 %v591, %v601
    %v606 = vmul.f32 %v592, %v601
    %v607 = vmul.f32 %v593, %v601
    %v608 = vmul.f32 %v594, %v601
    %v609 = vmul.f32 %v595, %v601
    %v610 = vmul.f32 %v596, %v601
    %v611 = vmul.f32 %v597, %v601
    %v612 = vmul.f32 %v598, %v601
    %v613 = vmul.f32 %v599, %v601
    %v614 = vmul.f32 %v600, %v601
    %v615 = vperm.slane %v32, 0
    %v616 = vadd.f32 %v602, %v615
    %v617 = vadd.f32 %v603, %v615
    %v618 = vadd.f32 %v604, %v615
    %v619 = vadd.f32 %v605, %v615
    %v620 = vadd.f32 %v606, %v615
    %v621 = vadd.f32 %v607, %v615
    %v622 = vadd.f32 %v608, %v615
    %v623 = vadd.f32 %v609, %v615
    %v624 = vadd.f32 %v610, %v615
    %v625 = vadd.f32 %v611, %v615
    %v626 = vadd.f32 %v612, %v615
    %v627 = vadd.f32 %v613, %v615
    %v628 = vadd.f32 %v614, %v615
    %629 = vst [vmem:[#allocation3] sm:$0xff] %v616
    %630 = vst [vmem:[#allocation3 + $0x8] sm:$0xff] %v617
    %631 = vst [vmem:[#allocation3 + $0x10] sm:$0xff] %v618
    %632 = vst [vmem:[#allocation3 + $0x18] sm:$0xff] %v619
    %633 = vst [vmem:[#allocation3 + $0x20] sm:$0xff] %v620
    %634 = vst [vmem:[#allocation3 + $0x28] sm:$0xff] %v621
    %635 = vst [vmem:[#allocation3 + $0x30] sm:$0xff] %v622
    %636 = vst [vmem:[#allocation3 + $0x38] sm:$0xff] %v623
    %637 = vst [vmem:[#allocation3 + $0x40] sm:$0xff] %v624
    %638 = vst [vmem:[#allocation3 + $0x48] sm:$0xff] %v625
    %639 = vst [vmem:[#allocation3 + $0x50] sm:$0xff] %v626
    %640 = vst [vmem:[#allocation3 + $0x58] sm:$0xff] %v627
    %641 = vst [vmem:[#allocation3 + $0x60] sm:$0x3] %v628
    %642 = vst [vmem:[#allocation4] sm:$0xff] 0.0
    %643 = vst [vmem:[#allocation4 + $0x8] sm:$0xff] 0.0
    %644 = vst [vmem:[#allocation4 + $0x10] sm:$0xff] 0.0
    %645 = vst [vmem:[#allocation4 + $0x18] sm:$0xff] 0.0
    %646 = vst [vmem:[#allocation4 + $0x20] sm:$0xff] 0.0
    %647 = vst [vmem:[#allocation4 + $0x28] sm:$0xff] 0.0
    %648 = vst [vmem:[#allocation4 + $0x30] sm:$0xff] 0.0
    %649 = vst [vmem:[#allocation4 + $0x38] sm:$0xff] 0.0
    %650 = vst [vmem:[#allocation4 + $0x40] sm:$0xff] 0.0
    %651 = vst [vmem:[#allocation4 + $0x48] sm:$0xff] 0.0
    %652 = vst [vmem:[#allocation4 + $0x50] sm:$0xff] 0.0
    %653 = vst [vmem:[#allocation4 + $0x58] sm:$0xff] 0.0
    %654 = vst [vmem:[#allocation4 + $0x60] sm:$0xff] 0.0
    %655 = vst [vmem:[#allocation4 + $0x68] sm:$0xff] 0.0
    %656 = vst [vmem:[#allocation4 + $0x70] sm:$0xff] 0.0
    %657 = vst [vmem:[#allocation4 + $0x78] sm:$0xff] 0.0
    %658 = vst [vmem:[#allocation4 + $0x80] sm:$0xff] 0.0
    %659 = vst [vmem:[#allocation4 + $0x88] sm:$0xff] 0.0
    %660 = vst [vmem:[#allocation4 + $0x90] sm:$0xff] 0.0
    %661 = vst [vmem:[#allocation4 + $0x98] sm:$0xff] 0.0
    %662 = vst [vmem:[#allocation4 + $0xa0] sm:$0x3] 0.0
    %v663 = vld [vmem:[#allocation3] sm:$0x7]
    %664 = vst [vmem:[#allocation4 + $0xa] sm:$0x7] %v663
    %v665 = vld [vmem:[#allocation3 + $0x3] sm:$0xf]
    %666 = vst [vmem:[#allocation4 + $0xe] sm:$0xf] %v665
    %v667 = vld [vmem:[#allocation3 + $0x7] sm:$0x7]
    %668 = vst [vmem:[#allocation4 + $0x13] sm:$0x7] %v667
    %v669 = vld [vmem:[#allocation3 + $0xa] sm:$0xf]
    %670 = vst [vmem:[#allocation4 + $0x17] sm:$0xf] %v669
    %v671 = vld [vmem:[#allocation3 + $0xe] sm:$0x7]
    %672 = vst [vmem:[#allocation4 + $0x1c] sm:$0x7] %v671
    %v673 = vld [vmem:[#allocation3 + $0x11] sm:$0xf]
    %674 = vst [vmem:[#allocation4 + $0x20] sm:$0xf] %v673
    %v675 = vld [vmem:[#allocation3 + $0x15] sm:$0x7]
    %676 = vst [vmem:[#allocation4 + $0x25] sm:$0x7] %v675
    %v677 = vld [vmem:[#allocation3 + $0x18] sm:$0xf]
    %678 = vst [vmem:[#allocation4 + $0x29] sm:$0xf] %v677
    %v679 = vld [vmem:[#allocation3 + $0x1c] sm:$0x7]
    %680 = vst [vmem:[#allocation4 + $0x2e] sm:$0x7] %v679
    %v681 = vld [vmem:[#allocation3 + $0x1f] sm:$0xf]
    %682 = vst [vmem:[#allocation4 + $0x32] sm:$0xf] %v681
    %v683 = vld [vmem:[#allocation3 + $0x23] sm:$0x7]
    %684 = vst [vmem:[#allocation4 + $0x37] sm:$0x7] %v683
    %v685 = vld [vmem:[#allocation3 + $0x26] sm:$0xf]
    %686 = vst [vmem:[#allocation4 + $0x3b] sm:$0xf] %v685
    %v687 = vld [vmem:[#allocation3 + $0x2a] sm:$0x7]
    %688 = vst [vmem:[#allocation4 + $0x40] sm:$0x7] %v687
    %v689 = vld [vmem:[#allocation3 + $0x2d] sm:$0xf]
    %690 = vst [vmem:[#allocation4 + $0x44] sm:$0xf] %v689
    %v691 = vld [vmem:[#allocation3 + $0x31] sm:$0x7]
    %692 = vst [vmem:[#allocation4 + $0x5b] sm:$0x7] %v691
    %v693 = vld [vmem:[#allocation3 + $0x34] sm:$0xf]
    %694 = vst [vmem:[#allocation4 + $0x5f] sm:$0xf] %v693
    %v695 = vld [vmem:[#allocation3 + $0x38] sm:$0x7]
    %696 = vst [vmem:[#allocation4 + $0x64] sm:$0x7] %v695
    %v697 = vld [vmem:[#allocation3 + $0x3b] sm:$0xf]
    %698 = vst [vmem:[#allocation4 + $0x68] sm:$0xf] %v697
    %v699 = vld [vmem:[#allocation3 + $0x3f] sm:$0x7]
    %700 = vst [vmem:[#allocation4 + $0x6d] sm:$0x7] %v699
    %v701 = vld [vmem:[#allocation3 + $0x42] sm:$0xf]
    %702 = vst [vmem:[#allocation4 + $0x71] sm:$0xf] %v701
    %v703 = vld [vmem:[#allocation3 + $0x46] sm:$0x7]
    %704 = vst [vmem:[#allocation4 + $0x76] sm:$0x7] %v703
    %v705 = vld [vmem:[#allocation3 + $0x49] sm:$0xf]
    %706 = vst [vmem:[#allocation4 + $0x7a] sm:$0xf] %v705
    %v707 = vld [vmem:[#allocation3 + $0x4d] sm:$0x7]
    %708 = vst [vmem:[#allocation4 + $0x7f] sm:$0x7] %v707
    %v709 = vld [vmem:[#allocation3 + $0x50] sm:$0xf]
    %710 = vst [vmem:[#allocation4 + $0x83] sm:$0xf] %v709
    %v711 = vld [vmem:[#allocation3 + $0x54] sm:$0x7]
    %712 = vst [vmem:[#allocation4 + $0x88] sm:$0x7] %v711
    %v713 = vld [vmem:[#allocation3 + $0x57] sm:$0xf]
    %714 = vst [vmem:[#allocation4 + $0x8c] sm:$0xf] %v713
    %v715 = vld [vmem:[#allocation3 + $0x5b] sm:$0x7]
    %716 = vst [vmem:[#allocation4 + $0x91] sm:$0x7] %v715
    %v717 = vld [vmem:[#allocation3 + $0x5e] sm:$0xf]
    %718 = vst [vmem:[#allocation4 + $0x95] sm:$0xf] %v717
    %v719 = vld [vmem:[#allocation4] sm:$0xf]
    %v720 = vld [vmem:[#allocation4 + $0x5] sm:$0xf]
    %v721 = vld [vmem:[#allocation4 + $0x1] sm:$0xf]
    %v722 = vld [vmem:[#allocation4 + $0x9] sm:$0xf]
    %v723 = vld [vmem:[#allocation4 + $0xe] sm:$0xf]
    %v724 = vld [vmem:[#allocation4 + $0xa] sm:$0xf]
    %v725 = vld [vmem:[#allocation4 + $0x12] sm:$0xf]
    %v726 = vld [vmem:[#allocation4 + $0x17] sm:$0xf]
    %v727 = vld [vmem:[#allocation4 + $0x13] sm:$0xf]
    %728 = vst [vmem:[#allocation5] sm:$0xf] %v719
    %729 = vst [vmem:[#allocation5 + $0x8] sm:$0xf] %v720
    %730 = vst [vmem:[#allocation5 + $0x10] sm:$0xf] %v721
    %731 = vst [vmem:[#allocation5 + $0x18] sm:$0xf] %v722
    %732 = vst [vmem:[#allocation5 + $0x20] sm:$0xf] %v723
    %733 = vst [vmem:[#allocation5 + $0x28] sm:$0xf] %v724
    %734 = vst [vmem:[#allocation5 + $0x30] sm:$0xf] %v725
    %735 = vst [vmem:[#allocation5 + $0x38] sm:$0xf] %v726
    %736 = vst [vmem:[#allocation5 + $0x40] sm:$0xf] %v727
    %v737 = vld [vmem:[#allocation4 + $0x12] sm:$0xf]
    %v738 = vld [vmem:[#allocation4 + $0x17] sm:$0xf]
    %v739 = vld [vmem:[#allocation4 + $0x13] sm:$0xf]
    %v740 = vld [vmem:[#allocation4 + $0x1b] sm:$0xf]
    %v741 = vld [vmem:[#allocation4 + $0x20] sm:$0xf]
    %v742 = vld [vmem:[#allocation4 + $0x1c] sm:$0xf]
    %v743 = vld [vmem:[#allocation4 + $0x24] sm:$0xf]
    %v744 = vld [vmem:[#allocation4 + $0x29] sm:$0xf]
    %v745 = vld [vmem:[#allocation4 + $0x25] sm:$0xf]
    %v755 = vrot.slane %v737, 4
    %v756 = vrot.slane %v738, 4
    %v757 = vrot.slane %v739, 4
    %v758 = vrot.slane %v740, 4
    %v759 = vrot.slane %v741, 4
    %v760 = vrot.slane %v742, 4
    %v761 = vrot.slane %v743, 4
    %v762 = vrot.slane %v744, 4
    %v763 = vrot.slane %v745, 4
    %773 = vst [vmem:[#allocation5] sm:$0xf0] %v755
    %774 = vst [vmem:[#allocation5 + $0x8] sm:$0xf0] %v756
    %775 = vst [vmem:[#allocation5 + $0x10] sm:$0xf0] %v757
    %776 = vst [vmem:[#allocation5 + $0x18] sm:$0xf0] %v758
    %777 = vst [vmem:[#allocation5 + $0x20] sm:$0xf0] %v759
    %778 = vst [vmem:[#allocation5 + $0x28] sm:$0xf0] %v760
    %779 = vst [vmem:[#allocation5 + $0x30] sm:$0xf0] %v761
    %780 = vst [vmem:[#allocation5 + $0x38] sm:$0xf0] %v762
    %781 = vst [vmem:[#allocation5 + $0x40] sm:$0xf0] %v763
    %v782 = vld [vmem:[#allocation4 + $0x24] sm:$0xf]
    %v783 = vld [vmem:[#allocation4 + $0x29] sm:$0xf]
    %v784 = vld [vmem:[#allocation4 + $0x25] sm:$0xf]
    %v785 = vld [vmem:[#allocation4 + $0x2d] sm:$0xf]
    %v786 = vld [vmem:[#allocation4 + $0x32] sm:$0xf]
    %v787 = vld [vmem:[#allocation4 + $0x2e] sm:$0xf]
    %v788 = vld [vmem:[#allocation4 + $0x36] sm:$0xf]
    %v789 = vld [vmem:[#allocation4 + $0x3b] sm:$0xf]
    %v790 = vld [vmem:[#allocation4 + $0x37] sm:$0xf]
    %791 = vst [vmem:[#allocation5 + $0x48] sm:$0xf] %v782
    %792 = vst [vmem:[#allocation5 + $0x50] sm:$0xf] %v783
    %793 = vst [vmem:[#allocation5 + $0x58] sm:$0xf] %v784
    %794 = vst [vmem:[#allocation5 + $0x60] sm:$0xf] %v785
    %795 = vst [vmem:[#allocation5 + $0x68] sm:$0xf] %v786
    %796 = vst [vmem:[#allocation5 + $0x70] sm:$0xf] %v787
    %797 = vst [vmem:[#allocation5 + $0x78] sm:$0xf] %v788
    %798 = vst [vmem:[#allocation5 + $0x80] sm:$0xf] %v789
    %799 = vst [vmem:[#allocation5 + $0x88] sm:$0xf] %v790
    %v800 = vld [vmem:[#allocation4 + $0x36] sm:$0xf]
    %v801 = vld [vmem:[#allocation4 + $0x3b] sm:$0xf]
    %v802 = vld [vmem:[#allocation4 + $0x37] sm:$0xf]
    %v803 = vld [vmem:[#allocation4 + $0x3f] sm:$0xf]
    %v804 = vld [vmem:[#allocation4 + $0x44] sm:$0xf]
    %v805 = vld [vmem:[#allocation4 + $0x40] sm:$0xf]
    %v806 = vld [vmem:[#allocation4 + $0x48] sm:$0xf]
    %v807 = vld [vmem:[#allocation4 + $0x4d] sm:$0xf]
    %v808 = vld [vmem:[#allocation4 + $0x49] sm:$0xf]
    %v818 = vrot.slane %v800, 4
    %v819 = vrot.slane %v801, 4
    %v820 = vrot.slane %v802, 4
    %v821 = vrot.slane %v803, 4
    %v822 = vrot.slane %v804, 4
    %v823 = vrot.slane %v805, 4
    %v824 = vrot.slane %v806, 4
    %v825 = vrot.slane %v807, 4
    %v826 = vrot.slane %v808, 4
    %836 = vst [vmem:[#allocation5 + $0x48] sm:$0xf0] %v818
    %837 = vst [vmem:[#allocation5 + $0x50] sm:$0xf0] %v819
    %838 = vst [vmem:[#allocation5 + $0x58] sm:$0xf0] %v820
    %839 = vst [vmem:[#allocation5 + $0x60] sm:$0xf0] %v821
    %840 = vst [vmem:[#allocation5 + $0x68] sm:$0xf0] %v822
    %841 = vst [vmem:[#allocation5 + $0x70] sm:$0xf0] %v823
    %842 = vst [vmem:[#allocation5 + $0x78] sm:$0xf0] %v824
    %843 = vst [vmem:[#allocation5 + $0x80] sm:$0xf0] %v825
    %844 = vst [vmem:[#allocation5 + $0x88] sm:$0xf0] %v826
    %v845 = vld [vmem:[#allocation4 + $0x51] sm:$0xf]
    %v846 = vld [vmem:[#allocation4 + $0x56] sm:$0xf]
    %v847 = vld [vmem:[#allocation4 + $0x52] sm:$0xf]
    %v848 = vld [vmem:[#allocation4 + $0x5a] sm:$0xf]
    %v849 = vld [vmem:[#allocation4 + $0x5f] sm:$0xf]
    %v850 = vld [vmem:[#allocation4 + $0x5b] sm:$0xf]
    %v851 = vld [vmem:[#allocation4 + $0x63] sm:$0xf]
    %v852 = vld [vmem:[#allocation4 + $0x68] sm:$0xf]
    %v853 = vld [vmem:[#allocation4 + $0x64] sm:$0xf]
    %854 = vst [vmem:[#allocation5 + $0x90] sm:$0xf] %v845
    %855 = vst [vmem:[#allocation5 + $0x98] sm:$0xf] %v846
    %856 = vst [vmem:[#allocation5 + $0xa0] sm:$0xf] %v847
    %857 = vst [vmem:[#allocation5 + $0xa8] sm:$0xf] %v848
    %858 = vst [vmem:[#allocation5 + $0xb0] sm:$0xf] %v849
    %859 = vst [vmem:[#allocation5 + $0xb8] sm:$0xf] %v850
    %860 = vst [vmem:[#allocation5 + $0xc0] sm:$0xf] %v851
    %861 = vst [vmem:[#allocation5 + $0xc8] sm:$0xf] %v852
    %862 = vst [vmem:[#allocation5 + $0xd0] sm:$0xf] %v853
    %v863 = vld [vmem:[#allocation4 + $0x63] sm:$0xf]
    %v864 = vld [vmem:[#allocation4 + $0x68] sm:$0xf]
    %v865 = vld [vmem:[#allocation4 + $0x64] sm:$0xf]
    %v866 = vld [vmem:[#allocation4 + $0x6c] sm:$0xf]
    %v867 = vld [vmem:[#allocation4 + $0x71] sm:$0xf]
    %v868 = vld [vmem:[#allocation4 + $0x6d] sm:$0xf]
    %v869 = vld [vmem:[#allocation4 + $0x75] sm:$0xf]
    %v870 = vld [vmem:[#allocation4 + $0x7a] sm:$0xf]
    %v871 = vld [vmem:[#allocation4 + $0x76] sm:$0xf]
    %v881 = vrot.slane %v863, 4
    %v882 = vrot.slane %v864, 4
    %v883 = vrot.slane %v865, 4
    %v884 = vrot.slane %v866, 4
    %v885 = vrot.slane %v867, 4
    %v886 = vrot.slane %v868, 4
    %v887 = vrot.slane %v869, 4
    %v888 = vrot.slane %v870, 4
    %v889 = vrot.slane %v871, 4
    %899 = vst [vmem:[#allocation5 + $0x90] sm:$0xf0] %v881
    %900 = vst [vmem:[#allocation5 + $0x98] sm:$0xf0] %v882
    %901 = vst [vmem:[#allocation5 + $0xa0] sm:$0xf0] %v883
    %902 = vst [vmem:[#allocation5 + $0xa8] sm:$0xf0] %v884
    %903 = vst [vmem:[#allocation5 + $0xb0] sm:$0xf0] %v885
    %904 = vst [vmem:[#allocation5 + $0xb8] sm:$0xf0] %v886
    %905 = vst [vmem:[#allocation5 + $0xc0] sm:$0xf0] %v887
    %906 = vst [vmem:[#allocation5 + $0xc8] sm:$0xf0] %v888
    %907 = vst [vmem:[#allocation5 + $0xd0] sm:$0xf0] %v889
    %v908 = vld [vmem:[#allocation4 + $0x75] sm:$0xf]
    %v909 = vld [vmem:[#allocation4 + $0x7a] sm:$0xf]
    %v910 = vld [vmem:[#allocation4 + $0x76] sm:$0xf]
    %v911 = vld [vmem:[#allocation4 + $0x7e] sm:$0xf]
    %v912 = vld [vmem:[#allocation4 + $0x83] sm:$0xf]
    %v913 = vld [vmem:[#allocation4 + $0x7f] sm:$0xf]
    %v914 = vld [vmem:[#allocation4 + $0x87] sm:$0xf]
    %v915 = vld [vmem:[#allocation4 + $0x8c] sm:$0xf]
    %v916 = vld [vmem:[#allocation4 + $0x88] sm:$0xf]
    %917 = vst [vmem:[#allocation5 + $0xd8] sm:$0xf] %v908
    %918 = vst [vmem:[#allocation5 + $0xe0] sm:$0xf] %v909
    %919 = vst [vmem:[#allocation5 + $0xe8] sm:$0xf] %v910
    %920 = vst [vmem:[#allocation5 + $0xf0] sm:$0xf] %v911
    %921 = vst [vmem:[#allocation5 + $0xf8] sm:$0xf] %v912
    %922 = vst [vmem:[#allocation5 + $0x100] sm:$0xf] %v913
    %923 = vst [vmem:[#allocation5 + $0x108] sm:$0xf] %v914
    %924 = vst [vmem:[#allocation5 + $0x110] sm:$0xf] %v915
    %925 = vst [vmem:[#allocation5 + $0x118] sm:$0xf] %v916
    %v926 = vld [vmem:[#allocation4 + $0x87] sm:$0xf]
    %v927 = vld [vmem:[#allocation4 + $0x8c] sm:$0xf]
    %v928 = vld [vmem:[#allocation4 + $0x88] sm:$0xf]
    %v929 = vld [vmem:[#allocation4 + $0x90] sm:$0xf]
    %v930 = vld [vmem:[#allocation4 + $0x95] sm:$0xf]
    %v931 = vld [vmem:[#allocation4 + $0x91] sm:$0xf]
    %v932 = vld [vmem:[#allocation4 + $0x99] sm:$0xf]
    %v933 = vld [vmem:[#allocation4 + $0x9e] sm:$0xf]
    %v934 = vld [vmem:[#allocation4 + $0x9a] sm:$0xf]
    %v944 = vrot.slane %v926, 4
    %v945 = vrot.slane %v927, 4
    %v946 = vrot.slane %v928, 4
    %v947 = vrot.slane %v929, 4
    %v948 = vrot.slane %v930, 4
    %v949 = vrot.slane %v931, 4
    %v950 = vrot.slane %v932, 4
    %v951 = vrot.slane %v933, 4
    %v952 = vrot.slane %v934, 4
    %962 = vst [vmem:[#allocation5 + $0xd8] sm:$0xf0] %v944
    %963 = vst [vmem:[#allocation5 + $0xe0] sm:$0xf0] %v945
    %964 = vst [vmem:[#allocation5 + $0xe8] sm:$0xf0] %v946
    %965 = vst [vmem:[#allocation5 + $0xf0] sm:$0xf0] %v947
    %966 = vst [vmem:[#allocation5 + $0xf8] sm:$0xf0] %v948
    %967 = vst [vmem:[#allocation5 + $0x100] sm:$0xf0] %v949
    %968 = vst [vmem:[#allocation5 + $0x108] sm:$0xf0] %v950
    %969 = vst [vmem:[#allocation5 + $0x110] sm:$0xf0] %v951
    %970 = vst [vmem:[#allocation5 + $0x118] sm:$0xf0] %v952
    %v971 = vld [vmem:[#allocation5] sm:$0xff]
    %v972 = vld [vmem:[#allocation5 + $0x8] sm:$0xff]
    %v973 = vld [vmem:[#allocation5 + $0x10] sm:$0xff]
    %v974 = vld [vmem:[#allocation5 + $0x18] sm:$0xff]
    %v975 = vld [vmem:[#allocation5 + $0x20] sm:$0xff]
    %v976 = vld [vmem:[#allocation5 + $0x28] sm:$0xff]
    %v977 = vld [vmem:[#allocation5 + $0x30] sm:$0xff]
    %v978 = vld [vmem:[#allocation5 + $0x38] sm:$0xff]
    %v979 = vld [vmem:[#allocation5 + $0x40] sm:$0xff]
    %v980 = vld [vmem:[#allocation5 + $0x48] sm:$0xff]
    %v981 = vld [vmem:[#allocation5 + $0x50] sm:$0xff]
    %v982 = vld [vmem:[#allocation5 + $0x58] sm:$0xff]
    %v983 = vld [vmem:[#allocation5 + $0x60] sm:$0xff]
    %v984 = vld [vmem:[#allocation5 + $0x68] sm:$0xff]
    %v985 = vld [vmem:[#allocation5 + $0x70] sm:$0xff]
    %v986 = vld [vmem:[#allocation5 + $0x78] sm:$0xff]
    %v987 = vld [vmem:[#allocation5 + $0x80] sm:$0xff]
    %v988 = vld [vmem:[#allocation5 + $0x88] sm:$0xff]
    %v989 = vld [vmem:[#allocation5 + $0x90] sm:$0xff]
    %v990 = vld [vmem:[#allocation5 + $0x98] sm:$0xff]
    %v991 = vld [vmem:[#allocation5 + $0xa0] sm:$0xff]
    %v992 = vld [vmem:[#allocation5 + $0xa8] sm:$0xff]
    %v993 = vld [vmem:[#allocation5 + $0xb0] sm:$0xff]
    %v994 = vld [vmem:[#allocation5 + $0xb8] sm:$0xff]
    %v995 = vld [vmem:[#allocation5 + $0xc0] sm:$0xff]
    %v996 = vld [vmem:[#allocation5 + $0xc8] sm:$0xff]
    %v997 = vld [vmem:[#allocation5 + $0xd0] sm:$0xff]
    %v998 = vld [vmem:[#allocation5 + $0xd8] sm:$0xff]
    %v999 = vld [vmem:[#allocation5 + $0xe0] sm:$0xff]
    %v1000 = vld [vmem:[#allocation5 + $0xe8] sm:$0xff]
    %v1001 = vld [vmem:[#allocation5 + $0xf0] sm:$0xff]
    %v1002 = vld [vmem:[#allocation5 + $0xf8] sm:$0xff]
    %v1003 = vld [vmem:[#allocation5 + $0x100] sm:$0xff]
    %v1004 = vld [vmem:[#allocation5 + $0x108] sm:$0xff]
    %v1005 = vld [vmem:[#allocation5 + $0x110] sm:$0xff]
    %v1006 = vld [vmem:[#allocation5 + $0x118] sm:$0xff]
    %v1007 = vld [vmem:[%s2] sm:$0xff]
    %v1008 = vld [vmem:[%s2 + $0x8] sm:$0xff]
    %v1009 = vld [vmem:[%s2 + $0x10] sm:$0xff]
    %v1010 = vld [vmem:[%s2 + $0x18] sm:$0xff]
    %v1011 = vld [vmem:[%s2 + $0x20] sm:$0xff]
    %v1012 = vld [vmem:[%s2 + $0x28] sm:$0xff]
    %v1013 = vld [vmem:[%s2 + $0x30] sm:$0xff]
    %v1014 = vld [vmem:[%s2 + $0x38] sm:$0xff]
    %v1015 = vld [vmem:[%s2 + $0x40] sm:$0xff]
    %v1016 = vld [vmem:[%s2 + $0x48] sm:$0xff]
    %v1017 = vld [vmem:[%s2 + $0x50] sm:$0xff]
    %v1018 = vld [vmem:[%s2 + $0x58] sm:$0xff]
    %v1019 = vld [vmem:[%s2 + $0x60] sm:$0xff]
    %v1020 = vld [vmem:[%s2 + $0x68] sm:$0xff]
    %v1021 = vld [vmem:[%s2 + $0x70] sm:$0xff]
    %v1022 = vld [vmem:[%s2 + $0x78] sm:$0xff]
    %v1023 = vld [vmem:[%s2 + $0x80] sm:$0xff]
    %v1024 = vld [vmem:[%s2 + $0x88] sm:$0xff]
    %v1025 = vld [vmem:[%s2 + $0x90] sm:$0xff]
    %v1026 = vld [vmem:[%s2 + $0x98] sm:$0xff]
    %v1027 = vld [vmem:[%s2 + $0xa0] sm:$0xff]
    %v1028 = vld [vmem:[%s2 + $0xa8] sm:$0xff]
    %v1029 = vld [vmem:[%s2 + $0xb0] sm:$0xff]
    %v1030 = vld [vmem:[%s2 + $0xb8] sm:$0xff]
    %v1031 = vld [vmem:[%s2 + $0xc0] sm:$0xff]
    %v1032 = vld [vmem:[%s2 + $0xc8] sm:$0xff]
    %v1033 = vld [vmem:[%s2 + $0xd0] sm:$0xff]
    %v1034 = vld [vmem:[%s2 + $0xd8] sm:$0xff]
    %v1035 = vld [vmem:[%s2 + $0xe0] sm:$0xff]
    %v1036 = vld [vmem:[%s2 + $0xe8] sm:$0xff]
    %v1037 = vld [vmem:[%s2 + $0xf0] sm:$0xff]
    %v1038 = vld [vmem:[%s2 + $0xf8] sm:$0xff]
    %v1039 = vld [vmem:[%s2 + $0x100] sm:$0xff]
    %v1040 = vld [vmem:[%s2 + $0x108] sm:$0xff]
    %v1041 = vld [vmem:[%s2 + $0x110] sm:$0xff]
    %v1042 = vld [vmem:[%s2 + $0x118] sm:$0xff]
    %v1043 = vld [vmem:[%s2 + $0x120] sm:$0xff]
    %v1044 = vld [vmem:[%s2 + $0x128] sm:$0xff]
    %v1045 = vld [vmem:[%s2 + $0x130] sm:$0xff]
    %v1046 = vld [vmem:[%s2 + $0x138] sm:$0xff]
    %v1047 = vld [vmem:[%s2 + $0x140] sm:$0xff]
    %v1048 = vld [vmem:[%s2 + $0x148] sm:$0xff]
    %v1049 = vld [vmem:[%s2 + $0x150] sm:$0xff]
    %v1050 = vld [vmem:[%s2 + $0x158] sm:$0xff]
    %v1051 = vld [vmem:[%s2 + $0x160] sm:$0xff]
    %v1052 = vld [vmem:[%s2 + $0x168] sm:$0xff]
    %v1053 = vld [vmem:[%s2 + $0x170] sm:$0xff]
    %v1054 = vld [vmem:[%s2 + $0x178] sm:$0xff]
    %v1055 = vld [vmem:[%s2 + $0x180] sm:$0xff]
    %v1056 = vld [vmem:[%s2 + $0x188] sm:$0xff]
    %v1057 = vld [vmem:[%s2 + $0x190] sm:$0xff]
    %v1058 = vld [vmem:[%s2 + $0x198] sm:$0xff]
    %v1059 = vld [vmem:[%s2 + $0x1a0] sm:$0xff]
    %v1060 = vld [vmem:[%s2 + $0x1a8] sm:$0xff]
    %v1061 = vld [vmem:[%s2 + $0x1b0] sm:$0xff]
    %v1062 = vld [vmem:[%s2 + $0x1b8] sm:$0xff]
    %v1063 = vld [vmem:[%s2 + $0x1c0] sm:$0xff]
    %v1064 = vld [vmem:[%s2 + $0x1c8] sm:$0xff]
    %v1065 = vld [vmem:[%s2 + $0x1d0] sm:$0xff]
    %v1066 = vld [vmem:[%s2 + $0x1d8] sm:$0xff]
    %v1067 = vld [vmem:[%s2 + $0x1e0] sm:$0xff]
    %v1068 = vld [vmem:[%s2 + $0x1e8] sm:$0xff]
    %v1069 = vld [vmem:[%s2 + $0x1f0] sm:$0xff]
    %v1070 = vld [vmem:[%s2 + $0x1f8] sm:$0xff]
    %v1071 = vld [vmem:[%s2 + $0x200] sm:$0xff]
    %v1072 = vld [vmem:[%s2 + $0x208] sm:$0xff]
    %v1073 = vld [vmem:[%s2 + $0x210] sm:$0xff]
    %v1074 = vld [vmem:[%s2 + $0x218] sm:$0xff]
    %v1075 = vld [vmem:[%s2 + $0x220] sm:$0xff]
    %v1076 = vld [vmem:[%s2 + $0x228] sm:$0xff]
    %v1077 = vld [vmem:[%s2 + $0x230] sm:$0xff]
    %v1078 = vld [vmem:[%s2 + $0x238] sm:$0xff]
    %v1079 = vld [vmem:[%s2 + $0x240] sm:$0xff]
    %v1080 = vld [vmem:[%s2 + $0x248] sm:$0xff]
    %v1081 = vld [vmem:[%s2 + $0x250] sm:$0xff]
    %v1082 = vld [vmem:[%s2 + $0x258] sm:$0xff]
    %v1083 = vld [vmem:[%s2 + $0x260] sm:$0xff]
    %v1084 = vld [vmem:[%s2 + $0x268] sm:$0xff]
    %v1085 = vld [vmem:[%s2 + $0x270] sm:$0xff]
    %v1086 = vld [vmem:[%s2 + $0x278] sm:$0xff]
    %v1087 = vld [vmem:[%s2 + $0x280] sm:$0xff]
    %v1088 = vld [vmem:[%s2 + $0x288] sm:$0xff]
    %v1089 = vld [vmem:[%s2 + $0x290] sm:$0xff]
    %v1090 = vld [vmem:[%s2 + $0x298] sm:$0xff]
    %v1091 = vld [vmem:[%s2 + $0x2a0] sm:$0xff]
    %v1092 = vld [vmem:[%s2 + $0x2a8] sm:$0xff]
    %v1093 = vld [vmem:[%s2 + $0x2b0] sm:$0xff]
    %v1094 = vld [vmem:[%s2 + $0x2b8] sm:$0xff]
    %v1095 = vld [vmem:[%s2 + $0x2c0] sm:$0xff]
    %v1096 = vld [vmem:[%s2 + $0x2c8] sm:$0xff]
    %v1097 = vld [vmem:[%s2 + $0x2d0] sm:$0xff]
    %v1098 = vld [vmem:[%s2 + $0x2d8] sm:$0xff]
    %v1099 = vld [vmem:[%s2 + $0x2e0] sm:$0xff]
    %v1100 = vld [vmem:[%s2 + $0x2e8] sm:$0xff]
    %v1101 = vld [vmem:[%s2 + $0x2f0] sm:$0xff]
    %v1102 = vld [vmem:[%s2 + $0x2f8] sm:$0xff]
    %v1103 = vld [vmem:[%s2 + $0x300] sm:$0xff]
    %v1104 = vld [vmem:[%s2 + $0x308] sm:$0xff]
    %v1105 = vld [vmem:[%s2 + $0x310] sm:$0xff]
    %v1106 = vld [vmem:[%s2 + $0x318] sm:$0xff]
    %v1107 = vld [vmem:[%s2 + $0x320] sm:$0xff]
    %v1108 = vld [vmem:[%s2 + $0x328] sm:$0xff]
    %v1109 = vld [vmem:[%s2 + $0x330] sm:$0xff]
    %v1110 = vld [vmem:[%s2 + $0x338] sm:$0xff]
    %v1111 = vld [vmem:[%s2 + $0x340] sm:$0xff]
    %v1112 = vld [vmem:[%s2 + $0x348] sm:$0xff]
    %v1113 = vld [vmem:[%s2 + $0x350] sm:$0xff]
    %v1114 = vld [vmem:[%s2 + $0x358] sm:$0xff]
    %v1115 = vld [vmem:[%s2 + $0x360] sm:$0xff]
    %v1116 = vld [vmem:[%s2 + $0x368] sm:$0xff]
    %v1117 = vld [vmem:[%s2 + $0x370] sm:$0xff]
    %v1118 = vld [vmem:[%s2 + $0x378] sm:$0xff]
    %v1119 = vld [vmem:[%s2 + $0x380] sm:$0xff]
    %v1120 = vld [vmem:[%s2 + $0x388] sm:$0xff]
    %v1121 = vld [vmem:[%s2 + $0x390] sm:$0xff]
    %v1122 = vld [vmem:[%s2 + $0x398] sm:$0xff]
    %v1123 = vld [vmem:[%s2 + $0x3a0] sm:$0xff]
    %v1124 = vld [vmem:[%s2 + $0x3a8] sm:$0xff]
    %v1125 = vld [vmem:[%s2 + $0x3b0] sm:$0xff]
    %v1126 = vld [vmem:[%s2 + $0x3b8] sm:$0xff]
    %v1127 = vld [vmem:[%s2 + $0x3c0] sm:$0xff]
    %v1128 = vld [vmem:[%s2 + $0x3c8] sm:$0xff]
    %v1129 = vld [vmem:[%s2 + $0x3d0] sm:$0xff]
    %v1130 = vld [vmem:[%s2 + $0x3d8] sm:$0xff]
    %v1131 = vld [vmem:[%s2 + $0x3e0] sm:$0xff]
    %v1132 = vld [vmem:[%s2 + $0x3e8] sm:$0xff]
    %v1133 = vld [vmem:[%s2 + $0x3f0] sm:$0xff]
    %v1134 = vld [vmem:[%s2 + $0x3f8] sm:$0xff]
    %v1135 = vld [vmem:[%s2 + $0x400] sm:$0xff]
    %v1136 = vld [vmem:[%s2 + $0x408] sm:$0xff]
    %v1137 = vld [vmem:[%s2 + $0x410] sm:$0xff]
    %v1138 = vld [vmem:[%s2 + $0x418] sm:$0xff]
    %v1139 = vld [vmem:[%s2 + $0x420] sm:$0xff]
    %v1140 = vld [vmem:[%s2 + $0x428] sm:$0xff]
    %v1141 = vld [vmem:[%s2 + $0x430] sm:$0xff]
    %v1142 = vld [vmem:[%s2 + $0x438] sm:$0xff]
    %v1143 = vld [vmem:[%s2 + $0x440] sm:$0xff]
    %v1144 = vld [vmem:[%s2 + $0x448] sm:$0xff]
    %v1145 = vld [vmem:[%s2 + $0x450] sm:$0xff]
    %v1146 = vld [vmem:[%s2 + $0x458] sm:$0xff]
    %v1147 = vld [vmem:[%s2 + $0x460] sm:$0xff]
    %v1148 = vld [vmem:[%s2 + $0x468] sm:$0xff]
    %v1149 = vld [vmem:[%s2 + $0x470] sm:$0xff]
    %v1150 = vld [vmem:[%s2 + $0x478] sm:$0xff]
    %v1151 = vperm.slane %v33, 0
    %1152 = vmatpush.msra.mxu0 %v1022
    %1153 = vmatpush.msra.mxu0 %v1021
    %1154 = vmatpush.msra.mxu0 %v1020
    %1155 = vmatpush.msra.mxu0 %v1019
    %1156 = vmatpush.msra.mxu0 %v1018
    %1157 = vmatpush.msra.mxu0 %v1017
    %1158 = vmatpush.msra.mxu0 %v1016
    %1159 = vmatpush.msra.mxu0 %v1015
    %1160 = vmatpush.msra.mxu0 %v1014
    %1161 = vmatpush.msra.mxu0 %v1013
    %1162 = vmatpush.msra.mxu0 %v1012
    %1163 = vmatpush.msra.mxu0 %v1011
    %1164 = vmatpush.msra.mxu0 %v1010
    %1165 = vmatpush.msra.mxu0 %v1009
    %1166 = vmatpush.msra.mxu0 %v1008
    %1167 = vmatpush.msra.mxu0 %v1007
    %1168 = vmatmul.f32.gmra.mxu0 %v971
    %v1169 = vpop.f32.mrf.mxu0
    %v1170 = vadd.f32 %v1151, %v1169
    %1171 = vmatmul.f32.gmra.mxu0 %v980
    %v1172 = vpop.f32.mrf.mxu0
    %v1173 = vadd.f32 %v1151, %v1172
    %1174 = vmatmul.f32.gmra.mxu0 %v989
    %v1175 = vpop.f32.mrf.mxu0
    %v1176 = vadd.f32 %v1151, %v1175
    %1177 = vmatmul.f32.gmra.mxu0 %v998
    %v1178 = vpop.f32.mrf.mxu0
    %v1179 = vadd.f32 %v1151, %v1178
    %1180 = vdwg.mxu0
    %1181 = vmatpush.msra.mxu0 %v1038
    %1182 = vmatpush.msra.mxu0 %v1037
    %1183 = vmatpush.msra.mxu0 %v1036
    %1184 = vmatpush.msra.mxu0 %v1035
    %1185 = vmatpush.msra.mxu0 %v1034
    %1186 = vmatpush.msra.mxu0 %v1033
    %1187 = vmatpush.msra.mxu0 %v1032
    %1188 = vmatpush.msra.mxu0 %v1031
    %1189 = vmatpush.msra.mxu0 %v1030
    %1190 = vmatpush.msra.mxu0 %v1029
    %1191 = vmatpush.msra.mxu0 %v1028
    %1192 = vmatpush.msra.mxu0 %v1027
    %1193 = vmatpush.msra.mxu0 %v1026
    %1194 = vmatpush.msra.mxu0 %v1025
    %1195 = vmatpush.msra.mxu0 %v1024
    %1196 = vmatpush.msra.mxu0 %v1023
    %1197 = vmatmul.f32.gmra.mxu0 %v972
    %v1198 = vpop.f32.mrf.mxu0
    %v1199 = vadd.f32 %v1170, %v1198
    %1200 = vmatmul.f32.gmra.mxu0 %v981
    %v1201 = vpop.f32.mrf.mxu0
    %v1202 = vadd.f32 %v1173, %v1201
    %1203 = vmatmul.f32.gmra.mxu0 %v990
    %v1204 = vpop.f32.mrf.mxu0
    %v1205 = vadd.f32 %v1176, %v1204
    %1206 = vmatmul.f32.gmra.mxu0 %v999
    %v1207 = vpop.f32.mrf.mxu0
    %v1208 = vadd.f32 %v1179, %v1207
    %1209 = vdwg.mxu0
    %1210 = vmatpush.msra.mxu0 %v1054
    %1211 = vmatpush.msra.mxu0 %v1053
    %1212 = vmatpush.msra.mxu0 %v1052
    %1213 = vmatpush.msra.mxu0 %v1051
    %1214 = vmatpush.msra.mxu0 %v1050
    %1215 = vmatpush.msra.mxu0 %v1049
    %1216 = vmatpush.msra.mxu0 %v1048
    %1217 = vmatpush.msra.mxu0 %v1047
    %1218 = vmatpush.msra.mxu0 %v1046
    %1219 = vmatpush.msra.mxu0 %v1045
    %1220 = vmatpush.msra.mxu0 %v1044
    %1221 = vmatpush.msra.mxu0 %v1043
    %1222 = vmatpush.msra.mxu0 %v1042
    %1223 = vmatpush.msra.mxu0 %v1041
    %1224 = vmatpush.msra.mxu0 %v1040
    %1225 = vmatpush.msra.mxu0 %v1039
    %1226 = vmatmul.f32.gmra.mxu0 %v973
    %v1227 = vpop.f32.mrf.mxu0
    %v1228 = vadd.f32 %v1199, %v1227
    %1229 = vmatmul.f32.gmra.mxu0 %v982
    %v1230 = vpop.f32.mrf.mxu0
    %v1231 = vadd.f32 %v1202, %v1230
    %1232 = vmatmul.f32.gmra.mxu0 %v991
    %v1233 = vpop.f32.mrf.mxu0
    %v1234 = vadd.f32 %v1205, %v1233
    %1235 = vmatmul.f32.gmra.mxu0 %v1000
    %v1236 = vpop.f32.mrf.mxu0
    %v1237 = vadd.f32 %v1208, %v1236
    %1238 = vdwg.mxu0
    %1239 = vmatpush.msra.mxu0 %v1070
    %1240 = vmatpush.msra.mxu0 %v1069
    %1241 = vmatpush.msra.mxu0 %v1068
    %1242 = vmatpush.msra.mxu0 %v1067
    %1243 = vmatpush.msra.mxu0 %v1066
    %1244 = vmatpush.msra.mxu0 %v1065
    %1245 = vmatpush.msra.mxu0 %v1064
    %1246 = vmatpush.msra.mxu0 %v1063
    %1247 = vmatpush.msra.mxu0 %v1062
    %1248 = vmatpush.msra.mxu0 %v1061
    %1249 = vmatpush.msra.mxu0 %v1060
    %1250 = vmatpush.msra.mxu0 %v1059
    %1251 = vmatpush.msra.mxu0 %v1058
    %1252 = vmatpush.msra.mxu0 %v1057
    %1253 = vmatpush.msra.mxu0 %v1056
    %1254 = vmatpush.msra.mxu0 %v1055
    %1255 = vmatmul.f32.gmra.mxu0 %v974
    %v1256 = vpop.f32.mrf.mxu0
    %v1257 = vadd.f32 %v1228, %v1256
    %1258 = vmatmul.f32.gmra.mxu0 %v983
    %v1259 = vpop.f32.mrf.mxu0
    %v1260 = vadd.f32 %v1231, %v1259
    %1261 = vmatmul.f32.gmra.mxu0 %v992
    %v1262 = vpop.f32.mrf.mxu0
    %v1263 = vadd.f32 %v1234, %v1262
    %1264 = vmatmul.f32.gmra.mxu0 %v1001
    %v1265 = vpop.f32.mrf.mxu0
    %v1266 = vadd.f32 %v1237, %v1265
    %1267 = vdwg.mxu0
    %1268 = vmatpush.msra.mxu0 %v1086
    %1269 = vmatpush.msra.mxu0 %v1085
    %1270 = vmatpush.msra.mxu0 %v1084
    %1271 = vmatpush.msra.mxu0 %v1083
    %1272 = vmatpush.msra.mxu0 %v1082
    %1273 = vmatpush.msra.mxu0 %v1081
    %1274 = vmatpush.msra.mxu0 %v1080
    %1275 = vmatpush.msra.mxu0 %v1079
    %1276 = vmatpush.msra.mxu0 %v1078
    %1277 = vmatpush.msra.mxu0 %v1077
    %1278 = vmatpush.msra.mxu0 %v1076
    %1279 = vmatpush.msra.mxu0 %v1075
    %1280 = vmatpush.msra.mxu0 %v1074
    %1281 = vmatpush.msra.mxu0 %v1073
    %1282 = vmatpush.msra.mxu0 %v1072
    %1283 = vmatpush.msra.mxu0 %v1071
    %1284 = vmatmul.f32.gmra.mxu0 %v975
    %v1285 = vpop.f32.mrf.mxu0
    %v1286 = vadd.f32 %v1257, %v1285
    %1287 = vmatmul.f32.gmra.mxu0 %v984
    %v1288 = vpop.f32.mrf.mxu0
    %v1289 = vadd.f32 %v1260, %v1288
    %1290 = vmatmul.f32.gmra.mxu0 %v993
    %v1291 = vpop.f32.mrf.mxu0
    %v1292 = vadd.f32 %v1263, %v1291
    %1293 = vmatmul.f32.gmra.mxu0 %v1002
    %v1294 = vpop.f32.mrf.mxu0
    %v1295 = vadd.f32 %v1266, %v1294
    %1296 = vdwg.mxu0
    %1297 = vmatpush.msra.mxu0 %v1102
    %1298 = vmatpush.msra.mxu0 %v1101
    %1299 = vmatpush.msra.mxu0 %v1100
    %1300 = vmatpush.msra.mxu0 %v1099
    %1301 = vmatpush.msra.mxu0 %v1098
    %1302 = vmatpush.msra.mxu0 %v1097
    %1303 = vmatpush.msra.mxu0 %v1096
    %1304 = vmatpush.msra.mxu0 %v1095
    %1305 = vmatpush.msra.mxu0 %v1094
    %1306 = vmatpush.msra.mxu0 %v1093
    %1307 = vmatpush.msra.mxu0 %v1092
    %1308 = vmatpush.msra.mxu0 %v1091
    %1309 = vmatpush.msra.mxu0 %v1090
    %1310 = vmatpush.msra.mxu0 %v1089
    %1311 = vmatpush.msra.mxu0 %v1088
    %1312 = vmatpush.msra.mxu0 %v1087
    %1313 = vmatmul.f32.gmra.mxu0 %v976
    %v1314 = vpop.f32.mrf.mxu0
    %v1315 = vadd.f32 %v1286, %v1314
    %1316 = vmatmul.f32.gmra.mxu0 %v985
    %v1317 = vpop.f32.mrf.mxu0
    %v1318 = vadd.f32 %v1289, %v1317
    %1319 = vmatmul.f32.gmra.mxu0 %v994
    %v1320 = vpop.f32.mrf.mxu0
    %v1321 = vadd.f32 %v1292, %v1320
    %1322 = vmatmul.f32.gmra.mxu0 %v1003
    %v1323 = vpop.f32.mrf.mxu0
    %v1324 = vadd.f32 %v1295, %v1323
    %1325 = vdwg.mxu0
    %1326 = vmatpush.msra.mxu0 %v1118
    %1327 = vmatpush.msra.mxu0 %v1117
    %1328 = vmatpush.msra.mxu0 %v1116
    %1329 = vmatpush.msra.mxu0 %v1115
    %1330 = vmatpush.msra.mxu0 %v1114
    %1331 = vmatpush.msra.mxu0 %v1113
    %1332 = vmatpush.msra.mxu0 %v1112
    %1333 = vmatpush.msra.mxu0 %v1111
    %1334 = vmatpush.msra.mxu0 %v1110
    %1335 = vmatpush.msra.mxu0 %v1109
    %1336 = vmatpush.msra.mxu0 %v1108
    %1337 = vmatpush.msra.mxu0 %v1107
    %1338 = vmatpush.msra.mxu0 %v1106
    %1339 = vmatpush.msra.mxu0 %v1105
    %1340 = vmatpush.msra.mxu0 %v1104
    %1341 = vmatpush.msra.mxu0 %v1103
    %1342 = vmatmul.f32.gmra.mxu0 %v977
    %v1343 = vpop.f32.mrf.mxu0
    %v1344 = vadd.f32 %v1315, %v1343
    %1345 = vmatmul.f32.gmra.mxu0 %v986
    %v1346 = vpop.f32.mrf.mxu0
    %v1347 = vadd.f32 %v1318, %v1346
    %1348 = vmatmul.f32.gmra.mxu0 %v995
    %v1349 = vpop.f32.mrf.mxu0
    %v1350 = vadd.f32 %v1321, %v1349
    %1351 = vmatmul.f32.gmra.mxu0 %v1004
    %v1352 = vpop.f32.mrf.mxu0
    %v1353 = vadd.f32 %v1324, %v1352
    %1354 = vdwg.mxu0
    %1355 = vmatpush.msra.mxu0 %v1134
    %1356 = vmatpush.msra.mxu0 %v1133
    %1357 = vmatpush.msra.mxu0 %v1132
    %1358 = vmatpush.msra.mxu0 %v1131
    %1359 = vmatpush.msra.mxu0 %v1130
    %1360 = vmatpush.msra.mxu0 %v1129
    %1361 = vmatpush.msra.mxu0 %v1128
    %1362 = vmatpush.msra.mxu0 %v1127
    %1363 = vmatpush.msra.mxu0 %v1126
    %1364 = vmatpush.msra.mxu0 %v1125
    %1365 = vmatpush.msra.mxu0 %v1124
    %1366 = vmatpush.msra.mxu0 %v1123
    %1367 = vmatpush.msra.mxu0 %v1122
    %1368 = vmatpush.msra.mxu0 %v1121
    %1369 = vmatpush.msra.mxu0 %v1120
    %1370 = vmatpush.msra.mxu0 %v1119
    %1371 = vmatmul.f32.gmra.mxu0 %v978
    %v1372 = vpop.f32.mrf.mxu0
    %v1373 = vadd.f32 %v1344, %v1372
    %1374 = vmatmul.f32.gmra.mxu0 %v987
    %v1375 = vpop.f32.mrf.mxu0
    %v1376 = vadd.f32 %v1347, %v1375
    %1377 = vmatmul.f32.gmra.mxu0 %v996
    %v1378 = vpop.f32.mrf.mxu0
    %v1379 = vadd.f32 %v1350, %v1378
    %1380 = vmatmul.f32.gmra.mxu0 %v1005
    %v1381 = vpop.f32.mrf.mxu0
    %v1382 = vadd.f32 %v1353, %v1381
    %1383 = vdwg.mxu0
    %1384 = vmatpush.msra.mxu0 %v1150
    %1385 = vmatpush.msra.mxu0 %v1149
    %1386 = vmatpush.msra.mxu0 %v1148
    %1387 = vmatpush.msra.mxu0 %v1147
    %1388 = vmatpush.msra.mxu0 %v1146
    %1389 = vmatpush.msra.mxu0 %v1145
    %1390 = vmatpush.msra.mxu0 %v1144
    %1391 = vmatpush.msra.mxu0 %v1143
    %1392 = vmatpush.msra.mxu0 %v1142
    %1393 = vmatpush.msra.mxu0 %v1141
    %1394 = vmatpush.msra.mxu0 %v1140
    %1395 = vmatpush.msra.mxu0 %v1139
    %1396 = vmatpush.msra.mxu0 %v1138
    %1397 = vmatpush.msra.mxu0 %v1137
    %1398 = vmatpush.msra.mxu0 %v1136
    %1399 = vmatpush.msra.mxu0 %v1135
    %1400 = vmatmul.f32.gmra.mxu0 %v979
    %v1401 = vpop.f32.mrf.mxu0
    %v1402 = vadd.f32 %v1373, %v1401
    %1403 = vmatmul.f32.gmra.mxu0 %v988
    %v1404 = vpop.f32.mrf.mxu0
    %v1405 = vadd.f32 %v1376, %v1404
    %1406 = vmatmul.f32.gmra.mxu0 %v997
    %v1407 = vpop.f32.mrf.mxu0
    %v1408 = vadd.f32 %v1379, %v1407
    %1409 = vmatmul.f32.gmra.mxu0 %v1006
    %v1410 = vpop.f32.mrf.mxu0
    %v1411 = vadd.f32 %v1382, %v1410
    %1412 = vdwg.mxu0
    %v1413 = vmax.f32 %v1402, 0.0
    %v1414 = vmax.f32 %v1405, 0.0
    %v1415 = vmax.f32 %v1408, 0.0
    %v1416 = vmax.f32 %v1411, 0.0
    %1417 = vst [vmem:[#allocation6] sm:$0xff] %v1413
    %1418 = vst [vmem:[#allocation6 + $0x8] sm:$0xff] %v1414
    %1419 = vst [vmem:[#allocation6 + $0x10] sm:$0xff] %v1415
    %1420 = vst [vmem:[#allocation6 + $0x18] sm:$0xff] %v1416
    %v1421 = vld [vmem:[#allocation6] sm:$0x1]
    %v1422 = vld [vmem:[#allocation6 + $0x1] sm:$0x1]
    %v1423 = vmax.f32 %v1421, %v1422
    %v1424 = vld [vmem:[#allocation6 + $0x4] sm:$0x1]
    %v1425 = vld [vmem:[#allocation6 + $0x5] sm:$0x1]
    %v1426 = vmax.f32 %v1424, %v1425
    %v1427 = vmax.f32 %v1423, %v1426
    %v1428 = vmul.f32 %v1427, %v34
    %v1429 = vadd.f32 %v1428, %v35
    %1430 = vst [vmem:[#allocation7] sm:$0x1] %v1429
    %v1431 = vld [vmem:[#allocation6 + $0x2] sm:$0x1]
    %v1432 = vld [vmem:[#allocation6 + $0x3] sm:$0x1]
    %v1433 = vmax.f32 %v1431, %v1432
    %v1434 = vld [vmem:[#allocation6 + $0x6] sm:$0x1]
    %v1435 = vld [vmem:[#allocation6 + $0x7] sm:$0x1]
    %v1436 = vmax.f32 %v1434, %v1435
    %v1437 = vmax.f32 %v1433, %v1436
    %v1438 = vmul.f32 %v1437, %v34
    %v1439 = vadd.f32 %v1438, %v35
    %1440 = vst [vmem:[#allocation7 + $0x2] sm:$0x1] %v1439
    %v1441 = vld [vmem:[#allocation6 + $0x8] sm:$0x1]
    %v1442 = vld [vmem:[#allocation6 + $0x9] sm:$0x1]
    %v1443 = vmax.f32 %v1441, %v1442
    %v1444 = vld [vmem:[#allocation6 + $0xc] sm:$0x1]
    %v1445 = vld [vmem:[#allocation6 + $0xd] sm:$0x1]
    %v1446 = vmax.f32 %v1444, %v1445
    %v1447 = vmax.f32 %v1443, %v1446
    %v1448 = vmul.f32 %v1447, %v34
    %v1449 = vadd.f32 %v1448, %v35
    %1450 = vst [vmem:[#allocation7 + $0x4] sm:$0x1] %v1449
    %v1451 = vld [vmem:[#allocation6 + $0xa] sm:$0x1]
    %v1452 = vld [vmem:[#allocation6 + $0xb] sm:$0x1]
    %v1453 = vmax.f32 %v1451, %v1452
    %v1454 = vld [vmem:[#allocation6 + $0xe] sm:$0x1]
    %v1455 = vld [vmem:[#allocation6 + $0xf] sm:$0x1]
    %v1456 = vmax.f32 %v1454, %v1455
    %v1457 = vmax.f32 %v1453, %v1456
    %v1458 = vmul.f32 %v1457, %v34
    %v1459 = vadd.f32 %v1458, %v35
    %1460 = vst [vmem:[#allocation7 + $0x6] sm:$0x1] %v1459
    %v1461 = vld [vmem:[#allocation6 + $0x10] sm:$0x1]
    %v1462 = vld [vmem:[#allocation6 + $0x11] sm:$0x1]
    %v1463 = vmax.f32 %v1461, %v1462
    %v1464 = vld [vmem:[#allocation6 + $0x14] sm:$0x1]
    %v1465 = vld [vmem:[#allocation6 + $0x15] sm:$0x1]
    %v1466 = vmax.f32 %v1464, %v1465
    %v1467 = vmax.f32 %v1463, %v1466
    %v1468 = vmul.f32 %v1467, %v34
    %v1469 = vadd.f32 %v1468, %v35
    %1470 = vst [vmem:[#allocation7 + $0x1] sm:$0x1] %v1469
    %v1471 = vld [vmem:[#allocation6 + $0x12] sm:$0x1]
    %v1472 = vld [vmem:[#allocation6 + $0x13] sm:$0x1]
    %v1473 = vmax.f32 %v1471, %v1472
    %v1474 = vld [vmem:[#allocation6 + $0x16] sm:$0x1]
    %v1475 = vld [vmem:[#allocation6 + $0x17] sm:$0x1]
    %v1476 = vmax.f32 %v1474, %v1475
    %v1477 = vmax.f32 %v1473, %v1476
    %v1478 = vmul.f32 %v1477, %v34
    %v1479 = vadd.f32 %v1478, %v35
    %1480 = vst [vmem:[#allocation7 + $0x3] sm:$0x1] %v1479
    %v1481 = vld [vmem:[#allocation6 + $0x18] sm:$0x1]
    %v1482 = vld [vmem:[#allocation6 + $0x19] sm:$0x1]
    %v1483 = vmax.f32 %v1481, %v1482
    %v1484 = vld [vmem:[#allocation6 + $0x1c] sm:$0x1]
    %v1485 = vld [vmem:[#allocation6 + $0x1d] sm:$0x1]
    %v1486 = vmax.f32 %v1484, %v1485
    %v1487 = vmax.f32 %v1483, %v1486
    %v1488 = vmul.f32 %v1487, %v34
    %v1489 = vadd.f32 %v1488, %v35
    %1490 = vst [vmem:[#allocation7 + $0x5] sm:$0x1] %v1489
    %v1491 = vld [vmem:[#allocation6 + $0x1a] sm:$0x1]
    %v1492 = vld [vmem:[#allocation6 + $0x1b] sm:$0x1]
    %v1493 = vmax.f32 %v1491, %v1492
    %v1494 = vld [vmem:[#allocation6 + $0x1e] sm:$0x1]
    %v1495 = vld [vmem:[#allocation6 + $0x1f] sm:$0x1]
    %v1496 = vmax.f32 %v1494, %v1495
    %v1497 = vmax.f32 %v1493, %v1496
    %v1498 = vmul.f32 %v1497, %v34
    %v1499 = vadd.f32 %v1498, %v35
    %1500 = vst [vmem:[#allocation7 + $0x7] sm:$0x1] %v1499
    %v1501 = vld [vmem:[#allocation7] sm:$0xff]
    %v1502 = vld [vmem:[%s3] sm:$0xff]
    %v1503 = vld [vmem:[%s3 + $0x8] sm:$0xff]
    %v1504 = vld [vmem:[%s3 + $0x10] sm:$0xff]
    %v1505 = vld [vmem:[%s3 + $0x18] sm:$0xff]
    %v1506 = vld [vmem:[%s3 + $0x20] sm:$0xff]
    %v1507 = vld [vmem:[%s3 + $0x28] sm:$0xff]
    %v1508 = vld [vmem:[%s3 + $0x30] sm:$0xff]
    %v1509 = vld [vmem:[%s3 + $0x38] sm:$0xff]
    %v1510 = vld [vmem:[%s3 + $0x40] sm:$0xff]
    %v1511 = vld [vmem:[%s3 + $0x48] sm:$0xff]
    %v1512 = vld [vmem:[%s3 + $0x50] sm:$0xff]
    %v1513 = vld [vmem:[%s3 + $0x58] sm:$0xff]
    %v1514 = vld [vmem:[%s3 + $0x60] sm:$0xff]
    %v1515 = vld [vmem:[%s3 + $0x68] sm:$0xff]
    %v1516 = vld [vmem:[%s3 + $0x70] sm:$0xff]
    %v1517 = vld [vmem:[%s3 + $0x78] sm:$0xff]
    %v1518 = vld [vmem:[%s3 + $0x80] sm:$0xff]
    %v1519 = vld [vmem:[%s3 + $0x88] sm:$0xff]
    %v1520 = vld [vmem:[%s3 + $0x90] sm:$0xff]
    %v1521 = vld [vmem:[%s3 + $0x98] sm:$0xff]
    %v1522 = vld [vmem:[%s3 + $0xa0] sm:$0xff]
    %v1523 = vld [vmem:[%s3 + $0xa8] sm:$0xff]
    %v1524 = vld [vmem:[%s3 + $0xb0] sm:$0xff]
    %v1525 = vld [vmem:[%s3 + $0xb8] sm:$0xff]
    %v1526 = vld [vmem:[%s3 + $0xc0] sm:$0xff]
    %v1527 = vld [vmem:[%s3 + $0xc8] sm:$0xff]
    %v1528 = vld [vmem:[%s3 + $0xd0] sm:$0xff]
    %v1529 = vld [vmem:[%s3 + $0xd8] sm:$0xff]
    %v1530 = vld [vmem:[%s3 + $0xe0] sm:$0xff]
    %v1531 = vld [vmem:[%s3 + $0xe8] sm:$0xff]
    %v1532 = vld [vmem:[%s3 + $0xf0] sm:$0xff]
    %v1533 = vld [vmem:[%s3 + $0xf8] sm:$0xff]
    %v1534 = vld [vmem:[%s3 + $0x100] sm:$0xff]
    %v1535 = vld [vmem:[%s3 + $0x108] sm:$0xff]
    %v1536 = vld [vmem:[%s3 + $0x110] sm:$0xff]
    %v1537 = vld [vmem:[%s3 + $0x118] sm:$0xff]
    %v1538 = vld [vmem:[%s3 + $0x120] sm:$0xff]
    %v1539 = vld [vmem:[%s3 + $0x128] sm:$0xff]
    %v1540 = vld [vmem:[%s3 + $0x130] sm:$0xff]
    %v1541 = vld [vmem:[%s3 + $0x138] sm:$0xff]
    %v1542 = vld [vmem:[%s3 + $0x140] sm:$0xff]
    %v1543 = vld [vmem:[%s3 + $0x148] sm:$0xff]
    %v1544 = vld [vmem:[%s3 + $0x150] sm:$0xff]
    %v1545 = vld [vmem:[%s3 + $0x158] sm:$0xff]
    %v1546 = vld [vmem:[%s3 + $0x160] sm:$0xff]
    %v1547 = vld [vmem:[%s3 + $0x168] sm:$0xff]
    %v1548 = vld [vmem:[%s3 + $0x170] sm:$0xff]
    %v1549 = vld [vmem:[%s3 + $0x178] sm:$0xff]
    %v1550 = vld [vmem:[%s3 + $0x180] sm:$0xff]
    %v1551 = vld [vmem:[%s3 + $0x188] sm:$0xff]
    %v1552 = vld [vmem:[%s3 + $0x190] sm:$0xff]
    %v1553 = vld [vmem:[%s3 + $0x198] sm:$0xff]
    %v1554 = vld [vmem:[%s3 + $0x1a0] sm:$0xff]
    %v1555 = vld [vmem:[%s3 + $0x1a8] sm:$0xff]
    %v1556 = vld [vmem:[%s3 + $0x1b0] sm:$0xff]
    %v1557 = vld [vmem:[%s3 + $0x1b8] sm:$0xff]
    %v1558 = vld [vmem:[%s3 + $0x1c0] sm:$0xff]
    %v1559 = vld [vmem:[%s3 + $0x1c8] sm:$0xff]
    %v1560 = vld [vmem:[%s3 + $0x1d0] sm:$0xff]
    %v1561 = vld [vmem:[%s3 + $0x1d8] sm:$0xff]
    %v1562 = vld [vmem:[%s3 + $0x1e0] sm:$0xff]
    %v1563 = vld [vmem:[%s3 + $0x1e8] sm:$0xff]
    %v1564 = vld [vmem:[%s3 + $0x1f0] sm:$0xff]
    %v1565 = vld [vmem:[%s3 + $0x1f8] sm:$0xff]
    %v1566 = vperm.slane %v36, 0
    %1568 = vst [vmem:[#allocation1] ss:$4 sm:$0xff] %v1501
    %v1569 = vld.sshfl [vmem:[#allocation1] sm:$0xff pattern:$0x73625140]
    %v1570 = vld.sshfl [vmem:[#allocation1 + $0x8] sm:$0xff pattern:$0x73625140]
    %v1571 = vld.sshfl [vmem:[#allocation1 + $0x10] sm:$0xff pattern:$0x73625140]
    %v1572 = vld.sshfl [vmem:[#allocation1 + $0x18] sm:$0xff pattern:$0x73625140]
    %1577 = vmatpush.msra.mxu0 %v1517
    %1578 = vmatpush.msra.mxu0 %v1516
    %1579 = vmatpush.msra.mxu0 %v1515
    %1580 = vmatpush.msra.mxu0 %v1514
    %1581 = vmatpush.msra.mxu0 %v1513
    %1582 = vmatpush.msra.mxu0 %v1512
    %1583 = vmatpush.msra.mxu0 %v1511
    %1584 = vmatpush.msra.mxu0 %v1510
    %1585 = vmatpush.msra.mxu0 %v1509
    %1586 = vmatpush.msra.mxu0 %v1508
    %1587 = vmatpush.msra.mxu0 %v1507
    %1588 = vmatpush.msra.mxu0 %v1506
    %1589 = vmatpush.msra.mxu0 %v1505
    %1590 = vmatpush.msra.mxu0 %v1504
    %1591 = vmatpush.msra.mxu0 %v1503
    %1592 = vmatpush.msra.mxu0 %v1502
    %1593 = vmatmul.f32.gmra.mxu0 %v1569
    %v1594 = vpop.f32.mrf.mxu0
    %v1595 = vadd.f32 %v1566, %v1594
    %1596 = vdwg.mxu0
    %1597 = vmatpush.msra.mxu0 %v1533
    %1598 = vmatpush.msra.mxu0 %v1532
    %1599 = vmatpush.msra.mxu0 %v1531
    %1600 = vmatpush.msra.mxu0 %v1530
    %1601 = vmatpush.msra.mxu0 %v1529
    %1602 = vmatpush.msra.mxu0 %v1528
    %1603 = vmatpush.msra.mxu0 %v1527
    %1604 = vmatpush.msra.mxu0 %v1526
    %1605 = vmatpush.msra.mxu0 %v1525
    %1606 = vmatpush.msra.mxu0 %v1524
    %1607 = vmatpush.msra.mxu0 %v1523
    %1608 = vmatpush.msra.mxu0 %v1522
    %1609 = vmatpush.msra.mxu0 %v1521
    %1610 = vmatpush.msra.mxu0 %v1520
    %1611 = vmatpush.msra.mxu0 %v1519
    %1612 = vmatpush.msra.mxu0 %v1518
    %1613 = vmatmul.f32.gmra.mxu0 %v1570
    %v1614 = vpop.f32.mrf.mxu0
    %v1615 = vadd.f32 %v1595, %v1614
    %1616 = vdwg.mxu0
    %1617 = vmatpush.msra.mxu0 %v1549
    %1618 = vmatpush.msra.mxu0 %v1548
    %1619 = vmatpush.msra.mxu0 %v1547
    %1620 = vmatpush.msra.mxu0 %v1546
    %1621 = vmatpush.msra.mxu0 %v1545
    %1622 = vmatpush.msra.mxu0 %v1544
    %1623 = vmatpush.msra.mxu0 %v1543
    %1624 = vmatpush.msra.mxu0 %v1542
    %1625 = vmatpush.msra.mxu0 %v1541
    %1626 = vmatpush.msra.mxu0 %v1540
    %1627 = vmatpush.msra.mxu0 %v1539
    %1628 = vmatpush.msra.mxu0 %v1538
    %1629 = vmatpush.msra.mxu0 %v1537
    %1630 = vmatpush.msra.mxu0 %v1536
    %1631 = vmatpush.msra.mxu0 %v1535
    %1632 = vmatpush.msra.mxu0 %v1534
    %1633 = vmatmul.f32.gmra.mxu0 %v1571
    %v1634 = vpop.f32.mrf.mxu0
    %v1635 = vadd.f32 %v1615, %v1634
    %1636 = vdwg.mxu0
    %1637 = vmatpush.msra.mxu0 %v1565
    %1638 = vmatpush.msra.mxu0 %v1564
    %1639 = vmatpush.msra.mxu0 %v1563
    %1640 = vmatpush.msra.mxu0 %v1562
    %1641 = vmatpush.msra.mxu0 %v1561
    %1642 = vmatpush.msra.mxu0 %v1560
    %1643 = vmatpush.msra.mxu0 %v1559
    %1644 = vmatpush.msra.mxu0 %v1558
    %1645 = vmatpush.msra.mxu0 %v1557
    %1646 = vmatpush.msra.mxu0 %v1556
    %1647 = vmatpush.msra.mxu0 %v1555
    %1648 = vmatpush.msra.mxu0 %v1554
    %1649 = vmatpush.msra.mxu0 %v1553
    %1650 = vmatpush.msra.mxu0 %v1552
    %1651 = vmatpush.msra.mxu0 %v1551
    %1652 = vmatpush.msra.mxu0 %v1550
    %1653 = vmatmul.f32.gmra.mxu0 %v1572
    %v1654 = vpop.f32.mrf.mxu0
    %v1655 = vadd.f32 %v1635, %v1654
    %1656 = vdwg.mxu0
    %v1657 = vmax.f32 %v1655, 0.0
    %v1658 = vperm.slane %v37, 0
    %v1659 = vmul.f32 %v1657, %v1658
    %v1660 = vperm.slane %v38, 0
    %v1661 = vadd.f32 %v1659, %v1660
    %v1662 = vld [vmem:[%s4] sm:$0xff]
    %v1663 = vld [vmem:[%s4 + $0x8] sm:$0xff]
    %v1664 = vld [vmem:[%s4 + $0x10] sm:$0xff]
    %v1665 = vld [vmem:[%s4 + $0x18] sm:$0xff]
    %v1666 = vld [vmem:[%s4 + $0x20] sm:$0xff]
    %v1667 = vld [vmem:[%s4 + $0x28] sm:$0xff]
    %v1668 = vld [vmem:[%s4 + $0x30] sm:$0xff]
    %v1669 = vld [vmem:[%s4 + $0x38] sm:$0xff]
    %v1670 = vld [vmem:[%s4 + $0x40] sm:$0xff]
    %v1671 = vld [vmem:[%s4 + $0x48] sm:$0xff]
    %v1672 = vld [vmem:[%s4 + $0x50] sm:$0xff]
    %v1673 = vld [vmem:[%s4 + $0x58] sm:$0xff]
    %v1674 = vld [vmem:[%s4 + $0x60] sm:$0xff]
    %v1675 = vld [vmem:[%s4 + $0x68] sm:$0xff]
    %v1676 = vld [vmem:[%s4 + $0x70] sm:$0xff]
    %v1677 = vld [vmem:[%s4 + $0x78] sm:$0xff]
    %v1678 = vperm.slane %v39, 0
    %1679 = vmatpush.msra.mxu0 %v1677
    %1680 = vmatpush.msra.mxu0 %v1676
    %1681 = vmatpush.msra.mxu0 %v1675
    %1682 = vmatpush.msra.mxu0 %v1674
    %1683 = vmatpush.msra.mxu0 %v1673
    %1684 = vmatpush.msra.mxu0 %v1672
    %1685 = vmatpush.msra.mxu0 %v1671
    %1686 = vmatpush.msra.mxu0 %v1670
    %1687 = vmatpush.msra.mxu0 %v1669
    %1688 = vmatpush.msra.mxu0 %v1668
    %1689 = vmatpush.msra.mxu0 %v1667
    %1690 = vmatpush.msra.mxu0 %v1666
    %1691 = vmatpush.msra.mxu0 %v1665
    %1692 = vmatpush.msra.mxu0 %v1664
    %1693 = vmatpush.msra.mxu0 %v1663
    %1694 = vmatpush.msra.mxu0 %v1662
    %1695 = vmatmul.f32.gmra.mxu0 %v1661
    %v1696 = vpop.f32.mrf.mxu0
    %v1697 = vadd.f32 %v1678, %v1696
    %1698 = vdwg.mxu0
    %v1699 = vmax.f32 %v1697, 0.0
    %v1700 = vperm.slane %v40, 0
    %v1701 = vmul.f32 %v1699, %v1700
    %v1702 = vperm.slane %v41, 0
    %v1703 = vadd.f32 %v1701, %v1702
    %v1704 = vld [vmem:[%s5] sm:$0xff]
    %v1705 = vld [vmem:[%s5 + $0x8] sm:$0xff]
    %v1706 = vld [vmem:[%s5 + $0x10] sm:$0xff]
    %v1707 = vld [vmem:[%s5 + $0x18] sm:$0xff]
    %v1708 = vld [vmem:[%s5 + $0x20] sm:$0xff]
    %v1709 = vld [vmem:[%s5 + $0x28] sm:$0xff]
    %v1710 = vld [vmem:[%s5 + $0x30] sm:$0xff]
    %v1711 = vld [vmem:[%s5 + $0x38] sm:$0xff]
    %v1712 = vld [vmem:[%s5 + $0x40] sm:$0xff]
    %v1713 = vld [vmem:[%s5 + $0x48] sm:$0xff]
    %v1714 = vld [vmem:[%s5 + $0x50] sm:$0xff]
    %v1715 = vld [vmem:[%s5 + $0x58] sm:$0xff]
    %v1716 = vld [vmem:[%s5 + $0x60] sm:$0xff]
    %v1717 = vld [vmem:[%s5 + $0x68] sm:$0xff]
    %v1718 = vld [vmem:[%s5 + $0x70] sm:$0xff]
    %v1719 = vld [vmem:[%s5 + $0x78] sm:$0xff]
    %v1720 = vperm.slane %v42, 0
    %1721 = vmatpush.msra.mxu0 %v1719
    %1722 = vmatpush.msra.mxu0 %v1718
    %1723 = vmatpush.msra.mxu0 %v1717
    %1724 = vmatpush.msra.mxu0 %v1716
    %1725 = vmatpush.msra.mxu0 %v1715
    %1726 = vmatpush.msra.mxu0 %v1714
    %1727 = vmatpush.msra.mxu0 %v1713
    %1728 = vmatpush.msra.mxu0 %v1712
    %1729 = vmatpush.msra.mxu0 %v1711
    %1730 = vmatpush.msra.mxu0 %v1710
    %1731 = vmatpush.msra.mxu0 %v1709
    %1732 = vmatpush.msra.mxu0 %v1708
    %1733 = vmatpush.msra.mxu0 %v1707
    %1734 = vmatpush.msra.mxu0 %v1706
    %1735 = vmatpush.msra.mxu0 %v1705
    %1736 = vmatpush.msra.mxu0 %v1704
    %1737 = vmatmul.f32.gmra.mxu0 %v1703
    %v1738 = vpop.f32.mrf.mxu0
    %v1739 = vadd.f32 %v1720, %v1738
    %1740 = vdwg.mxu0
    %v1741 = vmax.f32 %v1739, 0.0
    %v1742 = vperm.slane %v43, 0
    %v1743 = vmul.f32 %v1741, %v1742
    %v1744 = vperm.slane %v44, 0
    %v1745 = vadd.f32 %v1743, %v1744
    %v1746 = vld [vmem:[%s6] sm:$0xff]
    %v1747 = vld [vmem:[%s6 + $0x8] sm:$0xff]
    %v1748 = vld [vmem:[%s6 + $0x10] sm:$0xff]
    %v1749 = vld [vmem:[%s6 + $0x18] sm:$0xff]
    %v1750 = vld [vmem:[%s6 + $0x20] sm:$0xff]
    %v1751 = vld [vmem:[%s6 + $0x28] sm:$0xff]
    %v1752 = vld [vmem:[%s6 + $0x30] sm:$0xff]
    %v1753 = vld [vmem:[%s6 + $0x38] sm:$0xff]
    %v1754 = vld [vmem:[%s6 + $0x40] sm:$0xff]
    %v1755 = vld [vmem:[%s6 + $0x48] sm:$0xff]
    %v1756 = vld [vmem:[%s6 + $0x50] sm:$0xff]
    %v1757 = vld [vmem:[%s6 + $0x58] sm:$0xff]
    %v1758 = vld [vmem:[%s6 + $0x60] sm:$0xff]
    %v1759 = vld [vmem:[%s6 + $0x68] sm:$0xff]
    %v1760 = vld [vmem:[%s6 + $0x70] sm:$0xff]
    %v1761 = vld [vmem:[%s6 + $0x78] sm:$0xff]
    %v1762 = vperm.slane %v45, 0
    %1763 = vmatpush.msra.mxu0 %v1761
    %1764 = vmatpush.msra.mxu0 %v1760
    %1765 = vmatpush.msra.mxu0 %v1759
    %1766 = vmatpush.msra.mxu0 %v1758
    %1767 = vmatpush.msra.mxu0 %v1757
    %1768 = vmatpush.msra.mxu0 %v1756
    %1769 = vmatpush.msra.mxu0 %v1755
    %1770 = vmatpush.msra.mxu0 %v1754
    %1771 = vmatpush.msra.mxu0 %v1753
    %1772 = vmatpush.msra.mxu0 %v1752
    %1773 = vmatpush.msra.mxu0 %v1751
    %1774 = vmatpush.msra.mxu0 %v1750
    %1775 = vmatpush.msra.mxu0 %v1749
    %1776 = vmatpush.msra.mxu0 %v1748
    %1777 = vmatpush.msra.mxu0 %v1747
    %1778 = vmatpush.msra.mxu0 %v1746
    %1779 = vmatmul.f32.gmra.mxu0 %v1745
    %v1780 = vpop.f32.mrf.mxu0
    %v1781 = vadd.f32 %v1762, %v1780
    %1782 = vdwg.mxu0
    %vm1783 = vcmask 1041408
    %v1784 = vsel %vm1783, %v1781, -inf
    %1785 = vmax.xlane.f32.xlu0 %v1784
    %v1786 = vpop.xlane.xlu0 %1785
    %v1787 = vsub.f32 %v1781, %v1786
    %v1788 = vmul.f32 %v1787, 1.442695
    %v1789 = vpow.pop %v1788
    %v1790 = vsel %vm1783, %v1789, 0.0
    %1791 = vadd.xlane.f32.xlu0 %v1790
    %v1792 = vpop.xlane.xlu0 %1791
    %v1793 = vrcp.pop %v1792
    %v1794 = vmul.f32 %v1792, %v1793
    %v1795 = vsub.f32 1.0, %v1794
    %v1796 = vmul.f32 %v1793, %v1795
    %v1797 = vadd.f32 %v1793, %v1796
    %vm1798 = vweird.f32 %v1792
    %vm1799 = vweird.f32 %v1793
    %vm1800 = vmor %vm1798, %vm1799
    %v1801 = vsel %vm1800, %v1793, %v1797
    %v1802 = vand.u32 2147483647, %v1792
    %vm1803 = vcmp.eq.f32.partialorder %v1802, 8.507059e+37
    %v1804 = vand.u32 %v1792, 2147483648
    %v1805 = vor.u32 1.1754944e-38, %v1804
    %v1806 = vsel %vm1803, %v1805, %v1801
    %v1807 = vmul.f32 %v1789, %v1806
    %1808 = vst [vmem:[#allocation8] sm:$0x3] %v1807
    // Predicated region
    $region34: #{forward.1} parent=1 // pred_check
      _
    $region35: #{forward.1} parent=1 // pred_check_branch
      %1810 = sbr.rel (0) target = $region37
    $region36: #{forward.1} parent=1 // pred_region
      %1812 = vsyncadd [#allocation9], 0
      %s1814 = sshll.u32 [#allocation8], 4
      %s1815 = int_to_ptr.vmem [resolvable:$true] %s1814
      %s1816 = sshll.u32 %s8, 4
      %s1817 = int_to_ptr.hbm [resolvable:$true] %s1816
      %1819 = dma.vmem_to_hbm [thread:$0]  %s1815, 32, %s1817, [#allocation9]
    $region37: #{forward.1} parent=1 // pred_fallthru
      _
    // Predicated region
    $region38: #{forward.1} parent=1 // pred_check
      _
    $region39: #{forward.1} parent=1 // pred_check_branch
      %1821 = sbr.rel (0) target = $region41
    $region40: #{forward.1} parent=1 // pred_region
      %1823 = dma.done [#allocation9], 32
    $region41: #{forward.1} parent=1 // pred_fallthru
      _
    %1824 = vsyncpa [#allocation9], 1

</llo_original>
